<compile_context>
chip_gen: v7x
topology: tpu7x:2x2x1
jax: 0.10.0
libtpu: 0.0.40
codegen_flags: <defaults>
</compile_context>

<pallas_src>
import functools

import numpy as np
import jax
import jax.numpy as jnp
from jax.experimental import pallas as pl
from jax.experimental.pallas import tpu as pltpu

# ---------------------------------------------------------------------------
# Hyperparameters (synthetic, consistent with the module's structure)
# ---------------------------------------------------------------------------
NF1, NF2, NF3 = 8, 16, 32          # conv output channels
KS1 = KS2 = KS3 = 3                # conv kernel sizes
DILATION = 1                       # conv dilation
PS1 = PS2 = PS3 = 2                # max-pool sizes
FCN1, FCN2 = 32, 16                # fc hidden sizes
IN_CH, IN_H, IN_W = 3, 32, 32      # input: 32x32 RGB
CIN_PAD = 8                        # conv1 input channels zero-padded 3 -> 8
NEG_SLOPE = 0.1                    # forward() passes negative_slope=0.1


def _conv_out(n, k, d):
    return n - d * (k - 1)


# Per-stage spatial sizes: 32 -> 30 -> 15 -> 13 -> 6 -> 4 -> 2
H1, W1 = IN_H, IN_W
OH1, OW1 = _conv_out(H1, KS1, DILATION), _conv_out(W1, KS1, DILATION)
PH1, PW1 = OH1 // PS1, OW1 // PS1
H2, W2 = PH1, PW1
OH2, OW2 = _conv_out(H2, KS2, DILATION), _conv_out(W2, KS2, DILATION)
PH2, PW2 = OH2 // PS2, OW2 // PS2
H3, W3 = PH2, PW2
OH3, OW3 = _conv_out(H3, KS3, DILATION), _conv_out(W3, KS3, DILATION)
PH3, PW3 = OH3 // PS3, OW3 // PS3
S3 = PH3 * PW3                     # 4 spatial positions after stage 3
N_FEATURES = NF3 * S3              # 128, matches x.view(-1, n_features)


# ---------------------------------------------------------------------------
# Host-side helpers: pooling selection matrices + parameter repacking
# ---------------------------------------------------------------------------
def _pool_select(W, oh, ow, pool):
    """0/1 matrix gathering pooled anchors (pool*i)*W + pool*j -> i*PW+j.

    Exact in bf16 (entries are 0/1), halves its DMA/VMEM footprint.
    """
    ph, pw = oh // pool, ow // pool
    L = (oh - 1) * W + ow
    Lm = L - (pool - 1) * (W + 1)
    sel = np.zeros((Lm, ph * pw), np.float32)
    for i in range(ph):
        for j in range(pw):
            sel[(pool * i) * W + pool * j, i * pw + j] = 1.0
    return jnp.asarray(sel, dtype=jnp.bfloat16)


_SEL1 = _pool_select(W1, OH1, OW1, PS1)    # (925, 225) bf16
_SEL2 = _pool_select(W2, OH2, OW2, PS2)    # (177, 36)  bf16
_SEL3 = _pool_select(W3, OH3, OW3, PS3)    # (15, 4)    bf16


def init_params(key):
    """Parameters in torch layout: conv (Cout,Cin,KH,KW), linear (out,in)."""
    ks = jax.random.split(key, 12)

    def conv_w(k, cout, cin, ksz):
        fan_in = cin * ksz * ksz
        return (jax.random.normal(k, (cout, cin, ksz, ksz), jnp.float32)
                / np.sqrt(fan_in))

    def fc_w(k, fout, fin):
        return jax.random.normal(k, (fout, fin), jnp.float32) / np.sqrt(fin)

    return dict(
        w1=conv_w(ks[0], NF1, IN_CH, KS1),
        b1=0.01 * jax.random.normal(ks[1], (NF1,), jnp.float32),
        w2=conv_w(ks[2], NF2, NF1, KS2),
        b2=0.01 * jax.random.normal(ks[3], (NF2,), jnp.float32),
        w3=conv_w(ks[4], NF3, NF2, KS3),
        b3=0.01 * jax.random.normal(ks[5], (NF3,), jnp.float32),
        fw1=fc_w(ks[6], FCN1, N_FEATURES),
        fb1=0.01 * jax.random.normal(ks[7], (FCN1,), jnp.float32),
        fw2=fc_w(ks[8], FCN2, FCN1),
        fb2=0.01 * jax.random.normal(ks[9], (FCN2,), jnp.float32),
        fw3=fc_w(ks[10], 1, FCN2),
        fb3=0.01 * jax.random.normal(ks[11], (1,), jnp.float32),
    )


def _prep_kernel_params(p):
    """Repack torch-layout params into kernel layouts (host-side, cheap).

    Matmul operands (conv weights, fc weights, selection matrices) are bf16;
    biases stay f32 (they only feed VPU adds).
    """
    bf = jnp.bfloat16

    def conv2d(w, cin_pad=None):               # (Cout,Cin,KH,KW) -> (Cout, KH*KW*Cin)
        cout, cin, kh, kw = w.shape
        if cin_pad is not None and cin_pad > cin:
            w = jnp.pad(w, ((0, 0), (0, cin_pad - cin), (0, 0), (0, 0)))
            cin = cin_pad
        return jnp.transpose(w, (0, 2, 3, 1)).reshape(cout, kh * kw * cin).astype(bf)

    # fc1 weight split per spatial position s: fw1s[s, f, c] = fw1[f, c*S3+s]
    fw1s = jnp.transpose(p['fw1'].reshape(FCN1, NF3, S3), (2, 0, 1)).astype(bf)
    return (
        conv2d(p['w1'], CIN_PAD), p['b1'].reshape(NF1, 1), _SEL1,
        conv2d(p['w2']), p['b2'].reshape(NF2, 1), _SEL2,
        conv2d(p['w3']), p['b3'].reshape(NF3, 1), _SEL3,
        fw1s, p['fb1'].reshape(FCN1, 1),
        p['fw2'].astype(bf), p['fb2'].reshape(FCN2, 1),
        p['fw3'].astype(bf), p['fb3'].reshape(1, 1),
    )


# ---------------------------------------------------------------------------
# Fused kernel: (conv+pool+lrelu) x3 + fc1/relu + fc2/relu + fc3/sigmoid
# ---------------------------------------------------------------------------
def _bmm(w2d, col3):
    """(Cout, K) bf16  x  (B, K, L) bf16  ->  (B, Cout, L) f32.

    Written as per-image 2D MXU dots (shared weight) + a leading-dim stack:
    guaranteed lowering, identical MXU work to a batched dot.
    """
    outs = [jnp.dot(w2d, col3[b], preferred_element_type=jnp.float32)
            for b in range(col3.shape[0])]
    return jnp.stack(outs, axis=0)


def _conv_pool_lrelu(x, w2d, bias, sel, *, H, W, ks, dil, pool):
    """x: (B, Cin, H*W) f32, row-major spatial on lanes.
    Returns (B, Cout, PH*PW) f32 = leaky_relu(maxpool(conv(x)+bias)).

    Wide-flat conv: kernel tap (kh,kw) of a "valid" conv is a contiguous lane
    slice of the row-major flattened image at offset dil*(kh*W+kw); all taps
    align at flat index oh*W+ow, so one (Cout,K)x(K,L) matmul per image does
    the conv (junk columns with ow>=OW never reach a selected pooling anchor).
    Epilogue order (matmul -> window max -> 0/1 gather -> +bias -> leaky) is
    exactly equivalent to torch's order because bias is per-channel and
    leaky_relu is monotone.
    """
    B, cin, _ = x.shape
    oh = H - dil * (ks - 1)
    ow = W - dil * (ks - 1)
    L = (oh - 1) * W + ow
    Lm = L - (pool - 1) * (W + 1)
    ph, pw = oh // pool, ow // pool
    cout = w2d.shape[0]

    # im2col: 9 static lane slices; Cin is a multiple of 8, so the sublane
    # concat is a pure tile stack.  Cast to bf16 once, after the concat.
    taps = []
    for kh in range(ks):
        for kw in range(ks):
            off = dil * (kh * W + kw)
            taps.append(x[:, :, off:off + L])                 # (B, Cin, L) f32
    col = jnp.concatenate(taps, axis=1).astype(jnp.bfloat16)  # (B, K, L) bf16

    acc = _bmm(w2d, col)                                      # (B, Cout, L) f32

    # pool x pool window max via shifted lane slices (f32, VPU).
    m = None
    for dh in range(pool):
        for dw in range(pool):
            off = dh * W + dw
            s = acc[:, :, off:off + Lm]
            m = s if m is None else jnp.maximum(m, s)

    # 0/1 selection gather of pooled anchors into row-major (PH,PW) order.
    # Collapse (B,Cout) onto sublanes (Cout % 8 == 0 -> free reshape) so this
    # is one well-shaped 2D MXU matmul for the whole block of images.
    m2 = m.reshape(B * cout, Lm).astype(jnp.bfloat16)
    g = jnp.dot(m2, sel, preferred_element_type=jnp.float32)  # (B*Cout, PH*PW)
    g = g.reshape(B, cout, ph * pw)

    g = g + bias                                              # (Cout,1) bcast, f32
    return jnp.where(g > 0, g, NEG_SLOPE * g)                 # leaky_relu(0.1)


def _net_kernel(x_ref, w1_ref, b1_ref, s1_ref, w2_ref, b2_ref, s2_ref,
                w3_ref, b3_ref, s3_ref, fw1_ref, fb1_ref, fw2_ref, fb2_ref,
                fw3_ref, fb3_ref, o_ref):
    # One block of B images per grid step; all activations stay VMEM/vreg
    # resident.  nn.Dropout2d is the identity at inference time.
    x = x_ref[...]                                            # (B, 8, H*W) f32
    B = x.shape[0]

    a = _conv_pool_lrelu(x, w1_ref[...], b1_ref[...], s1_ref[...],
                         H=H1, W=W1, ks=KS1, dil=DILATION, pool=PS1)
    a = _conv_pool_lrelu(a, w2_ref[...], b2_ref[...], s2_ref[...],
                         H=H2, W=W2, ks=KS2, dil=DILATION, pool=PS2)
    a = _conv_pool_lrelu(a, w3_ref[...], b3_ref[...], s3_ref[...],
                         H=H3, W=W3, ks=KS3, dil=DILATION, pool=PS3)
    # a: (B, NF3, S3).  torch's x.view(-1, n_features) flattens (C,H,W)-major,
    # i.e. feature index c*S3 + s -- fc1's weight was pre-split per s, and the
    # FC head runs with the BATCH on the lane axis (lane-dense matmuls).
    ab = a.astype(jnp.bfloat16)
    fw1 = fw1_ref[...]                                        # (S3, FCN1, NF3) bf16

    z = fb1_ref[...]                                          # (FCN1, 1) f32
    for s in range(S3):
        # feat_s[c, b] = a[b, c, s]  (NF3, B): gather one lane per image.
        feat_s = jnp.concatenate([ab[b, :, s:s + 1] for b in range(B)], axis=1)
        z = z + jnp.dot(fw1[s], feat_s, preferred_element_type=jnp.float32)
    h = jnp.maximum(z, 0.0).astype(jnp.bfloat16)              # relu(fc1), (FCN1,B)

    z = jnp.dot(fw2_ref[...], h,
                preferred_element_type=jnp.float32) + fb2_ref[...]
    h = jnp.maximum(z, 0.0).astype(jnp.bfloat16)              # relu(fc2), (FCN2,B)

    z = jnp.dot(fw3_ref[...], h,
                preferred_element_type=jnp.float32) + fb3_ref[...]
    y = 1.0 / (1.0 + jnp.exp(-z))                             # sigmoid, (1, B)
    o_ref[0] = y.astype(o_ref.dtype)                          # lane-dense store


_CONST_MAPS = {2: lambda i: (0, 0), 3: lambda i: (0, 0, 0)}


@functools.partial(jax.jit, static_argnames=("batch_block",))
def net_forward(params, x_nchw, batch_block=32):
    n, c, h, w = x_nchw.shape
    # Batch block B: amortizes per-grid-step overhead and fills FC-head lanes.
    # Keep it modest so stage-1 intermediates (~0.4 MB/image) stay well inside
    # the 32 MiB scoped-VMEM default on every generation (incl. v7x's 64 MiB
    # physical VMEM), and keep >=2 grid steps when n > B so both v7x
    # TensorCores get work via the "parallel" grid axis.
    bb = max(1, min(batch_block, n))
    n_steps = -(-n // bb)
    n_pad = n_steps * bb

    # Free reshape (NOT a transpose) + zero-pad: channels 3 -> 8 so every
    # im2col tap slab is a whole sublane tile; batch -> multiple of bb.
    x_flat = x_nchw.reshape(n, c, h * w)
    x_flat = jnp.pad(x_flat, ((0, n_pad - n), (0, CIN_PAD - c), (0, 0)))

    ops = _prep_kernel_params(params)

    in_specs = [pl.BlockSpec((bb, CIN_PAD, h * w), lambda i: (i, 0, 0))]
    for arr in ops:                    # full-array blocks, constant index_map
        in_specs.append(pl.BlockSpec(arr.shape, _CONST_MAPS[arr.ndim]))
        # (constant block index -> fetched once; VMEM headroom is ample, so
        #  default double-buffering of these constants is left as-is)

    out = pl.pallas_call(
        _net_kernel,
        out_shape=jax.ShapeDtypeStruct((n_steps, 1, bb), jnp.float32),
        grid=(n_steps,),
        in_specs=in_specs,
        out_specs=pl.BlockSpec((1, 1, bb), lambda i: (i, 0, 0)),
        compiler_params=pltpu.CompilerParams(
            dimension_semantics=("parallel",)),   # megacore split on v7x
    )(x_flat, *ops)
    return out.reshape(-1)[:n]                    # torch.flatten (drop padding)


# ---------------------------------------------------------------------------
# Pure-JAX reference (f32) for the correctness check in __main__
# ---------------------------------------------------------------------------
def net_reference(params, x):
    dn = ('NCHW', 'OIHW', 'NCHW')
    act = x
    for wk, bk, ps in ((params['w1'], params['b1'], PS1),
                       (params['w2'], params['b2'], PS2),
                       (params['w3'], params['b3'], PS3)):
        act = jax.lax.conv_general_dilated(
            act, wk, window_strides=(1, 1), padding='VALID',
            rhs_dilation=(DILATION, DILATION), dimension_numbers=dn)
        act = act + bk[None, :, None, None]
        act = jnp.where(act > 0, act, NEG_SLOPE * act)
        act = jax.lax.reduce_window(act, -jnp.inf, jax.lax.max,
                                    (1, 1, ps, ps), (1, 1, ps, ps), 'VALID')
    hflat = act.reshape(act.shape[0], -1)
    hflat = jnp.maximum(hflat @ params['fw1'].T + params['fb1'], 0.0)
    hflat = jnp.maximum(hflat @ params['fw2'].T + params['fb2'], 0.0)
    return jax.nn.sigmoid(hflat @ params['fw3'].T + params['fb3']).reshape(-1)


if __name__ == "__main__":
    key = jax.random.PRNGKey(0)
    pkey, xkey = jax.random.split(key)
    params = init_params(pkey)
    x = jax.random.normal(xkey, (8, IN_CH, IN_H, IN_W), jnp.float32)

    # batch_block=4 -> 2 grid steps of 4 images each (exercises batching and
    # gives both v7x TensorCores work even at this tiny demo size).
    out = jax.block_until_ready(net_forward(params, x, batch_block=4))
    assert out.shape == (8,), out.shape

    ref = jax.block_until_ready(net_reference(params, x))
    # bf16 matmul operands (f32 accumulation) vs the f32 reference.
    np.testing.assert_allclose(np.asarray(out), np.asarray(ref),
                               rtol=3e-2, atol=3e-2)
    print("KERNEL_OK")
</pallas_src>

<mosaic_0001>
module attributes {stable_mosaic.version = 11 : i64} {
  func.func @_net_kernel(%arg0: i32, %arg1: memref<4x8x1024xf32, #tpu.memory_space<vmem>>, %arg2: memref<8x72xbf16, #tpu.memory_space<vmem>>, %arg3: memref<8x1xf32, #tpu.memory_space<vmem>>, %arg4: memref<925x225xbf16, #tpu.memory_space<vmem>>, %arg5: memref<16x72xbf16, #tpu.memory_space<vmem>>, %arg6: memref<16x1xf32, #tpu.memory_space<vmem>>, %arg7: memref<177x36xbf16, #tpu.memory_space<vmem>>, %arg8: memref<32x144xbf16, #tpu.memory_space<vmem>>, %arg9: memref<32x1xf32, #tpu.memory_space<vmem>>, %arg10: memref<15x4xbf16, #tpu.memory_space<vmem>>, %arg11: memref<4x32x32xbf16, #tpu.memory_space<vmem>>, %arg12: memref<32x1xf32, #tpu.memory_space<vmem>>, %arg13: memref<16x32xbf16, #tpu.memory_space<vmem>>, %arg14: memref<16x1xf32, #tpu.memory_space<vmem>>, %arg15: memref<1x16xbf16, #tpu.memory_space<vmem>>, %arg16: memref<1x1xf32, #tpu.memory_space<vmem>>, %arg17: memref<1x1x4xf32, #tpu.memory_space<vmem>>) attributes {dimension_semantics = [#tpu.dimension_semantics<parallel>], iteration_bounds = array<i64: 2>, scalar_prefetch = 0 : i64, scratch_operands = 0 : i64, tpu.core_type = #tpu.core_type<tc>, window_params = [{transform_indices = @transform_0, window_bounds = array<i64: 4, 8, 1024>}, {pipeline_mode = #tpu.pipeline_mode<synchronous>, transform_indices = @transform_1, window_bounds = array<i64: 8, 72>}, {pipeline_mode = #tpu.pipeline_mode<synchronous>, transform_indices = @transform_2, window_bounds = array<i64: 8, 1>}, {pipeline_mode = #tpu.pipeline_mode<synchronous>, transform_indices = @transform_3, window_bounds = array<i64: 925, 225>}, {pipeline_mode = #tpu.pipeline_mode<synchronous>, transform_indices = @transform_4, window_bounds = array<i64: 16, 72>}, {pipeline_mode = #tpu.pipeline_mode<synchronous>, transform_indices = @transform_5, window_bounds = array<i64: 16, 1>}, {pipeline_mode = #tpu.pipeline_mode<synchronous>, transform_indices = @transform_6, window_bounds = array<i64: 177, 36>}, {pipeline_mode = #tpu.pipeline_mode<synchronous>, transform_indices = @transform_7, window_bounds = array<i64: 32, 144>}, {pipeline_mode = #tpu.pipeline_mode<synchronous>, transform_indices = @transform_8, window_bounds = array<i64: 32, 1>}, {pipeline_mode = #tpu.pipeline_mode<synchronous>, transform_indices = @transform_9, window_bounds = array<i64: 15, 4>}, {pipeline_mode = #tpu.pipeline_mode<synchronous>, transform_indices = @transform_10, window_bounds = array<i64: 4, 32, 32>}, {pipeline_mode = #tpu.pipeline_mode<synchronous>, transform_indices = @transform_11, window_bounds = array<i64: 32, 1>}, {pipeline_mode = #tpu.pipeline_mode<synchronous>, transform_indices = @transform_12, window_bounds = array<i64: 16, 32>}, {pipeline_mode = #tpu.pipeline_mode<synchronous>, transform_indices = @transform_13, window_bounds = array<i64: 16, 1>}, {pipeline_mode = #tpu.pipeline_mode<synchronous>, transform_indices = @transform_14, window_bounds = array<i64: 1, 16>}, {pipeline_mode = #tpu.pipeline_mode<synchronous>, transform_indices = @transform_15, window_bounds = array<i64: 1, 1>}, {transform_indices = @transform_16, window_bounds = array<i64: 1, 1, 4>}]} {
    %c0 = arith.constant 0 : index
    %c0_0 = arith.constant 0 : index
    %c0_1 = arith.constant 0 : index
    %0 = vector.load %arg1[%c0, %c0_0, %c0_1] : memref<4x8x1024xf32, #tpu.memory_space<vmem>>, vector<4x8x1024xf32>
    %c0_2 = arith.constant 0 : index
    %c0_3 = arith.constant 0 : index
    %1 = vector.load %arg2[%c0_2, %c0_3] : memref<8x72xbf16, #tpu.memory_space<vmem>>, vector<8x72xbf16>
    %c0_4 = arith.constant 0 : index
    %c0_5 = arith.constant 0 : index
    %2 = vector.load %arg3[%c0_4, %c0_5] : memref<8x1xf32, #tpu.memory_space<vmem>>, vector<8x1xf32>
    %c0_6 = arith.constant 0 : index
    %c0_7 = arith.constant 0 : index
    %3 = vector.load %arg4[%c0_6, %c0_7] : memref<925x225xbf16, #tpu.memory_space<vmem>>, vector<925x225xbf16>
    %4 = vector.extract_strided_slice %0 {offsets = [0, 0, 0], sizes = [4, 8, 958], strides = [1, 1, 1]} : vector<4x8x1024xf32> to vector<4x8x958xf32>
    %5 = vector.extract_strided_slice %0 {offsets = [0, 0, 1], sizes = [4, 8, 958], strides = [1, 1, 1]} : vector<4x8x1024xf32> to vector<4x8x958xf32>
    %6 = vector.extract_strided_slice %0 {offsets = [0, 0, 2], sizes = [4, 8, 958], strides = [1, 1, 1]} : vector<4x8x1024xf32> to vector<4x8x958xf32>
    %7 = vector.extract_strided_slice %0 {offsets = [0, 0, 32], sizes = [4, 8, 958], strides = [1, 1, 1]} : vector<4x8x1024xf32> to vector<4x8x958xf32>
    %8 = vector.extract_strided_slice %0 {offsets = [0, 0, 33], sizes = [4, 8, 958], strides = [1, 1, 1]} : vector<4x8x1024xf32> to vector<4x8x958xf32>
    %9 = vector.extract_strided_slice %0 {offsets = [0, 0, 34], sizes = [4, 8, 958], strides = [1, 1, 1]} : vector<4x8x1024xf32> to vector<4x8x958xf32>
    %10 = vector.extract_strided_slice %0 {offsets = [0, 0, 64], sizes = [4, 8, 958], strides = [1, 1, 1]} : vector<4x8x1024xf32> to vector<4x8x958xf32>
    %11 = vector.extract_strided_slice %0 {offsets = [0, 0, 65], sizes = [4, 8, 958], strides = [1, 1, 1]} : vector<4x8x1024xf32> to vector<4x8x958xf32>
    %12 = vector.extract_strided_slice %0 {offsets = [0, 0, 66], sizes = [4, 8, 958], strides = [1, 1, 1]} : vector<4x8x1024xf32> to vector<4x8x958xf32>
    %13 = tpu.concatenate %4, %5, %6, %7, %8, %9, %10, %11, %12 in 1 : vector<4x8x958xf32>, vector<4x8x958xf32>, vector<4x8x958xf32>, vector<4x8x958xf32>, vector<4x8x958xf32>, vector<4x8x958xf32>, vector<4x8x958xf32>, vector<4x8x958xf32>, vector<4x8x958xf32> -> vector<4x72x958xf32>
    %14 = arith.truncf %13 : vector<4x72x958xf32> to vector<4x72x958xbf16>
    %15 = vector.extract_strided_slice %14 {offsets = [0, 0, 0], sizes = [1, 72, 958], strides = [1, 1, 1]} : vector<4x72x958xbf16> to vector<1x72x958xbf16>
    %16 = vector.shape_cast %15 : vector<1x72x958xbf16> to vector<72x958xbf16>
    %cst = arith.constant dense<0.000000e+00> : vector<8x958xf32>
    %17 = tpu.matmul %1, %16, %cst {dimension_numbers = #tpu.dot_dimension_numbers<[1], [0], [0], [1], [0, 0, 1, 1], [], []>} : vector<8x72xbf16>, vector<72x958xbf16>, vector<8x958xf32> -> vector<8x958xf32>
    %18 = vector.extract_strided_slice %14 {offsets = [1, 0, 0], sizes = [1, 72, 958], strides = [1, 1, 1]} : vector<4x72x958xbf16> to vector<1x72x958xbf16>
    %19 = vector.shape_cast %18 : vector<1x72x958xbf16> to vector<72x958xbf16>
    %cst_8 = arith.constant dense<0.000000e+00> : vector<8x958xf32>
    %20 = tpu.matmul %1, %19, %cst_8 {dimension_numbers = #tpu.dot_dimension_numbers<[1], [0], [0], [1], [0, 0, 1, 1], [], []>} : vector<8x72xbf16>, vector<72x958xbf16>, vector<8x958xf32> -> vector<8x958xf32>
    %21 = vector.extract_strided_slice %14 {offsets = [2, 0, 0], sizes = [1, 72, 958], strides = [1, 1, 1]} : vector<4x72x958xbf16> to vector<1x72x958xbf16>
    %22 = vector.shape_cast %21 : vector<1x72x958xbf16> to vector<72x958xbf16>
    %cst_9 = arith.constant dense<0.000000e+00> : vector<8x958xf32>
    %23 = tpu.matmul %1, %22, %cst_9 {dimension_numbers = #tpu.dot_dimension_numbers<[1], [0], [0], [1], [0, 0, 1, 1], [], []>} : vector<8x72xbf16>, vector<72x958xbf16>, vector<8x958xf32> -> vector<8x958xf32>
    %24 = vector.extract_strided_slice %14 {offsets = [3, 0, 0], sizes = [1, 72, 958], strides = [1, 1, 1]} : vector<4x72x958xbf16> to vector<1x72x958xbf16>
    %25 = vector.shape_cast %24 : vector<1x72x958xbf16> to vector<72x958xbf16>
    %cst_10 = arith.constant dense<0.000000e+00> : vector<8x958xf32>
    %26 = tpu.matmul %1, %25, %cst_10 {dimension_numbers = #tpu.dot_dimension_numbers<[1], [0], [0], [1], [0, 0, 1, 1], [], []>} : vector<8x72xbf16>, vector<72x958xbf16>, vector<8x958xf32> -> vector<8x958xf32>
    %27 = vector.shape_cast %17 : vector<8x958xf32> to vector<1x8x958xf32>
    %28 = vector.shape_cast %20 : vector<8x958xf32> to vector<1x8x958xf32>
    %29 = vector.shape_cast %23 : vector<8x958xf32> to vector<1x8x958xf32>
    %30 = vector.shape_cast %26 : vector<8x958xf32> to vector<1x8x958xf32>
    %31 = tpu.concatenate %27, %28, %29, %30 in 0 : vector<1x8x958xf32>, vector<1x8x958xf32>, vector<1x8x958xf32>, vector<1x8x958xf32> -> vector<4x8x958xf32>
    %32 = vector.extract_strided_slice %31 {offsets = [0, 0, 0], sizes = [4, 8, 925], strides = [1, 1, 1]} : vector<4x8x958xf32> to vector<4x8x925xf32>
    %33 = vector.extract_strided_slice %31 {offsets = [0, 0, 1], sizes = [4, 8, 925], strides = [1, 1, 1]} : vector<4x8x958xf32> to vector<4x8x925xf32>
    %34 = arith.maximumf %32, %33 : vector<4x8x925xf32>
    %35 = vector.extract_strided_slice %31 {offsets = [0, 0, 32], sizes = [4, 8, 925], strides = [1, 1, 1]} : vector<4x8x958xf32> to vector<4x8x925xf32>
    %36 = arith.maximumf %34, %35 : vector<4x8x925xf32>
    %37 = vector.extract_strided_slice %31 {offsets = [0, 0, 33], sizes = [4, 8, 925], strides = [1, 1, 1]} : vector<4x8x958xf32> to vector<4x8x925xf32>
    %38 = arith.maximumf %36, %37 : vector<4x8x925xf32>
    %39 = vector.shape_cast %38 : vector<4x8x925xf32> to vector<32x925xf32>
    %40 = arith.truncf %39 : vector<32x925xf32> to vector<32x925xbf16>
    %cst_11 = arith.constant dense<0.000000e+00> : vector<32x225xf32>
    %41 = tpu.matmul %40, %3, %cst_11 {dimension_numbers = #tpu.dot_dimension_numbers<[1], [0], [0], [1], [0, 0, 1, 1], [], []>} : vector<32x925xbf16>, vector<925x225xbf16>, vector<32x225xf32> -> vector<32x225xf32>
    %42 = vector.shape_cast %41 : vector<32x225xf32> to vector<4x8x225xf32>
    %43 = vector.shape_cast %2 : vector<8x1xf32> to vector<1x8x1xf32>
    %44 = vector.broadcast %43 : vector<1x8x1xf32> to vector<4x8x225xf32>
    %45 = arith.addf %42, %44 : vector<4x8x225xf32>
    %cst_12 = arith.constant 0.000000e+00 : f32
    %46 = vector.broadcast %cst_12 : f32 to vector<4x8x225xf32>
    %47 = arith.cmpf ogt, %45, %46 : vector<4x8x225xf32>
    %cst_13 = arith.constant 1.000000e-01 : f32
    %48 = vector.broadcast %cst_13 : f32 to vector<4x8x225xf32>
    %49 = arith.mulf %48, %45 : vector<4x8x225xf32>
    %50 = arith.select %47, %45, %49 : vector<4x8x225xi1>, vector<4x8x225xf32>
    %c0_14 = arith.constant 0 : index
    %c0_15 = arith.constant 0 : index
    %51 = vector.load %arg5[%c0_14, %c0_15] : memref<16x72xbf16, #tpu.memory_space<vmem>>, vector<16x72xbf16>
    %c0_16 = arith.constant 0 : index
    %c0_17 = arith.constant 0 : index
    %52 = vector.load %arg6[%c0_16, %c0_17] : memref<16x1xf32, #tpu.memory_space<vmem>>, vector<16x1xf32>
    %c0_18 = arith.constant 0 : index
    %c0_19 = arith.constant 0 : index
    %53 = vector.load %arg7[%c0_18, %c0_19] : memref<177x36xbf16, #tpu.memory_space<vmem>>, vector<177x36xbf16>
    %54 = vector.extract_strided_slice %50 {offsets = [0, 0, 0], sizes = [4, 8, 193], strides = [1, 1, 1]} : vector<4x8x225xf32> to vector<4x8x193xf32>
    %55 = vector.extract_strided_slice %50 {offsets = [0, 0, 1], sizes = [4, 8, 193], strides = [1, 1, 1]} : vector<4x8x225xf32> to vector<4x8x193xf32>
    %56 = vector.extract_strided_slice %50 {offsets = [0, 0, 2], sizes = [4, 8, 193], strides = [1, 1, 1]} : vector<4x8x225xf32> to vector<4x8x193xf32>
    %57 = vector.extract_strided_slice %50 {offsets = [0, 0, 15], sizes = [4, 8, 193], strides = [1, 1, 1]} : vector<4x8x225xf32> to vector<4x8x193xf32>
    %58 = vector.extract_strided_slice %50 {offsets = [0, 0, 16], sizes = [4, 8, 193], strides = [1, 1, 1]} : vector<4x8x225xf32> to vector<4x8x193xf32>
    %59 = vector.extract_strided_slice %50 {offsets = [0, 0, 17], sizes = [4, 8, 193], strides = [1, 1, 1]} : vector<4x8x225xf32> to vector<4x8x193xf32>
    %60 = vector.extract_strided_slice %50 {offsets = [0, 0, 30], sizes = [4, 8, 193], strides = [1, 1, 1]} : vector<4x8x225xf32> to vector<4x8x193xf32>
    %61 = vector.extract_strided_slice %50 {offsets = [0, 0, 31], sizes = [4, 8, 193], strides = [1, 1, 1]} : vector<4x8x225xf32> to vector<4x8x193xf32>
    %62 = vector.extract_strided_slice %50 {offsets = [0, 0, 32], sizes = [4, 8, 193], strides = [1, 1, 1]} : vector<4x8x225xf32> to vector<4x8x193xf32>
    %63 = tpu.concatenate %54, %55, %56, %57, %58, %59, %60, %61, %62 in 1 : vector<4x8x193xf32>, vector<4x8x193xf32>, vector<4x8x193xf32>, vector<4x8x193xf32>, vector<4x8x193xf32>, vector<4x8x193xf32>, vector<4x8x193xf32>, vector<4x8x193xf32>, vector<4x8x193xf32> -> vector<4x72x193xf32>
    %64 = arith.truncf %63 : vector<4x72x193xf32> to vector<4x72x193xbf16>
    %65 = vector.extract_strided_slice %64 {offsets = [0, 0, 0], sizes = [1, 72, 193], strides = [1, 1, 1]} : vector<4x72x193xbf16> to vector<1x72x193xbf16>
    %66 = vector.shape_cast %65 : vector<1x72x193xbf16> to vector<72x193xbf16>
    %cst_20 = arith.constant dense<0.000000e+00> : vector<16x193xf32>
    %67 = tpu.matmul %51, %66, %cst_20 {dimension_numbers = #tpu.dot_dimension_numbers<[1], [0], [0], [1], [0, 0, 1, 1], [], []>} : vector<16x72xbf16>, vector<72x193xbf16>, vector<16x193xf32> -> vector<16x193xf32>
    %68 = vector.extract_strided_slice %64 {offsets = [1, 0, 0], sizes = [1, 72, 193], strides = [1, 1, 1]} : vector<4x72x193xbf16> to vector<1x72x193xbf16>
    %69 = vector.shape_cast %68 : vector<1x72x193xbf16> to vector<72x193xbf16>
    %cst_21 = arith.constant dense<0.000000e+00> : vector<16x193xf32>
    %70 = tpu.matmul %51, %69, %cst_21 {dimension_numbers = #tpu.dot_dimension_numbers<[1], [0], [0], [1], [0, 0, 1, 1], [], []>} : vector<16x72xbf16>, vector<72x193xbf16>, vector<16x193xf32> -> vector<16x193xf32>
    %71 = vector.extract_strided_slice %64 {offsets = [2, 0, 0], sizes = [1, 72, 193], strides = [1, 1, 1]} : vector<4x72x193xbf16> to vector<1x72x193xbf16>
    %72 = vector.shape_cast %71 : vector<1x72x193xbf16> to vector<72x193xbf16>
    %cst_22 = arith.constant dense<0.000000e+00> : vector<16x193xf32>
    %73 = tpu.matmul %51, %72, %cst_22 {dimension_numbers = #tpu.dot_dimension_numbers<[1], [0], [0], [1], [0, 0, 1, 1], [], []>} : vector<16x72xbf16>, vector<72x193xbf16>, vector<16x193xf32> -> vector<16x193xf32>
    %74 = vector.extract_strided_slice %64 {offsets = [3, 0, 0], sizes = [1, 72, 193], strides = [1, 1, 1]} : vector<4x72x193xbf16> to vector<1x72x193xbf16>
    %75 = vector.shape_cast %74 : vector<1x72x193xbf16> to vector<72x193xbf16>
    %cst_23 = arith.constant dense<0.000000e+00> : vector<16x193xf32>
    %76 = tpu.matmul %51, %75, %cst_23 {dimension_numbers = #tpu.dot_dimension_numbers<[1], [0], [0], [1], [0, 0, 1, 1], [], []>} : vector<16x72xbf16>, vector<72x193xbf16>, vector<16x193xf32> -> vector<16x193xf32>
    %77 = vector.shape_cast %67 : vector<16x193xf32> to vector<1x16x193xf32>
    %78 = vector.shape_cast %70 : vector<16x193xf32> to vector<1x16x193xf32>
    %79 = vector.shape_cast %73 : vector<16x193xf32> to vector<1x16x193xf32>
    %80 = vector.shape_cast %76 : vector<16x193xf32> to vector<1x16x193xf32>
    %81 = tpu.concatenate %77, %78, %79, %80 in 0 : vector<1x16x193xf32>, vector<1x16x193xf32>, vector<1x16x193xf32>, vector<1x16x193xf32> -> vector<4x16x193xf32>
    %82 = vector.extract_strided_slice %81 {offsets = [0, 0, 0], sizes = [4, 16, 177], strides = [1, 1, 1]} : vector<4x16x193xf32> to vector<4x16x177xf32>
    %83 = vector.extract_strided_slice %81 {offsets = [0, 0, 1], sizes = [4, 16, 177], strides = [1, 1, 1]} : vector<4x16x193xf32> to vector<4x16x177xf32>
    %84 = arith.maximumf %82, %83 : vector<4x16x177xf32>
    %85 = vector.extract_strided_slice %81 {offsets = [0, 0, 15], sizes = [4, 16, 177], strides = [1, 1, 1]} : vector<4x16x193xf32> to vector<4x16x177xf32>
    %86 = arith.maximumf %84, %85 : vector<4x16x177xf32>
    %87 = vector.extract_strided_slice %81 {offsets = [0, 0, 16], sizes = [4, 16, 177], strides = [1, 1, 1]} : vector<4x16x193xf32> to vector<4x16x177xf32>
    %88 = arith.maximumf %86, %87 : vector<4x16x177xf32>
    %89 = vector.shape_cast %88 : vector<4x16x177xf32> to vector<64x177xf32>
    %90 = arith.truncf %89 : vector<64x177xf32> to vector<64x177xbf16>
    %cst_24 = arith.constant dense<0.000000e+00> : vector<64x36xf32>
    %91 = tpu.matmul %90, %53, %cst_24 {dimension_numbers = #tpu.dot_dimension_numbers<[1], [0], [0], [1], [0, 0, 1, 1], [], []>} : vector<64x177xbf16>, vector<177x36xbf16>, vector<64x36xf32> -> vector<64x36xf32>
    %92 = vector.shape_cast %91 : vector<64x36xf32> to vector<4x16x36xf32>
    %93 = vector.shape_cast %52 : vector<16x1xf32> to vector<1x16x1xf32>
    %94 = vector.broadcast %93 : vector<1x16x1xf32> to vector<4x16x36xf32>
    %95 = arith.addf %92, %94 : vector<4x16x36xf32>
    %cst_25 = arith.constant 0.000000e+00 : f32
    %96 = vector.broadcast %cst_25 : f32 to vector<4x16x36xf32>
    %97 = arith.cmpf ogt, %95, %96 : vector<4x16x36xf32>
    %cst_26 = arith.constant 1.000000e-01 : f32
    %98 = vector.broadcast %cst_26 : f32 to vector<4x16x36xf32>
    %99 = arith.mulf %98, %95 : vector<4x16x36xf32>
    %100 = arith.select %97, %95, %99 : vector<4x16x36xi1>, vector<4x16x36xf32>
    %c0_27 = arith.constant 0 : index
    %c0_28 = arith.constant 0 : index
    %101 = vector.load %arg8[%c0_27, %c0_28] : memref<32x144xbf16, #tpu.memory_space<vmem>>, vector<32x144xbf16>
    %c0_29 = arith.constant 0 : index
    %c0_30 = arith.constant 0 : index
    %102 = vector.load %arg9[%c0_29, %c0_30] : memref<32x1xf32, #tpu.memory_space<vmem>>, vector<32x1xf32>
    %c0_31 = arith.constant 0 : index
    %c0_32 = arith.constant 0 : index
    %103 = vector.load %arg10[%c0_31, %c0_32] : memref<15x4xbf16, #tpu.memory_space<vmem>>, vector<15x4xbf16>
    %104 = vector.extract_strided_slice %100 {offsets = [0, 0, 0], sizes = [4, 16, 22], strides = [1, 1, 1]} : vector<4x16x36xf32> to vector<4x16x22xf32>
    %105 = vector.extract_strided_slice %100 {offsets = [0, 0, 1], sizes = [4, 16, 22], strides = [1, 1, 1]} : vector<4x16x36xf32> to vector<4x16x22xf32>
    %106 = vector.extract_strided_slice %100 {offsets = [0, 0, 2], sizes = [4, 16, 22], strides = [1, 1, 1]} : vector<4x16x36xf32> to vector<4x16x22xf32>
    %107 = vector.extract_strided_slice %100 {offsets = [0, 0, 6], sizes = [4, 16, 22], strides = [1, 1, 1]} : vector<4x16x36xf32> to vector<4x16x22xf32>
    %108 = vector.extract_strided_slice %100 {offsets = [0, 0, 7], sizes = [4, 16, 22], strides = [1, 1, 1]} : vector<4x16x36xf32> to vector<4x16x22xf32>
    %109 = vector.extract_strided_slice %100 {offsets = [0, 0, 8], sizes = [4, 16, 22], strides = [1, 1, 1]} : vector<4x16x36xf32> to vector<4x16x22xf32>
    %110 = vector.extract_strided_slice %100 {offsets = [0, 0, 12], sizes = [4, 16, 22], strides = [1, 1, 1]} : vector<4x16x36xf32> to vector<4x16x22xf32>
    %111 = vector.extract_strided_slice %100 {offsets = [0, 0, 13], sizes = [4, 16, 22], strides = [1, 1, 1]} : vector<4x16x36xf32> to vector<4x16x22xf32>
    %112 = vector.extract_strided_slice %100 {offsets = [0, 0, 14], sizes = [4, 16, 22], strides = [1, 1, 1]} : vector<4x16x36xf32> to vector<4x16x22xf32>
    %113 = tpu.concatenate %104, %105, %106, %107, %108, %109, %110, %111, %112 in 1 : vector<4x16x22xf32>, vector<4x16x22xf32>, vector<4x16x22xf32>, vector<4x16x22xf32>, vector<4x16x22xf32>, vector<4x16x22xf32>, vector<4x16x22xf32>, vector<4x16x22xf32>, vector<4x16x22xf32> -> vector<4x144x22xf32>
    %114 = arith.truncf %113 : vector<4x144x22xf32> to vector<4x144x22xbf16>
    %115 = vector.extract_strided_slice %114 {offsets = [0, 0, 0], sizes = [1, 144, 22], strides = [1, 1, 1]} : vector<4x144x22xbf16> to vector<1x144x22xbf16>
    %116 = vector.shape_cast %115 : vector<1x144x22xbf16> to vector<144x22xbf16>
    %cst_33 = arith.constant dense<0.000000e+00> : vector<32x22xf32>
    %117 = tpu.matmul %101, %116, %cst_33 {dimension_numbers = #tpu.dot_dimension_numbers<[1], [0], [0], [1], [0, 0, 1, 1], [], []>} : vector<32x144xbf16>, vector<144x22xbf16>, vector<32x22xf32> -> vector<32x22xf32>
    %118 = vector.extract_strided_slice %114 {offsets = [1, 0, 0], sizes = [1, 144, 22], strides = [1, 1, 1]} : vector<4x144x22xbf16> to vector<1x144x22xbf16>
    %119 = vector.shape_cast %118 : vector<1x144x22xbf16> to vector<144x22xbf16>
    %cst_34 = arith.constant dense<0.000000e+00> : vector<32x22xf32>
    %120 = tpu.matmul %101, %119, %cst_34 {dimension_numbers = #tpu.dot_dimension_numbers<[1], [0], [0], [1], [0, 0, 1, 1], [], []>} : vector<32x144xbf16>, vector<144x22xbf16>, vector<32x22xf32> -> vector<32x22xf32>
    %121 = vector.extract_strided_slice %114 {offsets = [2, 0, 0], sizes = [1, 144, 22], strides = [1, 1, 1]} : vector<4x144x22xbf16> to vector<1x144x22xbf16>
    %122 = vector.shape_cast %121 : vector<1x144x22xbf16> to vector<144x22xbf16>
    %cst_35 = arith.constant dense<0.000000e+00> : vector<32x22xf32>
    %123 = tpu.matmul %101, %122, %cst_35 {dimension_numbers = #tpu.dot_dimension_numbers<[1], [0], [0], [1], [0, 0, 1, 1], [], []>} : vector<32x144xbf16>, vector<144x22xbf16>, vector<32x22xf32> -> vector<32x22xf32>
    %124 = vector.extract_strided_slice %114 {offsets = [3, 0, 0], sizes = [1, 144, 22], strides = [1, 1, 1]} : vector<4x144x22xbf16> to vector<1x144x22xbf16>
    %125 = vector.shape_cast %124 : vector<1x144x22xbf16> to vector<144x22xbf16>
    %cst_36 = arith.constant dense<0.000000e+00> : vector<32x22xf32>
    %126 = tpu.matmul %101, %125, %cst_36 {dimension_numbers = #tpu.dot_dimension_numbers<[1], [0], [0], [1], [0, 0, 1, 1], [], []>} : vector<32x144xbf16>, vector<144x22xbf16>, vector<32x22xf32> -> vector<32x22xf32>
    %127 = vector.shape_cast %117 : vector<32x22xf32> to vector<1x32x22xf32>
    %128 = vector.shape_cast %120 : vector<32x22xf32> to vector<1x32x22xf32>
    %129 = vector.shape_cast %123 : vector<32x22xf32> to vector<1x32x22xf32>
    %130 = vector.shape_cast %126 : vector<32x22xf32> to vector<1x32x22xf32>
    %131 = tpu.concatenate %127, %128, %129, %130 in 0 : vector<1x32x22xf32>, vector<1x32x22xf32>, vector<1x32x22xf32>, vector<1x32x22xf32> -> vector<4x32x22xf32>
    %132 = vector.extract_strided_slice %131 {offsets = [0, 0, 0], sizes = [4, 32, 15], strides = [1, 1, 1]} : vector<4x32x22xf32> to vector<4x32x15xf32>
    %133 = vector.extract_strided_slice %131 {offsets = [0, 0, 1], sizes = [4, 32, 15], strides = [1, 1, 1]} : vector<4x32x22xf32> to vector<4x32x15xf32>
    %134 = arith.maximumf %132, %133 : vector<4x32x15xf32>
    %135 = vector.extract_strided_slice %131 {offsets = [0, 0, 6], sizes = [4, 32, 15], strides = [1, 1, 1]} : vector<4x32x22xf32> to vector<4x32x15xf32>
    %136 = arith.maximumf %134, %135 : vector<4x32x15xf32>
    %137 = vector.extract_strided_slice %131 {offsets = [0, 0, 7], sizes = [4, 32, 15], strides = [1, 1, 1]} : vector<4x32x22xf32> to vector<4x32x15xf32>
    %138 = arith.maximumf %136, %137 : vector<4x32x15xf32>
    %139 = vector.shape_cast %138 : vector<4x32x15xf32> to vector<128x15xf32>
    %140 = arith.truncf %139 : vector<128x15xf32> to vector<128x15xbf16>
    %cst_37 = arith.constant dense<0.000000e+00> : vector<128x4xf32>
    %141 = tpu.matmul %140, %103, %cst_37 {dimension_numbers = #tpu.dot_dimension_numbers<[1], [0], [0], [1], [0, 0, 1, 1], [], []>} : vector<128x15xbf16>, vector<15x4xbf16>, vector<128x4xf32> -> vector<128x4xf32>
    %142 = vector.shape_cast %141 : vector<128x4xf32> to vector<4x32x4xf32>
    %143 = vector.shape_cast %102 : vector<32x1xf32> to vector<1x32x1xf32>
    %144 = vector.broadcast %143 : vector<1x32x1xf32> to vector<4x32x4xf32>
    %145 = arith.addf %142, %144 : vector<4x32x4xf32>
    %cst_38 = arith.constant 0.000000e+00 : f32
    %146 = vector.broadcast %cst_38 : f32 to vector<4x32x4xf32>
    %147 = arith.cmpf ogt, %145, %146 : vector<4x32x4xf32>
    %cst_39 = arith.constant 1.000000e-01 : f32
    %148 = vector.broadcast %cst_39 : f32 to vector<4x32x4xf32>
    %149 = arith.mulf %148, %145 : vector<4x32x4xf32>
    %150 = arith.select %147, %145, %149 : vector<4x32x4xi1>, vector<4x32x4xf32>
    %151 = arith.truncf %150 : vector<4x32x4xf32> to vector<4x32x4xbf16>
    %c0_40 = arith.constant 0 : index
    %c0_41 = arith.constant 0 : index
    %c0_42 = arith.constant 0 : index
    %152 = vector.load %arg11[%c0_40, %c0_41, %c0_42] : memref<4x32x32xbf16, #tpu.memory_space<vmem>>, vector<4x32x32xbf16>
    %c0_43 = arith.constant 0 : index
    %c0_44 = arith.constant 0 : index
    %153 = vector.load %arg12[%c0_43, %c0_44] : memref<32x1xf32, #tpu.memory_space<vmem>>, vector<32x1xf32>
    %154 = vector.extract_strided_slice %151 {offsets = [0, 0, 0], sizes = [1, 32, 1], strides = [1, 1, 1]} : vector<4x32x4xbf16> to vector<1x32x1xbf16>
    %155 = vector.shape_cast %154 : vector<1x32x1xbf16> to vector<32x1xbf16>
    %156 = vector.extract_strided_slice %151 {offsets = [1, 0, 0], sizes = [1, 32, 1], strides = [1, 1, 1]} : vector<4x32x4xbf16> to vector<1x32x1xbf16>
    %157 = vector.shape_cast %156 : vector<1x32x1xbf16> to vector<32x1xbf16>
    %158 = vector.extract_strided_slice %151 {offsets = [2, 0, 0], sizes = [1, 32, 1], strides = [1, 1, 1]} : vector<4x32x4xbf16> to vector<1x32x1xbf16>
    %159 = vector.shape_cast %158 : vector<1x32x1xbf16> to vector<32x1xbf16>
    %160 = vector.extract_strided_slice %151 {offsets = [3, 0, 0], sizes = [1, 32, 1], strides = [1, 1, 1]} : vector<4x32x4xbf16> to vector<1x32x1xbf16>
    %161 = vector.shape_cast %160 : vector<1x32x1xbf16> to vector<32x1xbf16>
    %162 = tpu.concatenate %155, %157, %159, %161 in 1 : vector<32x1xbf16>, vector<32x1xbf16>, vector<32x1xbf16>, vector<32x1xbf16> -> vector<32x4xbf16>
    %163 = vector.extract_strided_slice %152 {offsets = [0, 0, 0], sizes = [1, 32, 32], strides = [1, 1, 1]} : vector<4x32x32xbf16> to vector<1x32x32xbf16>
    %164 = vector.shape_cast %163 : vector<1x32x32xbf16> to vector<32x32xbf16>
    %cst_45 = arith.constant dense<0.000000e+00> : vector<32x4xf32>
    %165 = tpu.matmul %164, %162, %cst_45 {dimension_numbers = #tpu.dot_dimension_numbers<[1], [0], [0], [1], [0, 0, 1, 1], [], []>} : vector<32x32xbf16>, vector<32x4xbf16>, vector<32x4xf32> -> vector<32x4xf32>
    %166 = vector.broadcast %153 : vector<32x1xf32> to vector<32x4xf32>
    %167 = arith.addf %166, %165 : vector<32x4xf32>
    %168 = vector.extract_strided_slice %151 {offsets = [0, 0, 1], sizes = [1, 32, 1], strides = [1, 1, 1]} : vector<4x32x4xbf16> to vector<1x32x1xbf16>
    %169 = vector.shape_cast %168 : vector<1x32x1xbf16> to vector<32x1xbf16>
    %170 = vector.extract_strided_slice %151 {offsets = [1, 0, 1], sizes = [1, 32, 1], strides = [1, 1, 1]} : vector<4x32x4xbf16> to vector<1x32x1xbf16>
    %171 = vector.shape_cast %170 : vector<1x32x1xbf16> to vector<32x1xbf16>
    %172 = vector.extract_strided_slice %151 {offsets = [2, 0, 1], sizes = [1, 32, 1], strides = [1, 1, 1]} : vector<4x32x4xbf16> to vector<1x32x1xbf16>
    %173 = vector.shape_cast %172 : vector<1x32x1xbf16> to vector<32x1xbf16>
    %174 = vector.extract_strided_slice %151 {offsets = [3, 0, 1], sizes = [1, 32, 1], strides = [1, 1, 1]} : vector<4x32x4xbf16> to vector<1x32x1xbf16>
    %175 = vector.shape_cast %174 : vector<1x32x1xbf16> to vector<32x1xbf16>
    %176 = tpu.concatenate %169, %171, %173, %175 in 1 : vector<32x1xbf16>, vector<32x1xbf16>, vector<32x1xbf16>, vector<32x1xbf16> -> vector<32x4xbf16>
    %177 = vector.extract_strided_slice %152 {offsets = [1, 0, 0], sizes = [1, 32, 32], strides = [1, 1, 1]} : vector<4x32x32xbf16> to vector<1x32x32xbf16>
    %178 = vector.shape_cast %177 : vector<1x32x32xbf16> to vector<32x32xbf16>
    %cst_46 = arith.constant dense<0.000000e+00> : vector<32x4xf32>
    %179 = tpu.matmul %178, %176, %cst_46 {dimension_numbers = #tpu.dot_dimension_numbers<[1], [0], [0], [1], [0, 0, 1, 1], [], []>} : vector<32x32xbf16>, vector<32x4xbf16>, vector<32x4xf32> -> vector<32x4xf32>
    %180 = arith.addf %167, %179 : vector<32x4xf32>
    %181 = vector.extract_strided_slice %151 {offsets = [0, 0, 2], sizes = [1, 32, 1], strides = [1, 1, 1]} : vector<4x32x4xbf16> to vector<1x32x1xbf16>
    %182 = vector.shape_cast %181 : vector<1x32x1xbf16> to vector<32x1xbf16>
    %183 = vector.extract_strided_slice %151 {offsets = [1, 0, 2], sizes = [1, 32, 1], strides = [1, 1, 1]} : vector<4x32x4xbf16> to vector<1x32x1xbf16>
    %184 = vector.shape_cast %183 : vector<1x32x1xbf16> to vector<32x1xbf16>
    %185 = vector.extract_strided_slice %151 {offsets = [2, 0, 2], sizes = [1, 32, 1], strides = [1, 1, 1]} : vector<4x32x4xbf16> to vector<1x32x1xbf16>
    %186 = vector.shape_cast %185 : vector<1x32x1xbf16> to vector<32x1xbf16>
    %187 = vector.extract_strided_slice %151 {offsets = [3, 0, 2], sizes = [1, 32, 1], strides = [1, 1, 1]} : vector<4x32x4xbf16> to vector<1x32x1xbf16>
    %188 = vector.shape_cast %187 : vector<1x32x1xbf16> to vector<32x1xbf16>
    %189 = tpu.concatenate %182, %184, %186, %188 in 1 : vector<32x1xbf16>, vector<32x1xbf16>, vector<32x1xbf16>, vector<32x1xbf16> -> vector<32x4xbf16>
    %190 = vector.extract_strided_slice %152 {offsets = [2, 0, 0], sizes = [1, 32, 32], strides = [1, 1, 1]} : vector<4x32x32xbf16> to vector<1x32x32xbf16>
    %191 = vector.shape_cast %190 : vector<1x32x32xbf16> to vector<32x32xbf16>
    %cst_47 = arith.constant dense<0.000000e+00> : vector<32x4xf32>
    %192 = tpu.matmul %191, %189, %cst_47 {dimension_numbers = #tpu.dot_dimension_numbers<[1], [0], [0], [1], [0, 0, 1, 1], [], []>} : vector<32x32xbf16>, vector<32x4xbf16>, vector<32x4xf32> -> vector<32x4xf32>
    %193 = arith.addf %180, %192 : vector<32x4xf32>
    %194 = vector.extract_strided_slice %151 {offsets = [0, 0, 3], sizes = [1, 32, 1], strides = [1, 1, 1]} : vector<4x32x4xbf16> to vector<1x32x1xbf16>
    %195 = vector.shape_cast %194 : vector<1x32x1xbf16> to vector<32x1xbf16>
    %196 = vector.extract_strided_slice %151 {offsets = [1, 0, 3], sizes = [1, 32, 1], strides = [1, 1, 1]} : vector<4x32x4xbf16> to vector<1x32x1xbf16>
    %197 = vector.shape_cast %196 : vector<1x32x1xbf16> to vector<32x1xbf16>
    %198 = vector.extract_strided_slice %151 {offsets = [2, 0, 3], sizes = [1, 32, 1], strides = [1, 1, 1]} : vector<4x32x4xbf16> to vector<1x32x1xbf16>
    %199 = vector.shape_cast %198 : vector<1x32x1xbf16> to vector<32x1xbf16>
    %200 = vector.extract_strided_slice %151 {offsets = [3, 0, 3], sizes = [1, 32, 1], strides = [1, 1, 1]} : vector<4x32x4xbf16> to vector<1x32x1xbf16>
    %201 = vector.shape_cast %200 : vector<1x32x1xbf16> to vector<32x1xbf16>
    %202 = tpu.concatenate %195, %197, %199, %201 in 1 : vector<32x1xbf16>, vector<32x1xbf16>, vector<32x1xbf16>, vector<32x1xbf16> -> vector<32x4xbf16>
    %203 = vector.extract_strided_slice %152 {offsets = [3, 0, 0], sizes = [1, 32, 32], strides = [1, 1, 1]} : vector<4x32x32xbf16> to vector<1x32x32xbf16>
    %204 = vector.shape_cast %203 : vector<1x32x32xbf16> to vector<32x32xbf16>
    %cst_48 = arith.constant dense<0.000000e+00> : vector<32x4xf32>
    %205 = tpu.matmul %204, %202, %cst_48 {dimension_numbers = #tpu.dot_dimension_numbers<[1], [0], [0], [1], [0, 0, 1, 1], [], []>} : vector<32x32xbf16>, vector<32x4xbf16>, vector<32x4xf32> -> vector<32x4xf32>
    %206 = arith.addf %193, %205 : vector<32x4xf32>
    %cst_49 = arith.constant 0.000000e+00 : f32
    %207 = vector.broadcast %cst_49 : f32 to vector<32x4xf32>
    %208 = arith.maximumf %206, %207 : vector<32x4xf32>
    %209 = arith.truncf %208 : vector<32x4xf32> to vector<32x4xbf16>
    %c0_50 = arith.constant 0 : index
    %c0_51 = arith.constant 0 : index
    %210 = vector.load %arg13[%c0_50, %c0_51] : memref<16x32xbf16, #tpu.memory_space<vmem>>, vector<16x32xbf16>
    %cst_52 = arith.constant dense<0.000000e+00> : vector<16x4xf32>
    %211 = tpu.matmul %210, %209, %cst_52 {dimension_numbers = #tpu.dot_dimension_numbers<[1], [0], [0], [1], [0, 0, 1, 1], [], []>} : vector<16x32xbf16>, vector<32x4xbf16>, vector<16x4xf32> -> vector<16x4xf32>
    %c0_53 = arith.constant 0 : index
    %c0_54 = arith.constant 0 : index
    %212 = vector.load %arg14[%c0_53, %c0_54] : memref<16x1xf32, #tpu.memory_space<vmem>>, vector<16x1xf32>
    %213 = vector.broadcast %212 : vector<16x1xf32> to vector<16x4xf32>
    %214 = arith.addf %211, %213 : vector<16x4xf32>
    %cst_55 = arith.constant 0.000000e+00 : f32
    %215 = vector.broadcast %cst_55 : f32 to vector<16x4xf32>
    %216 = arith.maximumf %214, %215 : vector<16x4xf32>
    %217 = arith.truncf %216 : vector<16x4xf32> to vector<16x4xbf16>
    %c0_56 = arith.constant 0 : index
    %c0_57 = arith.constant 0 : index
    %218 = vector.load %arg15[%c0_56, %c0_57] : memref<1x16xbf16, #tpu.memory_space<vmem>>, vector<1x16xbf16>
    %cst_58 = arith.constant dense<0.000000e+00> : vector<1x4xf32>
    %219 = tpu.matmul %218, %217, %cst_58 {dimension_numbers = #tpu.dot_dimension_numbers<[1], [0], [0], [1], [0, 0, 1, 1], [], []>} : vector<1x16xbf16>, vector<16x4xbf16>, vector<1x4xf32> -> vector<1x4xf32>
    %c0_59 = arith.constant 0 : index
    %c0_60 = arith.constant 0 : index
    %220 = vector.load %arg16[%c0_59, %c0_60] : memref<1x1xf32, #tpu.memory_space<vmem>>, vector<1x1xf32>
    %221 = vector.broadcast %220 : vector<1x1xf32> to vector<1x4xf32>
    %222 = arith.addf %219, %221 : vector<1x4xf32>
    %cst_61 = arith.constant 0.000000e+00 : f32
    %223 = vector.broadcast %cst_61 : f32 to vector<1x4xf32>
    %224 = arith.subf %223, %222 : vector<1x4xf32>
    %225 = math.exp %224 : vector<1x4xf32>
    %cst_62 = arith.constant 1.000000e+00 : f32
    %226 = vector.broadcast %cst_62 : f32 to vector<1x4xf32>
    %227 = arith.addf %226, %225 : vector<1x4xf32>
    %cst_63 = arith.constant 1.000000e+00 : f32
    %228 = vector.broadcast %cst_63 : f32 to vector<1x4xf32>
    %229 = arith.divf %228, %227 : vector<1x4xf32>
    %c0_64 = arith.constant 0 : index
    %c0_65 = arith.constant 0 : index
    %c0_66 = arith.constant 0 : index
    %230 = vector.load %arg17[%c0_64, %c0_65, %c0_66] : memref<1x1x4xf32, #tpu.memory_space<vmem>>, vector<1x1x4xf32>
    %231 = vector.shape_cast %230 : vector<1x1x4xf32> to vector<1x4xf32>
    %232 = vector.shape_cast %229 : vector<1x4xf32> to vector<1x1x4xf32>
    tpu.vector_store %arg17[%c0_64, %c0_65, %c0_66], %232 {strides = array<i32>} : memref<1x1x4xf32, #tpu.memory_space<vmem>>, vector<1x1x4xf32>,
    return
  }
  func.func @transform_0(%arg0: i32) -> (i32, i32, i32) {
    %c0_i32 = arith.constant 0 : i32
    %c0_i32_0 = arith.constant 0 : i32
    %c0_i32_1 = arith.constant 0 : i32
    return %arg0, %c0_i32, %c0_i32_0 : i32, i32, i32
  }
  func.func @transform_1(%arg0: i32) -> (i32, i32) {
    %c0_i32 = arith.constant 0 : i32
    %c0_i32_0 = arith.constant 0 : i32
    %c0_i32_1 = arith.constant 0 : i32
    return %c0_i32, %c0_i32_0 : i32, i32
  }
  func.func @transform_2(%arg0: i32) -> (i32, i32) {
    %c0_i32 = arith.constant 0 : i32
    %c0_i32_0 = arith.constant 0 : i32
    %c0_i32_1 = arith.constant 0 : i32
    return %c0_i32, %c0_i32_0 : i32, i32
  }
  func.func @transform_3(%arg0: i32) -> (i32, i32) {
    %c0_i32 = arith.constant 0 : i32
    %c0_i32_0 = arith.constant 0 : i32
    %c0_i32_1 = arith.constant 0 : i32
    return %c0_i32, %c0_i32_0 : i32, i32
  }
  func.func @transform_4(%arg0: i32) -> (i32, i32) {
    %c0_i32 = arith.constant 0 : i32
    %c0_i32_0 = arith.constant 0 : i32
    %c0_i32_1 = arith.constant 0 : i32
    return %c0_i32, %c0_i32_0 : i32, i32
  }
  func.func @transform_5(%arg0: i32) -> (i32, i32) {
    %c0_i32 = arith.constant 0 : i32
    %c0_i32_0 = arith.constant 0 : i32
    %c0_i32_1 = arith.constant 0 : i32
    return %c0_i32, %c0_i32_0 : i32, i32
  }
  func.func @transform_6(%arg0: i32) -> (i32, i32) {
    %c0_i32 = arith.constant 0 : i32
    %c0_i32_0 = arith.constant 0 : i32
    %c0_i32_1 = arith.constant 0 : i32
    return %c0_i32, %c0_i32_0 : i32, i32
  }
  func.func @transform_7(%arg0: i32) -> (i32, i32) {
    %c0_i32 = arith.constant 0 : i32
    %c0_i32_0 = arith.constant 0 : i32
    %c0_i32_1 = arith.constant 0 : i32
    return %c0_i32, %c0_i32_0 : i32, i32
  }
  func.func @transform_8(%arg0: i32) -> (i32, i32) {
    %c0_i32 = arith.constant 0 : i32
    %c0_i32_0 = arith.constant 0 : i32
    %c0_i32_1 = arith.constant 0 : i32
    return %c0_i32, %c0_i32_0 : i32, i32
  }
  func.func @transform_9(%arg0: i32) -> (i32, i32) {
    %c0_i32 = arith.constant 0 : i32
    %c0_i32_0 = arith.constant 0 : i32
    %c0_i32_1 = arith.constant 0 : i32
    return %c0_i32, %c0_i32_0 : i32, i32
  }
  func.func @transform_10(%arg0: i32) -> (i32, i32, i32) {
    %c0_i32 = arith.constant 0 : i32
    %c0_i32_0 = arith.constant 0 : i32
    %c0_i32_1 = arith.constant 0 : i32
    %c0_i32_2 = arith.constant 0 : i32
    return %c0_i32, %c0_i32_0, %c0_i32_1 : i32, i32, i32
  }
  func.func @transform_11(%arg0: i32) -> (i32, i32) {
    %c0_i32 = arith.constant 0 : i32
    %c0_i32_0 = arith.constant 0 : i32
    %c0_i32_1 = arith.constant 0 : i32
    return %c0_i32, %c0_i32_0 : i32, i32
  }
  func.func @transform_12(%arg0: i32) -> (i32, i32) {
    %c0_i32 = arith.constant 0 : i32
    %c0_i32_0 = arith.constant 0 : i32
    %c0_i32_1 = arith.constant 0 : i32
    return %c0_i32, %c0_i32_0 : i32, i32
  }
  func.func @transform_13(%arg0: i32) -> (i32, i32) {
    %c0_i32 = arith.constant 0 : i32
    %c0_i32_0 = arith.constant 0 : i32
    %c0_i32_1 = arith.constant 0 : i32
    return %c0_i32, %c0_i32_0 : i32, i32
  }
  func.func @transform_14(%arg0: i32) -> (i32, i32) {
    %c0_i32 = arith.constant 0 : i32
    %c0_i32_0 = arith.constant 0 : i32
    %c0_i32_1 = arith.constant 0 : i32
    return %c0_i32, %c0_i32_0 : i32, i32
  }
  func.func @transform_15(%arg0: i32) -> (i32, i32) {
    %c0_i32 = arith.constant 0 : i32
    %c0_i32_0 = arith.constant 0 : i32
    %c0_i32_1 = arith.constant 0 : i32
    return %c0_i32, %c0_i32_0 : i32, i32
  }
  func.func @transform_16(%arg0: i32) -> (i32, i32, i32) {
    %c0_i32 = arith.constant 0 : i32
    %c0_i32_0 = arith.constant 0 : i32
    %c0_i32_1 = arith.constant 0 : i32
    return %arg0, %c0_i32, %c0_i32_0 : i32, i32, i32
  }
}

</mosaic_0001>

<llo_original>
// kernel: net_forward.1
$region0: #{net_forward.1}
  #allocation0 [shape = 'u32[]', space=smem, size = 0x4, offset = 0x4, fixed_abs, tag = 'smem constant byte address 0x4 - core index']
  #allocation1 [shape = 'u32[144,128]{1,0:T(1,128)}', space=vmem, size = 0x12000, scoped, tag = 'internal scratch']
  #allocation2 [shape = 'f32[1,1]{1,0:T(1,128)S(1)}', space=vmem, size = 0x200, scoped, tag = 'scoped memory for net_forward.1']
  %s0 = inlined_call_operand.vmem [shape: f32[8,8,1024], index: 0, kind: input, shape index: {}]
  %s1 = inlined_call_operand.vmem [shape: bf16[8,72], index: 1, kind: input, shape index: {}]
  %s2 = inlined_call_operand.vmem [shape: f32[8,1], index: 2, kind: input, shape index: {}]
  %s3 = inlined_call_operand.vmem [shape: bf16[925,225], index: 3, kind: input, shape index: {}]
  %s4 = inlined_call_operand.vmem [shape: bf16[16,72], index: 4, kind: input, shape index: {}]
  %s5 = inlined_call_operand.vmem [shape: f32[16,1], index: 5, kind: input, shape index: {}]
  %s6 = inlined_call_operand.vmem [shape: bf16[177,36], index: 6, kind: input, shape index: {}]
  %s7 = inlined_call_operand.vmem [shape: bf16[32,144], index: 7, kind: input, shape index: {}]
  %s8 = inlined_call_operand.vmem [shape: f32[32,1], index: 8, kind: input, shape index: {}]
  %s9 = inlined_call_operand.vmem [shape: bf16[15,4], index: 9, kind: input, shape index: {}]
  %s10 = inlined_call_operand.vmem [shape: bf16[4,32,32], index: 10, kind: input, shape index: {}]
  %s11 = inlined_call_operand.vmem [shape: f32[32,1], index: 11, kind: input, shape index: {}]
  %s12 = inlined_call_operand.vmem [shape: bf16[16,32], index: 12, kind: input, shape index: {}]
  %s13 = inlined_call_operand.vmem [shape: f32[16,1], index: 13, kind: input, shape index: {}]
  %s14 = inlined_call_operand.vmem [shape: bf16[1,16], index: 14, kind: input, shape index: {}]
  %s15 = inlined_call_operand.<no memory space> [shape: f32[1,1], index: 15, kind: input, shape index: {}]
  %s16 = inlined_call_operand.vmem [shape: f32[2,1,4], index: 16, kind: output, shape index: {}]
  %s17 = sld [smem:[#allocation0]]
  $region97: #{net_forward.1} parent=0
    _
  %s19 = ssub.s32 1, %s17
  %s20 = scalar_select 0, %s19, %s17
  %v21 = vstv %s15
  %22 = vst [vmem:[#allocation2] sm:$0x1] %v21
  loop: start=0, step=1, limit=4
  $region2: #{net_forward.1} parent=0 // loop_pre_header
    _
  $region3: #{net_forward.1} parent=0 // loop_header
    %s24 = sphi 0, %s28
    %p25 = scmp.ge.s32.totalorder %s24, 4
    %s34 = sphi 0, %s36
    %s37 = sphi 0, %s34
    %s38 = sphi 0, %s37
    %s54 = sphi 0, %s38
    %s58 = sphi 0, %s58
    %s60 = sphi 0, %s58
    %s61 = sphi 0, %s60
    %s75 = sphi 0, %s61
    %s79 = sphi 0, %s79
    %s81 = sphi 0, %s79
    %s82 = sphi 0, %s81
    %s96 = sphi 0, %s82
    %s100 = sphi 0, %s100
    %s102 = sphi 0, %s100
    %s103 = sphi 0, %s102
    %s117 = sphi 0, %s103
    %s121 = sphi 0, %s121
    %s123 = sphi 0, %s121
    %s124 = sphi 0, %s123
    %s138 = sphi 0, %s124
    %s142 = sphi 0, %s142
    %s144 = sphi 0, %s142
    %s145 = sphi 0, %s144
    %s159 = sphi 0, %s145
    %s163 = sphi 0, %s163
    %s165 = sphi 0, %s163
    %s166 = sphi 0, %s165
    %s180 = sphi 0, %s166
    %s184 = sphi 0, %s184
    %s186 = sphi 0, %s184
    %s187 = sphi 0, %s186
    %s201 = sphi 0, %s187
    %s205 = sphi 0, %s205
    %s207 = sphi 0, %s205
    %s208 = sphi 0, %s207
    %s222 = sphi 0, %s208
    %s226 = sphi 0, %s226
    %s228 = sphi 0, %s226
    %s229 = sphi 0, %s228
    %s243 = sphi 0, %s229
    %s247 = sphi 0, %s247
    %s249 = sphi 0, %s247
    %s250 = sphi 0, %s249
    %s264 = sphi 0, %s250
    %s268 = sphi 0, %s268
    %s270 = sphi 0, %s268
    %s271 = sphi 0, %s270
    %s285 = sphi 0, %s271
    %s289 = sphi 0, %s289
    %s291 = sphi 0, %s289
    %s292 = sphi 0, %s291
    %s306 = sphi 0, %s292
    %s310 = sphi 0, %s310
    %s312 = sphi 0, %s310
    %s313 = sphi 0, %s312
    %s327 = sphi 0, %s313
    %s331 = sphi 0, %s331
    %s333 = sphi 0, %s331
    %s334 = sphi 0, %s333
    %s348 = sphi 0, %s334
    %s352 = sphi 0, %s352
    %s354 = sphi 0, %s352
    %s355 = sphi 0, %s354
    %s369 = sphi 0, %s355
    %s375 = sphi 0, %s377
    %s378 = sphi 0, %s375
    %s379 = sphi 0, %s378
    %s395 = sphi 0, %s379
  $region4: #{net_forward.1} parent=0 // loop_header_branch
    %27 = sbr.rel (%p25) target = $region8
  $region5: #{net_forward.1} parent=0 // loop_body
    %s29 = ssub.s32 %s24, 1
    %s30 = ssub.s32 %s24, 2
    %s31 = sadd.s32 %s24, 1
    %s32 = ssub.s32 %s24, %s31
    %p33 = scmp.eq.s32.totalorder %s32, 0
    %s35 = sadd.s32 %s34, 1
    %s36 = scalar_select %p33, %s34, %s35
    %p39 = pneg %p33
    %p40 = scmp.eq.s32.totalorder %s24, 1
    %p41 = por %p39, %p40
    %p42 = scmp.ne.s32.totalorder %s34, %s37
    %p43 = scmp.eq.s32.totalorder %s24, 0
    %p44 = por %p42, %p43
    %p45 = scmp.ne.s32.totalorder %s34, %s37
    %p46 = scmp.eq.s32.totalorder %s29, 1
    %p47 = por %p45, %p46
    %p48 = scmp.ne.s32.totalorder %s37, %s38
    %p49 = scmp.eq.s32.totalorder %s29, 0
    %p50 = por %p48, %p49
    %p51 = scmp.ne.s32.totalorder %s37, %s38
    %p52 = scmp.eq.s32.totalorder %s30, 1
    %p53 = por %p51, %p52
    %p55 = scmp.ne.s32.totalorder %s38, %s54
    %p56 = scmp.eq.s32.totalorder %s30, 0
    %p57 = por %p55, %p56
    %s59 = sadd.s32 %s58, 1
    %p62 = scmp.eq.s32.totalorder %s24, 1
    %p63 = scmp.ne.s32.totalorder %s58, %s60
    %p64 = scmp.eq.s32.totalorder %s24, 0
    %p65 = por %p63, %p64
    %p66 = scmp.ne.s32.totalorder %s58, %s60
    %p67 = scmp.eq.s32.totalorder %s29, 1
    %p68 = por %p66, %p67
    %p69 = scmp.ne.s32.totalorder %s60, %s61
    %p70 = scmp.eq.s32.totalorder %s29, 0
    %p71 = por %p69, %p70
    %p72 = scmp.ne.s32.totalorder %s60, %s61
    %p73 = scmp.eq.s32.totalorder %s30, 1
    %p74 = por %p72, %p73
    %p76 = scmp.ne.s32.totalorder %s61, %s75
    %p77 = scmp.eq.s32.totalorder %s30, 0
    %p78 = por %p76, %p77
    %s80 = sadd.s32 %s79, 1
    %p83 = scmp.eq.s32.totalorder %s24, 1
    %p84 = scmp.ne.s32.totalorder %s79, %s81
    %p85 = scmp.eq.s32.totalorder %s24, 0
    %p86 = por %p84, %p85
    %p87 = scmp.ne.s32.totalorder %s79, %s81
    %p88 = scmp.eq.s32.totalorder %s29, 1
    %p89 = por %p87, %p88
    %p90 = scmp.ne.s32.totalorder %s81, %s82
    %p91 = scmp.eq.s32.totalorder %s29, 0
    %p92 = por %p90, %p91
    %p93 = scmp.ne.s32.totalorder %s81, %s82
    %p94 = scmp.eq.s32.totalorder %s30, 1
    %p95 = por %p93, %p94
    %p97 = scmp.ne.s32.totalorder %s82, %s96
    %p98 = scmp.eq.s32.totalorder %s30, 0
    %p99 = por %p97, %p98
    %s101 = sadd.s32 %s100, 1
    %p104 = scmp.eq.s32.totalorder %s24, 1
    %p105 = scmp.ne.s32.totalorder %s100, %s102
    %p106 = scmp.eq.s32.totalorder %s24, 0
    %p107 = por %p105, %p106
    %p108 = scmp.ne.s32.totalorder %s100, %s102
    %p109 = scmp.eq.s32.totalorder %s29, 1
    %p110 = por %p108, %p109
    %p111 = scmp.ne.s32.totalorder %s102, %s103
    %p112 = scmp.eq.s32.totalorder %s29, 0
    %p113 = por %p111, %p112
    %p114 = scmp.ne.s32.totalorder %s102, %s103
    %p115 = scmp.eq.s32.totalorder %s30, 1
    %p116 = por %p114, %p115
    %p118 = scmp.ne.s32.totalorder %s103, %s117
    %p119 = scmp.eq.s32.totalorder %s30, 0
    %p120 = por %p118, %p119
    %s122 = sadd.s32 %s121, 1
    %p125 = scmp.eq.s32.totalorder %s24, 1
    %p126 = scmp.ne.s32.totalorder %s121, %s123
    %p127 = scmp.eq.s32.totalorder %s24, 0
    %p128 = por %p126, %p127
    %p129 = scmp.ne.s32.totalorder %s121, %s123
    %p130 = scmp.eq.s32.totalorder %s29, 1
    %p131 = por %p129, %p130
    %p132 = scmp.ne.s32.totalorder %s123, %s124
    %p133 = scmp.eq.s32.totalorder %s29, 0
    %p134 = por %p132, %p133
    %p135 = scmp.ne.s32.totalorder %s123, %s124
    %p136 = scmp.eq.s32.totalorder %s30, 1
    %p137 = por %p135, %p136
    %p139 = scmp.ne.s32.totalorder %s124, %s138
    %p140 = scmp.eq.s32.totalorder %s30, 0
    %p141 = por %p139, %p140
    %s143 = sadd.s32 %s142, 1
    %p146 = scmp.eq.s32.totalorder %s24, 1
    %p147 = scmp.ne.s32.totalorder %s142, %s144
    %p148 = scmp.eq.s32.totalorder %s24, 0
    %p149 = por %p147, %p148
    %p150 = scmp.ne.s32.totalorder %s142, %s144
    %p151 = scmp.eq.s32.totalorder %s29, 1
    %p152 = por %p150, %p151
    %p153 = scmp.ne.s32.totalorder %s144, %s145
    %p154 = scmp.eq.s32.totalorder %s29, 0
    %p155 = por %p153, %p154
    %p156 = scmp.ne.s32.totalorder %s144, %s145
    %p157 = scmp.eq.s32.totalorder %s30, 1
    %p158 = por %p156, %p157
    %p160 = scmp.ne.s32.totalorder %s145, %s159
    %p161 = scmp.eq.s32.totalorder %s30, 0
    %p162 = por %p160, %p161
    %s164 = sadd.s32 %s163, 1
    %p167 = scmp.eq.s32.totalorder %s24, 1
    %p168 = scmp.ne.s32.totalorder %s163, %s165
    %p169 = scmp.eq.s32.totalorder %s24, 0
    %p170 = por %p168, %p169
    %p171 = scmp.ne.s32.totalorder %s163, %s165
    %p172 = scmp.eq.s32.totalorder %s29, 1
    %p173 = por %p171, %p172
    %p174 = scmp.ne.s32.totalorder %s165, %s166
    %p175 = scmp.eq.s32.totalorder %s29, 0
    %p176 = por %p174, %p175
    %p177 = scmp.ne.s32.totalorder %s165, %s166
    %p178 = scmp.eq.s32.totalorder %s30, 1
    %p179 = por %p177, %p178
    %p181 = scmp.ne.s32.totalorder %s166, %s180
    %p182 = scmp.eq.s32.totalorder %s30, 0
    %p183 = por %p181, %p182
    %s185 = sadd.s32 %s184, 1
    %p188 = scmp.eq.s32.totalorder %s24, 1
    %p189 = scmp.ne.s32.totalorder %s184, %s186
    %p190 = scmp.eq.s32.totalorder %s24, 0
    %p191 = por %p189, %p190
    %p192 = scmp.ne.s32.totalorder %s184, %s186
    %p193 = scmp.eq.s32.totalorder %s29, 1
    %p194 = por %p192, %p193
    %p195 = scmp.ne.s32.totalorder %s186, %s187
    %p196 = scmp.eq.s32.totalorder %s29, 0
    %p197 = por %p195, %p196
    %p198 = scmp.ne.s32.totalorder %s186, %s187
    %p199 = scmp.eq.s32.totalorder %s30, 1
    %p200 = por %p198, %p199
    %p202 = scmp.ne.s32.totalorder %s187, %s201
    %p203 = scmp.eq.s32.totalorder %s30, 0
    %p204 = por %p202, %p203
    %s206 = sadd.s32 %s205, 1
    %p209 = scmp.eq.s32.totalorder %s24, 1
    %p210 = scmp.ne.s32.totalorder %s205, %s207
    %p211 = scmp.eq.s32.totalorder %s24, 0
    %p212 = por %p210, %p211
    %p213 = scmp.ne.s32.totalorder %s205, %s207
    %p214 = scmp.eq.s32.totalorder %s29, 1
    %p215 = por %p213, %p214
    %p216 = scmp.ne.s32.totalorder %s207, %s208
    %p217 = scmp.eq.s32.totalorder %s29, 0
    %p218 = por %p216, %p217
    %p219 = scmp.ne.s32.totalorder %s207, %s208
    %p220 = scmp.eq.s32.totalorder %s30, 1
    %p221 = por %p219, %p220
    %p223 = scmp.ne.s32.totalorder %s208, %s222
    %p224 = scmp.eq.s32.totalorder %s30, 0
    %p225 = por %p223, %p224
    %s227 = sadd.s32 %s226, 1
    %p230 = scmp.eq.s32.totalorder %s24, 1
    %p231 = scmp.ne.s32.totalorder %s226, %s228
    %p232 = scmp.eq.s32.totalorder %s24, 0
    %p233 = por %p231, %p232
    %p234 = scmp.ne.s32.totalorder %s226, %s228
    %p235 = scmp.eq.s32.totalorder %s29, 1
    %p236 = por %p234, %p235
    %p237 = scmp.ne.s32.totalorder %s228, %s229
    %p238 = scmp.eq.s32.totalorder %s29, 0
    %p239 = por %p237, %p238
    %p240 = scmp.ne.s32.totalorder %s228, %s229
    %p241 = scmp.eq.s32.totalorder %s30, 1
    %p242 = por %p240, %p241
    %p244 = scmp.ne.s32.totalorder %s229, %s243
    %p245 = scmp.eq.s32.totalorder %s30, 0
    %p246 = por %p244, %p245
    %s248 = sadd.s32 %s247, 1
    %p251 = scmp.eq.s32.totalorder %s24, 1
    %p252 = scmp.ne.s32.totalorder %s247, %s249
    %p253 = scmp.eq.s32.totalorder %s24, 0
    %p254 = por %p252, %p253
    %p255 = scmp.ne.s32.totalorder %s247, %s249
    %p256 = scmp.eq.s32.totalorder %s29, 1
    %p257 = por %p255, %p256
    %p258 = scmp.ne.s32.totalorder %s249, %s250
    %p259 = scmp.eq.s32.totalorder %s29, 0
    %p260 = por %p258, %p259
    %p261 = scmp.ne.s32.totalorder %s249, %s250
    %p262 = scmp.eq.s32.totalorder %s30, 1
    %p263 = por %p261, %p262
    %p265 = scmp.ne.s32.totalorder %s250, %s264
    %p266 = scmp.eq.s32.totalorder %s30, 0
    %p267 = por %p265, %p266
    %s269 = sadd.s32 %s268, 1
    %p272 = scmp.eq.s32.totalorder %s24, 1
    %p273 = scmp.ne.s32.totalorder %s268, %s270
    %p274 = scmp.eq.s32.totalorder %s24, 0
    %p275 = por %p273, %p274
    %p276 = scmp.ne.s32.totalorder %s268, %s270
    %p277 = scmp.eq.s32.totalorder %s29, 1
    %p278 = por %p276, %p277
    %p279 = scmp.ne.s32.totalorder %s270, %s271
    %p280 = scmp.eq.s32.totalorder %s29, 0
    %p281 = por %p279, %p280
    %p282 = scmp.ne.s32.totalorder %s270, %s271
    %p283 = scmp.eq.s32.totalorder %s30, 1
    %p284 = por %p282, %p283
    %p286 = scmp.ne.s32.totalorder %s271, %s285
    %p287 = scmp.eq.s32.totalorder %s30, 0
    %p288 = por %p286, %p287
    %s290 = sadd.s32 %s289, 1
    %p293 = scmp.eq.s32.totalorder %s24, 1
    %p294 = scmp.ne.s32.totalorder %s289, %s291
    %p295 = scmp.eq.s32.totalorder %s24, 0
    %p296 = por %p294, %p295
    %p297 = scmp.ne.s32.totalorder %s289, %s291
    %p298 = scmp.eq.s32.totalorder %s29, 1
    %p299 = por %p297, %p298
    %p300 = scmp.ne.s32.totalorder %s291, %s292
    %p301 = scmp.eq.s32.totalorder %s29, 0
    %p302 = por %p300, %p301
    %p303 = scmp.ne.s32.totalorder %s291, %s292
    %p304 = scmp.eq.s32.totalorder %s30, 1
    %p305 = por %p303, %p304
    %p307 = scmp.ne.s32.totalorder %s292, %s306
    %p308 = scmp.eq.s32.totalorder %s30, 0
    %p309 = por %p307, %p308
    %s311 = sadd.s32 %s310, 1
    %p314 = scmp.eq.s32.totalorder %s24, 1
    %p315 = scmp.ne.s32.totalorder %s310, %s312
    %p316 = scmp.eq.s32.totalorder %s24, 0
    %p317 = por %p315, %p316
    %p318 = scmp.ne.s32.totalorder %s310, %s312
    %p319 = scmp.eq.s32.totalorder %s29, 1
    %p320 = por %p318, %p319
    %p321 = scmp.ne.s32.totalorder %s312, %s313
    %p322 = scmp.eq.s32.totalorder %s29, 0
    %p323 = por %p321, %p322
    %p324 = scmp.ne.s32.totalorder %s312, %s313
    %p325 = scmp.eq.s32.totalorder %s30, 1
    %p326 = por %p324, %p325
    %p328 = scmp.ne.s32.totalorder %s313, %s327
    %p329 = scmp.eq.s32.totalorder %s30, 0
    %p330 = por %p328, %p329
    %s332 = sadd.s32 %s331, 1
    %p335 = scmp.eq.s32.totalorder %s24, 1
    %p336 = scmp.ne.s32.totalorder %s331, %s333
    %p337 = scmp.eq.s32.totalorder %s24, 0
    %p338 = por %p336, %p337
    %p339 = scmp.ne.s32.totalorder %s331, %s333
    %p340 = scmp.eq.s32.totalorder %s29, 1
    %p341 = por %p339, %p340
    %p342 = scmp.ne.s32.totalorder %s333, %s334
    %p343 = scmp.eq.s32.totalorder %s29, 0
    %p344 = por %p342, %p343
    %p345 = scmp.ne.s32.totalorder %s333, %s334
    %p346 = scmp.eq.s32.totalorder %s30, 1
    %p347 = por %p345, %p346
    %p349 = scmp.ne.s32.totalorder %s334, %s348
    %p350 = scmp.eq.s32.totalorder %s30, 0
    %p351 = por %p349, %p350
    %s353 = sadd.s32 %s352, 1
    %p356 = scmp.eq.s32.totalorder %s24, 1
    %p357 = scmp.ne.s32.totalorder %s352, %s354
    %p358 = scmp.eq.s32.totalorder %s24, 0
    %p359 = por %p357, %p358
    %p360 = scmp.ne.s32.totalorder %s352, %s354
    %p361 = scmp.eq.s32.totalorder %s29, 1
    %p362 = por %p360, %p361
    %p363 = scmp.ne.s32.totalorder %s354, %s355
    %p364 = scmp.eq.s32.totalorder %s29, 0
    %p365 = por %p363, %p364
    %p366 = scmp.ne.s32.totalorder %s354, %s355
    %p367 = scmp.eq.s32.totalorder %s30, 1
    %p368 = por %p366, %p367
    %p370 = scmp.ne.s32.totalorder %s355, %s369
    %p371 = scmp.eq.s32.totalorder %s30, 0
    %p372 = por %p370, %p371
    %s373 = ssub.s32 %s24, %s31
    %p374 = scmp.eq.s32.totalorder %s373, 0
    %s376 = sadd.s32 %s375, 1
    %s377 = scalar_select %p374, %s375, %s376
    %p380 = pneg %p374
    %p381 = scmp.eq.s32.totalorder %s24, 1
    %p382 = por %p380, %p381
    %p383 = scmp.ne.s32.totalorder %s375, %s378
    %p384 = scmp.eq.s32.totalorder %s24, 0
    %p385 = por %p383, %p384
    %p386 = scmp.ne.s32.totalorder %s375, %s378
    %p387 = scmp.eq.s32.totalorder %s29, 1
    %p388 = por %p386, %p387
    %p389 = scmp.ne.s32.totalorder %s378, %s379
    %p390 = scmp.eq.s32.totalorder %s29, 0
    %p391 = por %p389, %p390
    %p392 = scmp.ne.s32.totalorder %s378, %s379
    %p393 = scmp.eq.s32.totalorder %s30, 1
    %p394 = por %p392, %p393
    %p396 = scmp.ne.s32.totalorder %s379, %s395
    %p397 = scmp.eq.s32.totalorder %s30, 0
    %p398 = por %p396, %p397
    %p399 = scmp.le.s32.totalorder 1, %s24
    %p400 = scmp.lt.s32.totalorder %s24, 3
    %p401 = pnand %p399, %p400
    %p402 = pneg %p401
    // Predicated region
    $region9: #{net_forward.1} parent=5 // pred_check
      _
    $region10: #{net_forward.1} parent=5 // pred_check_branch
      %404 = sbr.rel (%p401) target = $region12
    $region11: #{net_forward.1} parent=5 // pred_region
      %s405 = ssub.s32 %s24, 1
      // Predicated region
      $region13: #{net_forward.1} parent=11 // pred_check
        %p406 = pneg %p71
      $region14: #{net_forward.1} parent=11 // pred_check_branch
        %408 = sbr.rel (%p406) target = $region16
      $region15: #{net_forward.1} parent=11 // pred_region
        _
      $region16: #{net_forward.1} parent=11 // pred_fallthru
        _
      // Predicated region
      $region17: #{net_forward.1} parent=11 // pred_check
        %p409 = pneg %p92
      $region18: #{net_forward.1} parent=11 // pred_check_branch
        %411 = sbr.rel (%p409) target = $region20
      $region19: #{net_forward.1} parent=11 // pred_region
        _
      $region20: #{net_forward.1} parent=11 // pred_fallthru
        _
      // Predicated region
      $region21: #{net_forward.1} parent=11 // pred_check
        %p412 = pneg %p113
      $region22: #{net_forward.1} parent=11 // pred_check_branch
        %414 = sbr.rel (%p412) target = $region24
      $region23: #{net_forward.1} parent=11 // pred_region
        _
      $region24: #{net_forward.1} parent=11 // pred_fallthru
        _
      // Predicated region
      $region25: #{net_forward.1} parent=11 // pred_check
        %p415 = pneg %p134
      $region26: #{net_forward.1} parent=11 // pred_check_branch
        %417 = sbr.rel (%p415) target = $region28
      $region27: #{net_forward.1} parent=11 // pred_region
        _
      $region28: #{net_forward.1} parent=11 // pred_fallthru
        _
      // Predicated region
      $region29: #{net_forward.1} parent=11 // pred_check
        %p418 = pneg %p155
      $region30: #{net_forward.1} parent=11 // pred_check_branch
        %420 = sbr.rel (%p418) target = $region32
      $region31: #{net_forward.1} parent=11 // pred_region
        _
      $region32: #{net_forward.1} parent=11 // pred_fallthru
        _
      // Predicated region
      $region33: #{net_forward.1} parent=11 // pred_check
        %p421 = pneg %p176
      $region34: #{net_forward.1} parent=11 // pred_check_branch
        %423 = sbr.rel (%p421) target = $region36
      $region35: #{net_forward.1} parent=11 // pred_region
        _
      $region36: #{net_forward.1} parent=11 // pred_fallthru
        _
      // Predicated region
      $region37: #{net_forward.1} parent=11 // pred_check
        %p424 = pneg %p197
      $region38: #{net_forward.1} parent=11 // pred_check_branch
        %426 = sbr.rel (%p424) target = $region40
      $region39: #{net_forward.1} parent=11 // pred_region
        _
      $region40: #{net_forward.1} parent=11 // pred_fallthru
        _
      // Predicated region
      $region41: #{net_forward.1} parent=11 // pred_check
        %p427 = pneg %p218
      $region42: #{net_forward.1} parent=11 // pred_check_branch
        %429 = sbr.rel (%p427) target = $region44
      $region43: #{net_forward.1} parent=11 // pred_region
        _
      $region44: #{net_forward.1} parent=11 // pred_fallthru
        _
      // Predicated region
      $region45: #{net_forward.1} parent=11 // pred_check
        %p430 = pneg %p239
      $region46: #{net_forward.1} parent=11 // pred_check_branch
        %432 = sbr.rel (%p430) target = $region48
      $region47: #{net_forward.1} parent=11 // pred_region
        _
      $region48: #{net_forward.1} parent=11 // pred_fallthru
        _
      // Predicated region
      $region49: #{net_forward.1} parent=11 // pred_check
        %p433 = pneg %p260
      $region50: #{net_forward.1} parent=11 // pred_check_branch
        %435 = sbr.rel (%p433) target = $region52
      $region51: #{net_forward.1} parent=11 // pred_region
        _
      $region52: #{net_forward.1} parent=11 // pred_fallthru
        _
      // Predicated region
      $region53: #{net_forward.1} parent=11 // pred_check
        %p436 = pneg %p281
      $region54: #{net_forward.1} parent=11 // pred_check_branch
        %438 = sbr.rel (%p436) target = $region56
      $region55: #{net_forward.1} parent=11 // pred_region
        _
      $region56: #{net_forward.1} parent=11 // pred_fallthru
        _
      // Predicated region
      $region57: #{net_forward.1} parent=11 // pred_check
        %p439 = pneg %p302
      $region58: #{net_forward.1} parent=11 // pred_check_branch
        %441 = sbr.rel (%p439) target = $region60
      $region59: #{net_forward.1} parent=11 // pred_region
        _
      $region60: #{net_forward.1} parent=11 // pred_fallthru
        _
      // Predicated region
      $region61: #{net_forward.1} parent=11 // pred_check
        %p442 = pneg %p323
      $region62: #{net_forward.1} parent=11 // pred_check_branch
        %444 = sbr.rel (%p442) target = $region64
      $region63: #{net_forward.1} parent=11 // pred_region
        _
      $region64: #{net_forward.1} parent=11 // pred_fallthru
        _
      // Predicated region
      $region65: #{net_forward.1} parent=11 // pred_check
        %p445 = pneg %p344
      $region66: #{net_forward.1} parent=11 // pred_check_branch
        %447 = sbr.rel (%p445) target = $region68
      $region67: #{net_forward.1} parent=11 // pred_region
        _
      $region68: #{net_forward.1} parent=11 // pred_fallthru
        _
      // Predicated region
      $region69: #{net_forward.1} parent=11 // pred_check
        %p448 = pneg %p365
      $region70: #{net_forward.1} parent=11 // pred_check_branch
        %450 = sbr.rel (%p448) target = $region72
      $region71: #{net_forward.1} parent=11 // pred_region
        _
      $region72: #{net_forward.1} parent=11 // pred_fallthru
        _
    $region12: #{net_forward.1} parent=5 // pred_fallthru
      _
    %p451 = scmp.lt.s32.totalorder %s24, 2
    // Predicated region
    $region73: #{net_forward.1} parent=5 // pred_check
      %p452 = pneg %p451
    $region74: #{net_forward.1} parent=5 // pred_check_branch
      %454 = sbr.rel (%p452) target = $region76
    $region75: #{net_forward.1} parent=5 // pred_region
      // Predicated region
      $region77: #{net_forward.1} parent=75 // pred_check
        %p455 = pneg %p44
      $region78: #{net_forward.1} parent=75 // pred_check_branch
        %457 = sbr.rel (%p455) target = $region80
      $region79: #{net_forward.1} parent=75 // pred_region
        %s458 = smul.u32 4, %s24
        %p459 = scmp.lt.s32.totalorder %s458, 7
        %s460 = scalar_select %p459, %s458, 7
        %s461 = smul.addr %s460, 8
        %s462 = smul.addr %s461, 8
        %s463 = scalar_lea.vmem %s0, %s462
        %s464 = smul.u32 4, %s24
      $region80: #{net_forward.1} parent=75 // pred_fallthru
        _
    $region76: #{net_forward.1} parent=5 // pred_fallthru
      _
    %p465 = scmp.le.s32.totalorder 1, %s24
    %p466 = scmp.lt.s32.totalorder %s24, 3
    %p467 = pnand %p465, %p466
    %p468 = pneg %p467
    // Predicated region
    $region81: #{net_forward.1} parent=5 // pred_check
      _
    $region82: #{net_forward.1} parent=5 // pred_check_branch
      %470 = sbr.rel (%p467) target = $region84
    $region83: #{net_forward.1} parent=5 // pred_region
      %s471 = ssub.s32 %s24, 1
      %s472 = smul.u32 4, %s29
      %p473 = scmp.lt.s32.totalorder %s472, 7
      %s474 = scalar_select %p473, %s472, 7
      %s475 = smul.addr %s474, 8
      %s476 = smul.addr %s475, 8
      %s477 = scalar_lea.vmem %s0, %s476
      %p478 = pneg %p50
      %p479 = pneg %p47
      %p480 = pneg %p71
      %p481 = pneg %p68
      %p482 = pneg %p92
      %p483 = pneg %p89
      %p484 = pneg %p113
      %p485 = pneg %p110
      %p486 = pneg %p134
      %p487 = pneg %p131
      %p488 = pneg %p155
      %p489 = pneg %p152
      %p490 = pneg %p176
      %p491 = pneg %p173
      %p492 = pneg %p197
      %p493 = pneg %p194
      %p494 = pneg %p218
      %p495 = pneg %p215
      %p496 = pneg %p239
      %p497 = pneg %p236
      %p498 = pneg %p260
      %p499 = pneg %p257
      %p500 = pneg %p281
      %p501 = pneg %p278
      %p502 = pneg %p302
      %p503 = pneg %p299
      %p504 = pneg %p323
      %p505 = pneg %p320
      %p506 = pneg %p344
      %p507 = pneg %p341
      %p508 = pneg %p365
      %p509 = pneg %p362
      %p510 = pneg %p391
      %p511 = pneg %p388
      %p512 = scmp.lt.s32.totalorder %s29, 1
      %s513 = scalar_select %p512, %s29, 1
      %s514 = scalar_lea.vmem %s16, %s513
      %s515 = smul.u32 4, %s29
      %p516 = scmp.lt.s32.totalorder %s515, 7
      %s517 = scalar_select %p516, %s515, 7
      %s518 = smul.addr %s517, 8
      %s519 = smul.addr %s518, 8
      %s520 = scalar_lea.vmem %s0, %s519
      %s521 = smul.u32 4, %s29
      %p522 = scmp.lt.s32.totalorder %s29, 1
      %s523 = scalar_select %p522, %s29, 1
      %s524 = scalar_lea.vmem %s16, %s523
      %v526 = vld [vmem:[%s520] sm:$0xff]
      %v527 = vld [vmem:[%s520 + $0x8] sm:$0xff]
      %v528 = vld [vmem:[%s520 + $0x10] sm:$0xff]
      %v529 = vld [vmem:[%s520 + $0x18] sm:$0xff]
      %v530 = vld [vmem:[%s520 + $0x20] sm:$0xff]
      %v531 = vld [vmem:[%s520 + $0x28] sm:$0xff]
      %v532 = vld [vmem:[%s520 + $0x30] sm:$0xff]
      %v533 = vld [vmem:[%s520 + $0x38] sm:$0xff]
      %v534 = vld [vmem:[%s520 + $0x40] sm:$0xff]
      %v535 = vld [vmem:[%s520 + $0x48] sm:$0xff]
      %v536 = vld [vmem:[%s520 + $0x50] sm:$0xff]
      %v537 = vld [vmem:[%s520 + $0x58] sm:$0xff]
      %v538 = vld [vmem:[%s520 + $0x60] sm:$0xff]
      %v539 = vld [vmem:[%s520 + $0x68] sm:$0xff]
      %v540 = vld [vmem:[%s520 + $0x70] sm:$0xff]
      %v541 = vld [vmem:[%s520 + $0x78] sm:$0xff]
      %v542 = vld [vmem:[%s520 + $0x80] sm:$0xff]
      %v543 = vld [vmem:[%s520 + $0x88] sm:$0xff]
      %v544 = vld [vmem:[%s520 + $0x90] sm:$0xff]
      %v545 = vld [vmem:[%s520 + $0x98] sm:$0xff]
      %v546 = vld [vmem:[%s520 + $0xa0] sm:$0xff]
      %v547 = vld [vmem:[%s520 + $0xa8] sm:$0xff]
      %v548 = vld [vmem:[%s520 + $0xb0] sm:$0xff]
      %v549 = vld [vmem:[%s520 + $0xb8] sm:$0xff]
      %v550 = vld [vmem:[%s520 + $0xc0] sm:$0xff]
      %v551 = vld [vmem:[%s520 + $0xc8] sm:$0xff]
      %v552 = vld [vmem:[%s520 + $0xd0] sm:$0xff]
      %v553 = vld [vmem:[%s520 + $0xd8] sm:$0xff]
      %v554 = vld [vmem:[%s520 + $0xe0] sm:$0xff]
      %v555 = vld [vmem:[%s520 + $0xe8] sm:$0xff]
      %v556 = vld [vmem:[%s520 + $0xf0] sm:$0xff]
      %v557 = vld [vmem:[%s520 + $0xf8] sm:$0xff]
      %v558 = vld [vmem:[%s1] sm:$0xf]
      %v559 = vld [vmem:[%s2] sm:$0xff]
      %v560 = vld [vmem:[%s3] sm:$0xff]
      %v561 = vld [vmem:[%s3 + $0x8] sm:$0xff]
      %v562 = vld [vmem:[%s3 + $0x10] sm:$0xff]
      %v563 = vld [vmem:[%s3 + $0x18] sm:$0xff]
      %v564 = vld [vmem:[%s3 + $0x20] sm:$0xff]
      %v565 = vld [vmem:[%s3 + $0x28] sm:$0xff]
      %v566 = vld [vmem:[%s3 + $0x30] sm:$0xff]
      %v567 = vld [vmem:[%s3 + $0x38] sm:$0xff]
      %v568 = vld [vmem:[%s3 + $0x40] sm:$0xff]
      %v569 = vld [vmem:[%s3 + $0x48] sm:$0xff]
      %v570 = vld [vmem:[%s3 + $0x50] sm:$0xff]
      %v571 = vld [vmem:[%s3 + $0x58] sm:$0xff]
      %v572 = vld [vmem:[%s3 + $0x60] sm:$0xff]
      %v573 = vld [vmem:[%s3 + $0x68] sm:$0xff]
      %v574 = vld [vmem:[%s3 + $0x70] sm:$0xff]
      %v575 = vld [vmem:[%s3 + $0x78] sm:$0xff]
      %v576 = vld [vmem:[%s3 + $0x80] sm:$0xff]
      %v577 = vld [vmem:[%s3 + $0x88] sm:$0xff]
      %v578 = vld [vmem:[%s3 + $0x90] sm:$0xff]
      %v579 = vld [vmem:[%s3 + $0x98] sm:$0xff]
      %v580 = vld [vmem:[%s3 + $0xa0] sm:$0xff]
      %v581 = vld [vmem:[%s3 + $0xa8] sm:$0xff]
      %v582 = vld [vmem:[%s3 + $0xb0] sm:$0xff]
      %v583 = vld [vmem:[%s3 + $0xb8] sm:$0xff]
      %v584 = vld [vmem:[%s3 + $0xc0] sm:$0xff]
      %v585 = vld [vmem:[%s3 + $0xc8] sm:$0xff]
      %v586 = vld [vmem:[%s3 + $0xd0] sm:$0xff]
      %v587 = vld [vmem:[%s3 + $0xd8] sm:$0xff]
      %v588 = vld [vmem:[%s3 + $0xe0] sm:$0xff]
      %v589 = vld [vmem:[%s3 + $0xe8] sm:$0xff]
      %v590 = vld [vmem:[%s3 + $0xf0] sm:$0xff]
      %v591 = vld [vmem:[%s3 + $0xf8] sm:$0xff]
      %v592 = vld [vmem:[%s3 + $0x100] sm:$0xff]
      %v593 = vld [vmem:[%s3 + $0x108] sm:$0xff]
      %v594 = vld [vmem:[%s3 + $0x110] sm:$0xff]
      %v595 = vld [vmem:[%s3 + $0x118] sm:$0xff]
      %v596 = vld [vmem:[%s3 + $0x120] sm:$0xff]
      %v597 = vld [vmem:[%s3 + $0x128] sm:$0xff]
      %v598 = vld [vmem:[%s3 + $0x130] sm:$0xff]
      %v599 = vld [vmem:[%s3 + $0x138] sm:$0xff]
      %v600 = vld [vmem:[%s3 + $0x140] sm:$0xff]
      %v601 = vld [vmem:[%s3 + $0x148] sm:$0xff]
      %v602 = vld [vmem:[%s3 + $0x150] sm:$0xff]
      %v603 = vld [vmem:[%s3 + $0x158] sm:$0xff]
      %v604 = vld [vmem:[%s3 + $0x160] sm:$0xff]
      %v605 = vld [vmem:[%s3 + $0x168] sm:$0xff]
      %v606 = vld [vmem:[%s3 + $0x170] sm:$0xff]
      %v607 = vld [vmem:[%s3 + $0x178] sm:$0xff]
      %v608 = vld [vmem:[%s3 + $0x180] sm:$0xff]
      %v609 = vld [vmem:[%s3 + $0x188] sm:$0xff]
      %v610 = vld [vmem:[%s3 + $0x190] sm:$0xff]
      %v611 = vld [vmem:[%s3 + $0x198] sm:$0xff]
      %v612 = vld [vmem:[%s3 + $0x1a0] sm:$0xff]
      %v613 = vld [vmem:[%s3 + $0x1a8] sm:$0xff]
      %v614 = vld [vmem:[%s3 + $0x1b0] sm:$0xff]
      %v615 = vld [vmem:[%s3 + $0x1b8] sm:$0xff]
      %v616 = vld [vmem:[%s3 + $0x1c0] sm:$0xff]
      %v617 = vld [vmem:[%s3 + $0x1c8] sm:$0xff]
      %v618 = vld [vmem:[%s3 + $0x1d0] sm:$0xff]
      %v619 = vld [vmem:[%s3 + $0x1d8] sm:$0xff]
      %v620 = vld [vmem:[%s3 + $0x1e0] sm:$0xff]
      %v621 = vld [vmem:[%s3 + $0x1e8] sm:$0xff]
      %v622 = vld [vmem:[%s3 + $0x1f0] sm:$0xff]
      %v623 = vld [vmem:[%s3 + $0x1f8] sm:$0xff]
      %v624 = vld [vmem:[%s3 + $0x200] sm:$0xff]
      %v625 = vld [vmem:[%s3 + $0x208] sm:$0xff]
      %v626 = vld [vmem:[%s3 + $0x210] sm:$0xff]
      %v627 = vld [vmem:[%s3 + $0x218] sm:$0xff]
      %v628 = vld [vmem:[%s3 + $0x220] sm:$0xff]
      %v629 = vld [vmem:[%s3 + $0x228] sm:$0xff]
      %v630 = vld [vmem:[%s3 + $0x230] sm:$0xff]
      %v631 = vld [vmem:[%s3 + $0x238] sm:$0xff]
      %v632 = vld [vmem:[%s3 + $0x240] sm:$0xff]
      %v633 = vld [vmem:[%s3 + $0x248] sm:$0xff]
      %v634 = vld [vmem:[%s3 + $0x250] sm:$0xff]
      %v635 = vld [vmem:[%s3 + $0x258] sm:$0xff]
      %v636 = vld [vmem:[%s3 + $0x260] sm:$0xff]
      %v637 = vld [vmem:[%s3 + $0x268] sm:$0xff]
      %v638 = vld [vmem:[%s3 + $0x270] sm:$0xff]
      %v639 = vld [vmem:[%s3 + $0x278] sm:$0xff]
      %v640 = vld [vmem:[%s3 + $0x280] sm:$0xff]
      %v641 = vld [vmem:[%s3 + $0x288] sm:$0xff]
      %v642 = vld [vmem:[%s3 + $0x290] sm:$0xff]
      %v643 = vld [vmem:[%s3 + $0x298] sm:$0xff]
      %v644 = vld [vmem:[%s3 + $0x2a0] sm:$0xff]
      %v645 = vld [vmem:[%s3 + $0x2a8] sm:$0xff]
      %v646 = vld [vmem:[%s3 + $0x2b0] sm:$0xff]
      %v647 = vld [vmem:[%s3 + $0x2b8] sm:$0xff]
      %v648 = vld [vmem:[%s3 + $0x2c0] sm:$0xff]
      %v649 = vld [vmem:[%s3 + $0x2c8] sm:$0xff]
      %v650 = vld [vmem:[%s3 + $0x2d0] sm:$0xff]
      %v651 = vld [vmem:[%s3 + $0x2d8] sm:$0xff]
      %v652 = vld [vmem:[%s3 + $0x2e0] sm:$0xff]
      %v653 = vld [vmem:[%s3 + $0x2e8] sm:$0xff]
      %v654 = vld [vmem:[%s3 + $0x2f0] sm:$0xff]
      %v655 = vld [vmem:[%s3 + $0x2f8] sm:$0xff]
      %v656 = vld [vmem:[%s3 + $0x300] sm:$0xff]
      %v657 = vld [vmem:[%s3 + $0x308] sm:$0xff]
      %v658 = vld [vmem:[%s3 + $0x310] sm:$0xff]
      %v659 = vld [vmem:[%s3 + $0x318] sm:$0xff]
      %v660 = vld [vmem:[%s3 + $0x320] sm:$0xff]
      %v661 = vld [vmem:[%s3 + $0x328] sm:$0xff]
      %v662 = vld [vmem:[%s3 + $0x330] sm:$0xff]
      %v663 = vld [vmem:[%s3 + $0x338] sm:$0xff]
      %v664 = vld [vmem:[%s3 + $0x340] sm:$0xff]
      %v665 = vld [vmem:[%s3 + $0x348] sm:$0xff]
      %v666 = vld [vmem:[%s3 + $0x350] sm:$0xff]
      %v667 = vld [vmem:[%s3 + $0x358] sm:$0xff]
      %v668 = vld [vmem:[%s3 + $0x360] sm:$0xff]
      %v669 = vld [vmem:[%s3 + $0x368] sm:$0xff]
      %v670 = vld [vmem:[%s3 + $0x370] sm:$0xff]
      %v671 = vld [vmem:[%s3 + $0x378] sm:$0xff]
      %v672 = vld [vmem:[%s3 + $0x380] sm:$0xff]
      %v673 = vld [vmem:[%s3 + $0x388] sm:$0xff]
      %v674 = vld [vmem:[%s3 + $0x390] sm:$0xff]
      %v675 = vld [vmem:[%s3 + $0x398] sm:$0x77]
      %708 = vrot.lane.b32.xlu0 %v526, 127
      %v709 = vpop.permute.xlu0 %708
      %710 = vrot.lane.b32.xlu0 %v527, 127
      %v711 = vpop.permute.xlu0 %710
      %712 = vrot.lane.b32.xlu0 %v528, 127
      %v713 = vpop.permute.xlu0 %712
      %714 = vrot.lane.b32.xlu0 %v529, 127
      %v715 = vpop.permute.xlu0 %714
      %716 = vrot.lane.b32.xlu0 %v530, 127
      %v717 = vpop.permute.xlu0 %716
      %718 = vrot.lane.b32.xlu0 %v531, 127
      %v719 = vpop.permute.xlu0 %718
      %720 = vrot.lane.b32.xlu0 %v532, 127
      %v721 = vpop.permute.xlu0 %720
      %722 = vrot.lane.b32.xlu0 %v533, 127
      %v723 = vpop.permute.xlu0 %722
      %724 = vrot.lane.b32.xlu0 %v534, 127
      %v725 = vpop.permute.xlu0 %724
      %726 = vrot.lane.b32.xlu0 %v535, 127
      %v727 = vpop.permute.xlu0 %726
      %728 = vrot.lane.b32.xlu0 %v536, 127
      %v729 = vpop.permute.xlu0 %728
      %730 = vrot.lane.b32.xlu0 %v537, 127
      %v731 = vpop.permute.xlu0 %730
      %732 = vrot.lane.b32.xlu0 %v538, 127
      %v733 = vpop.permute.xlu0 %732
      %734 = vrot.lane.b32.xlu0 %v539, 127
      %v735 = vpop.permute.xlu0 %734
      %736 = vrot.lane.b32.xlu0 %v540, 127
      %v737 = vpop.permute.xlu0 %736
      %738 = vrot.lane.b32.xlu0 %v541, 127
      %v739 = vpop.permute.xlu0 %738
      %740 = vrot.lane.b32.xlu0 %v542, 127
      %v741 = vpop.permute.xlu0 %740
      %742 = vrot.lane.b32.xlu0 %v543, 127
      %v743 = vpop.permute.xlu0 %742
      %744 = vrot.lane.b32.xlu0 %v544, 127
      %v745 = vpop.permute.xlu0 %744
      %746 = vrot.lane.b32.xlu0 %v545, 127
      %v747 = vpop.permute.xlu0 %746
      %748 = vrot.lane.b32.xlu0 %v546, 127
      %v749 = vpop.permute.xlu0 %748
      %750 = vrot.lane.b32.xlu0 %v547, 127
      %v751 = vpop.permute.xlu0 %750
      %752 = vrot.lane.b32.xlu0 %v548, 127
      %v753 = vpop.permute.xlu0 %752
      %754 = vrot.lane.b32.xlu0 %v549, 127
      %v755 = vpop.permute.xlu0 %754
      %756 = vrot.lane.b32.xlu0 %v550, 127
      %v757 = vpop.permute.xlu0 %756
      %758 = vrot.lane.b32.xlu0 %v551, 127
      %v759 = vpop.permute.xlu0 %758
      %760 = vrot.lane.b32.xlu0 %v552, 127
      %v761 = vpop.permute.xlu0 %760
      %762 = vrot.lane.b32.xlu0 %v553, 127
      %v763 = vpop.permute.xlu0 %762
      %764 = vrot.lane.b32.xlu0 %v554, 127
      %v765 = vpop.permute.xlu0 %764
      %766 = vrot.lane.b32.xlu0 %v555, 127
      %v767 = vpop.permute.xlu0 %766
      %768 = vrot.lane.b32.xlu0 %v556, 127
      %v769 = vpop.permute.xlu0 %768
      %770 = vrot.lane.b32.xlu0 %v557, 127
      %v771 = vpop.permute.xlu0 %770
      %vm772 = vcmask 1039360
      %v773 = vsel %vm772, %v709, %v711
      %v774 = vsel %vm772, %v711, %v713
      %v775 = vsel %vm772, %v713, %v715
      %v776 = vsel %vm772, %v715, %v717
      %v777 = vsel %vm772, %v717, %v719
      %v778 = vsel %vm772, %v719, %v721
      %v779 = vsel %vm772, %v721, %v723
      %v780 = vsel %vm772, %v725, %v727
      %v781 = vsel %vm772, %v727, %v729
      %v782 = vsel %vm772, %v729, %v731
      %v783 = vsel %vm772, %v731, %v733
      %v784 = vsel %vm772, %v733, %v735
      %v785 = vsel %vm772, %v735, %v737
      %v786 = vsel %vm772, %v737, %v739
      %v787 = vsel %vm772, %v741, %v743
      %v788 = vsel %vm772, %v743, %v745
      %v789 = vsel %vm772, %v745, %v747
      %v790 = vsel %vm772, %v747, %v749
      %v791 = vsel %vm772, %v749, %v751
      %v792 = vsel %vm772, %v751, %v753
      %v793 = vsel %vm772, %v753, %v755
      %v794 = vsel %vm772, %v757, %v759
      %v795 = vsel %vm772, %v759, %v761
      %v796 = vsel %vm772, %v761, %v763
      %v797 = vsel %vm772, %v763, %v765
      %v798 = vsel %vm772, %v765, %v767
      %v799 = vsel %vm772, %v767, %v769
      %v800 = vsel %vm772, %v769, %v771
      %833 = vrot.lane.b32.xlu0 %v526, 126
      %v834 = vpop.permute.xlu0 %833
      %835 = vrot.lane.b32.xlu0 %v527, 126
      %v836 = vpop.permute.xlu0 %835
      %837 = vrot.lane.b32.xlu0 %v528, 126
      %v838 = vpop.permute.xlu0 %837
      %839 = vrot.lane.b32.xlu0 %v529, 126
      %v840 = vpop.permute.xlu0 %839
      %841 = vrot.lane.b32.xlu0 %v530, 126
      %v842 = vpop.permute.xlu0 %841
      %843 = vrot.lane.b32.xlu0 %v531, 126
      %v844 = vpop.permute.xlu0 %843
      %845 = vrot.lane.b32.xlu0 %v532, 126
      %v846 = vpop.permute.xlu0 %845
      %847 = vrot.lane.b32.xlu0 %v533, 126
      %v848 = vpop.permute.xlu0 %847
      %849 = vrot.lane.b32.xlu0 %v534, 126
      %v850 = vpop.permute.xlu0 %849
      %851 = vrot.lane.b32.xlu0 %v535, 126
      %v852 = vpop.permute.xlu0 %851
      %853 = vrot.lane.b32.xlu0 %v536, 126
      %v854 = vpop.permute.xlu0 %853
      %855 = vrot.lane.b32.xlu0 %v537, 126
      %v856 = vpop.permute.xlu0 %855
      %857 = vrot.lane.b32.xlu0 %v538, 126
      %v858 = vpop.permute.xlu0 %857
      %859 = vrot.lane.b32.xlu0 %v539, 126
      %v860 = vpop.permute.xlu0 %859
      %861 = vrot.lane.b32.xlu0 %v540, 126
      %v862 = vpop.permute.xlu0 %861
      %863 = vrot.lane.b32.xlu0 %v541, 126
      %v864 = vpop.permute.xlu0 %863
      %865 = vrot.lane.b32.xlu0 %v542, 126
      %v866 = vpop.permute.xlu0 %865
      %867 = vrot.lane.b32.xlu0 %v543, 126
      %v868 = vpop.permute.xlu0 %867
      %869 = vrot.lane.b32.xlu0 %v544, 126
      %v870 = vpop.permute.xlu0 %869
      %871 = vrot.lane.b32.xlu0 %v545, 126
      %v872 = vpop.permute.xlu0 %871
      %873 = vrot.lane.b32.xlu0 %v546, 126
      %v874 = vpop.permute.xlu0 %873
      %875 = vrot.lane.b32.xlu0 %v547, 126
      %v876 = vpop.permute.xlu0 %875
      %877 = vrot.lane.b32.xlu0 %v548, 126
      %v878 = vpop.permute.xlu0 %877
      %879 = vrot.lane.b32.xlu0 %v549, 126
      %v880 = vpop.permute.xlu0 %879
      %881 = vrot.lane.b32.xlu0 %v550, 126
      %v882 = vpop.permute.xlu0 %881
      %883 = vrot.lane.b32.xlu0 %v551, 126
      %v884 = vpop.permute.xlu0 %883
      %885 = vrot.lane.b32.xlu0 %v552, 126
      %v886 = vpop.permute.xlu0 %885
      %887 = vrot.lane.b32.xlu0 %v553, 126
      %v888 = vpop.permute.xlu0 %887
      %889 = vrot.lane.b32.xlu0 %v554, 126
      %v890 = vpop.permute.xlu0 %889
      %891 = vrot.lane.b32.xlu0 %v555, 126
      %v892 = vpop.permute.xlu0 %891
      %893 = vrot.lane.b32.xlu0 %v556, 126
      %v894 = vpop.permute.xlu0 %893
      %895 = vrot.lane.b32.xlu0 %v557, 126
      %v896 = vpop.permute.xlu0 %895
      %vm897 = vcmask 1031168
      %v898 = vsel %vm897, %v834, %v836
      %v899 = vsel %vm897, %v836, %v838
      %v900 = vsel %vm897, %v838, %v840
      %v901 = vsel %vm897, %v840, %v842
      %v902 = vsel %vm897, %v842, %v844
      %v903 = vsel %vm897, %v844, %v846
      %v904 = vsel %vm897, %v846, %v848
      %v905 = vsel %vm897, %v850, %v852
      %v906 = vsel %vm897, %v852, %v854
      %v907 = vsel %vm897, %v854, %v856
      %v908 = vsel %vm897, %v856, %v858
      %v909 = vsel %vm897, %v858, %v860
      %v910 = vsel %vm897, %v860, %v862
      %v911 = vsel %vm897, %v862, %v864
      %v912 = vsel %vm897, %v866, %v868
      %v913 = vsel %vm897, %v868, %v870
      %v914 = vsel %vm897, %v870, %v872
      %v915 = vsel %vm897, %v872, %v874
      %v916 = vsel %vm897, %v874, %v876
      %v917 = vsel %vm897, %v876, %v878
      %v918 = vsel %vm897, %v878, %v880
      %v919 = vsel %vm897, %v882, %v884
      %v920 = vsel %vm897, %v884, %v886
      %v921 = vsel %vm897, %v886, %v888
      %v922 = vsel %vm897, %v888, %v890
      %v923 = vsel %vm897, %v890, %v892
      %v924 = vsel %vm897, %v892, %v894
      %v925 = vsel %vm897, %v894, %v896
      %958 = vrot.lane.b32.xlu0 %v526, 96
      %v959 = vpop.permute.xlu0 %958
      %960 = vrot.lane.b32.xlu0 %v527, 96
      %v961 = vpop.permute.xlu0 %960
      %962 = vrot.lane.b32.xlu0 %v528, 96
      %v963 = vpop.permute.xlu0 %962
      %964 = vrot.lane.b32.xlu0 %v529, 96
      %v965 = vpop.permute.xlu0 %964
      %966 = vrot.lane.b32.xlu0 %v530, 96
      %v967 = vpop.permute.xlu0 %966
      %968 = vrot.lane.b32.xlu0 %v531, 96
      %v969 = vpop.permute.xlu0 %968
      %970 = vrot.lane.b32.xlu0 %v532, 96
      %v971 = vpop.permute.xlu0 %970
      %972 = vrot.lane.b32.xlu0 %v533, 96
      %v973 = vpop.permute.xlu0 %972
      %974 = vrot.lane.b32.xlu0 %v534, 96
      %v975 = vpop.permute.xlu0 %974
      %976 = vrot.lane.b32.xlu0 %v535, 96
      %v977 = vpop.permute.xlu0 %976
      %978 = vrot.lane.b32.xlu0 %v536, 96
      %v979 = vpop.permute.xlu0 %978
      %980 = vrot.lane.b32.xlu0 %v537, 96
      %v981 = vpop.permute.xlu0 %980
      %982 = vrot.lane.b32.xlu0 %v538, 96
      %v983 = vpop.permute.xlu0 %982
      %984 = vrot.lane.b32.xlu0 %v539, 96
      %v985 = vpop.permute.xlu0 %984
      %986 = vrot.lane.b32.xlu0 %v540, 96
      %v987 = vpop.permute.xlu0 %986
      %988 = vrot.lane.b32.xlu0 %v541, 96
      %v989 = vpop.permute.xlu0 %988
      %990 = vrot.lane.b32.xlu0 %v542, 96
      %v991 = vpop.permute.xlu0 %990
      %992 = vrot.lane.b32.xlu0 %v543, 96
      %v993 = vpop.permute.xlu0 %992
      %994 = vrot.lane.b32.xlu0 %v544, 96
      %v995 = vpop.permute.xlu0 %994
      %996 = vrot.lane.b32.xlu0 %v545, 96
      %v997 = vpop.permute.xlu0 %996
      %998 = vrot.lane.b32.xlu0 %v546, 96
      %v999 = vpop.permute.xlu0 %998
      %1000 = vrot.lane.b32.xlu0 %v547, 96
      %v1001 = vpop.permute.xlu0 %1000
      %1002 = vrot.lane.b32.xlu0 %v548, 96
      %v1003 = vpop.permute.xlu0 %1002
      %1004 = vrot.lane.b32.xlu0 %v549, 96
      %v1005 = vpop.permute.xlu0 %1004
      %1006 = vrot.lane.b32.xlu0 %v550, 96
      %v1007 = vpop.permute.xlu0 %1006
      %1008 = vrot.lane.b32.xlu0 %v551, 96
      %v1009 = vpop.permute.xlu0 %1008
      %1010 = vrot.lane.b32.xlu0 %v552, 96
      %v1011 = vpop.permute.xlu0 %1010
      %1012 = vrot.lane.b32.xlu0 %v553, 96
      %v1013 = vpop.permute.xlu0 %1012
      %1014 = vrot.lane.b32.xlu0 %v554, 96
      %v1015 = vpop.permute.xlu0 %1014
      %1016 = vrot.lane.b32.xlu0 %v555, 96
      %v1017 = vpop.permute.xlu0 %1016
      %1018 = vrot.lane.b32.xlu0 %v556, 96
      %v1019 = vpop.permute.xlu0 %1018
      %1020 = vrot.lane.b32.xlu0 %v557, 96
      %v1021 = vpop.permute.xlu0 %1020
      %vm1022 = vcmask 785408
      %v1023 = vsel %vm1022, %v959, %v961
      %v1024 = vsel %vm1022, %v961, %v963
      %v1025 = vsel %vm1022, %v963, %v965
      %v1026 = vsel %vm1022, %v965, %v967
      %v1027 = vsel %vm1022, %v967, %v969
      %v1028 = vsel %vm1022, %v969, %v971
      %v1029 = vsel %vm1022, %v971, %v973
      %v1030 = vsel %vm1022, %v975, %v977
      %v1031 = vsel %vm1022, %v977, %v979
      %v1032 = vsel %vm1022, %v979, %v981
      %v1033 = vsel %vm1022, %v981, %v983
      %v1034 = vsel %vm1022, %v983, %v985
      %v1035 = vsel %vm1022, %v985, %v987
      %v1036 = vsel %vm1022, %v987, %v989
      %v1037 = vsel %vm1022, %v991, %v993
      %v1038 = vsel %vm1022, %v993, %v995
      %v1039 = vsel %vm1022, %v995, %v997
      %v1040 = vsel %vm1022, %v997, %v999
      %v1041 = vsel %vm1022, %v999, %v1001
      %v1042 = vsel %vm1022, %v1001, %v1003
      %v1043 = vsel %vm1022, %v1003, %v1005
      %v1044 = vsel %vm1022, %v1007, %v1009
      %v1045 = vsel %vm1022, %v1009, %v1011
      %v1046 = vsel %vm1022, %v1011, %v1013
      %v1047 = vsel %vm1022, %v1013, %v1015
      %v1048 = vsel %vm1022, %v1015, %v1017
      %v1049 = vsel %vm1022, %v1017, %v1019
      %v1050 = vsel %vm1022, %v1019, %v1021
      %1083 = vrot.lane.b32.xlu0 %v526, 95
      %v1084 = vpop.permute.xlu0 %1083
      %1085 = vrot.lane.b32.xlu0 %v527, 95
      %v1086 = vpop.permute.xlu0 %1085
      %1087 = vrot.lane.b32.xlu0 %v528, 95
      %v1088 = vpop.permute.xlu0 %1087
      %1089 = vrot.lane.b32.xlu0 %v529, 95
      %v1090 = vpop.permute.xlu0 %1089
      %1091 = vrot.lane.b32.xlu0 %v530, 95
      %v1092 = vpop.permute.xlu0 %1091
      %1093 = vrot.lane.b32.xlu0 %v531, 95
      %v1094 = vpop.permute.xlu0 %1093
      %1095 = vrot.lane.b32.xlu0 %v532, 95
      %v1096 = vpop.permute.xlu0 %1095
      %1097 = vrot.lane.b32.xlu0 %v533, 95
      %v1098 = vpop.permute.xlu0 %1097
      %1099 = vrot.lane.b32.xlu0 %v534, 95
      %v1100 = vpop.permute.xlu0 %1099
      %1101 = vrot.lane.b32.xlu0 %v535, 95
      %v1102 = vpop.permute.xlu0 %1101
      %1103 = vrot.lane.b32.xlu0 %v536, 95
      %v1104 = vpop.permute.xlu0 %1103
      %1105 = vrot.lane.b32.xlu0 %v537, 95
      %v1106 = vpop.permute.xlu0 %1105
      %1107 = vrot.lane.b32.xlu0 %v538, 95
      %v1108 = vpop.permute.xlu0 %1107
      %1109 = vrot.lane.b32.xlu0 %v539, 95
      %v1110 = vpop.permute.xlu0 %1109
      %1111 = vrot.lane.b32.xlu0 %v540, 95
      %v1112 = vpop.permute.xlu0 %1111
      %1113 = vrot.lane.b32.xlu0 %v541, 95
      %v1114 = vpop.permute.xlu0 %1113
      %1115 = vrot.lane.b32.xlu0 %v542, 95
      %v1116 = vpop.permute.xlu0 %1115
      %1117 = vrot.lane.b32.xlu0 %v543, 95
      %v1118 = vpop.permute.xlu0 %1117
      %1119 = vrot.lane.b32.xlu0 %v544, 95
      %v1120 = vpop.permute.xlu0 %1119
      %1121 = vrot.lane.b32.xlu0 %v545, 95
      %v1122 = vpop.permute.xlu0 %1121
      %1123 = vrot.lane.b32.xlu0 %v546, 95
      %v1124 = vpop.permute.xlu0 %1123
      %1125 = vrot.lane.b32.xlu0 %v547, 95
      %v1126 = vpop.permute.xlu0 %1125
      %1127 = vrot.lane.b32.xlu0 %v548, 95
      %v1128 = vpop.permute.xlu0 %1127
      %1129 = vrot.lane.b32.xlu0 %v549, 95
      %v1130 = vpop.permute.xlu0 %1129
      %1131 = vrot.lane.b32.xlu0 %v550, 95
      %v1132 = vpop.permute.xlu0 %1131
      %1133 = vrot.lane.b32.xlu0 %v551, 95
      %v1134 = vpop.permute.xlu0 %1133
      %1135 = vrot.lane.b32.xlu0 %v552, 95
      %v1136 = vpop.permute.xlu0 %1135
      %1137 = vrot.lane.b32.xlu0 %v553, 95
      %v1138 = vpop.permute.xlu0 %1137
      %1139 = vrot.lane.b32.xlu0 %v554, 95
      %v1140 = vpop.permute.xlu0 %1139
      %1141 = vrot.lane.b32.xlu0 %v555, 95
      %v1142 = vpop.permute.xlu0 %1141
      %1143 = vrot.lane.b32.xlu0 %v556, 95
      %v1144 = vpop.permute.xlu0 %1143
      %1145 = vrot.lane.b32.xlu0 %v557, 95
      %v1146 = vpop.permute.xlu0 %1145
      %vm1147 = vcmask 777216
      %v1148 = vsel %vm1147, %v1084, %v1086
      %v1149 = vsel %vm1147, %v1086, %v1088
      %v1150 = vsel %vm1147, %v1088, %v1090
      %v1151 = vsel %vm1147, %v1090, %v1092
      %v1152 = vsel %vm1147, %v1092, %v1094
      %v1153 = vsel %vm1147, %v1094, %v1096
      %v1154 = vsel %vm1147, %v1096, %v1098
      %v1155 = vsel %vm1147, %v1100, %v1102
      %v1156 = vsel %vm1147, %v1102, %v1104
      %v1157 = vsel %vm1147, %v1104, %v1106
      %v1158 = vsel %vm1147, %v1106, %v1108
      %v1159 = vsel %vm1147, %v1108, %v1110
      %v1160 = vsel %vm1147, %v1110, %v1112
      %v1161 = vsel %vm1147, %v1112, %v1114
      %v1162 = vsel %vm1147, %v1116, %v1118
      %v1163 = vsel %vm1147, %v1118, %v1120
      %v1164 = vsel %vm1147, %v1120, %v1122
      %v1165 = vsel %vm1147, %v1122, %v1124
      %v1166 = vsel %vm1147, %v1124, %v1126
      %v1167 = vsel %vm1147, %v1126, %v1128
      %v1168 = vsel %vm1147, %v1128, %v1130
      %v1169 = vsel %vm1147, %v1132, %v1134
      %v1170 = vsel %vm1147, %v1134, %v1136
      %v1171 = vsel %vm1147, %v1136, %v1138
      %v1172 = vsel %vm1147, %v1138, %v1140
      %v1173 = vsel %vm1147, %v1140, %v1142
      %v1174 = vsel %vm1147, %v1142, %v1144
      %v1175 = vsel %vm1147, %v1144, %v1146
      %1208 = vrot.lane.b32.xlu0 %v526, 94
      %v1209 = vpop.permute.xlu0 %1208
      %1210 = vrot.lane.b32.xlu0 %v527, 94
      %v1211 = vpop.permute.xlu0 %1210
      %1212 = vrot.lane.b32.xlu0 %v528, 94
      %v1213 = vpop.permute.xlu0 %1212
      %1214 = vrot.lane.b32.xlu0 %v529, 94
      %v1215 = vpop.permute.xlu0 %1214
      %1216 = vrot.lane.b32.xlu0 %v530, 94
      %v1217 = vpop.permute.xlu0 %1216
      %1218 = vrot.lane.b32.xlu0 %v531, 94
      %v1219 = vpop.permute.xlu0 %1218
      %1220 = vrot.lane.b32.xlu0 %v532, 94
      %v1221 = vpop.permute.xlu0 %1220
      %1222 = vrot.lane.b32.xlu0 %v533, 94
      %v1223 = vpop.permute.xlu0 %1222
      %1224 = vrot.lane.b32.xlu0 %v534, 94
      %v1225 = vpop.permute.xlu0 %1224
      %1226 = vrot.lane.b32.xlu0 %v535, 94
      %v1227 = vpop.permute.xlu0 %1226
      %1228 = vrot.lane.b32.xlu0 %v536, 94
      %v1229 = vpop.permute.xlu0 %1228
      %1230 = vrot.lane.b32.xlu0 %v537, 94
      %v1231 = vpop.permute.xlu0 %1230
      %1232 = vrot.lane.b32.xlu0 %v538, 94
      %v1233 = vpop.permute.xlu0 %1232
      %1234 = vrot.lane.b32.xlu0 %v539, 94
      %v1235 = vpop.permute.xlu0 %1234
      %1236 = vrot.lane.b32.xlu0 %v540, 94
      %v1237 = vpop.permute.xlu0 %1236
      %1238 = vrot.lane.b32.xlu0 %v541, 94
      %v1239 = vpop.permute.xlu0 %1238
      %1240 = vrot.lane.b32.xlu0 %v542, 94
      %v1241 = vpop.permute.xlu0 %1240
      %1242 = vrot.lane.b32.xlu0 %v543, 94
      %v1243 = vpop.permute.xlu0 %1242
      %1244 = vrot.lane.b32.xlu0 %v544, 94
      %v1245 = vpop.permute.xlu0 %1244
      %1246 = vrot.lane.b32.xlu0 %v545, 94
      %v1247 = vpop.permute.xlu0 %1246
      %1248 = vrot.lane.b32.xlu0 %v546, 94
      %v1249 = vpop.permute.xlu0 %1248
      %1250 = vrot.lane.b32.xlu0 %v547, 94
      %v1251 = vpop.permute.xlu0 %1250
      %1252 = vrot.lane.b32.xlu0 %v548, 94
      %v1253 = vpop.permute.xlu0 %1252
      %1254 = vrot.lane.b32.xlu0 %v549, 94
      %v1255 = vpop.permute.xlu0 %1254
      %1256 = vrot.lane.b32.xlu0 %v550, 94
      %v1257 = vpop.permute.xlu0 %1256
      %1258 = vrot.lane.b32.xlu0 %v551, 94
      %v1259 = vpop.permute.xlu0 %1258
      %1260 = vrot.lane.b32.xlu0 %v552, 94
      %v1261 = vpop.permute.xlu0 %1260
      %1262 = vrot.lane.b32.xlu0 %v553, 94
      %v1263 = vpop.permute.xlu0 %1262
      %1264 = vrot.lane.b32.xlu0 %v554, 94
      %v1265 = vpop.permute.xlu0 %1264
      %1266 = vrot.lane.b32.xlu0 %v555, 94
      %v1267 = vpop.permute.xlu0 %1266
      %1268 = vrot.lane.b32.xlu0 %v556, 94
      %v1269 = vpop.permute.xlu0 %1268
      %1270 = vrot.lane.b32.xlu0 %v557, 94
      %v1271 = vpop.permute.xlu0 %1270
      %vm1272 = vcmask 769024
      %v1273 = vsel %vm1272, %v1209, %v1211
      %v1274 = vsel %vm1272, %v1211, %v1213
      %v1275 = vsel %vm1272, %v1213, %v1215
      %v1276 = vsel %vm1272, %v1215, %v1217
      %v1277 = vsel %vm1272, %v1217, %v1219
      %v1278 = vsel %vm1272, %v1219, %v1221
      %v1279 = vsel %vm1272, %v1221, %v1223
      %v1280 = vsel %vm1272, %v1225, %v1227
      %v1281 = vsel %vm1272, %v1227, %v1229
      %v1282 = vsel %vm1272, %v1229, %v1231
      %v1283 = vsel %vm1272, %v1231, %v1233
      %v1284 = vsel %vm1272, %v1233, %v1235
      %v1285 = vsel %vm1272, %v1235, %v1237
      %v1286 = vsel %vm1272, %v1237, %v1239
      %v1287 = vsel %vm1272, %v1241, %v1243
      %v1288 = vsel %vm1272, %v1243, %v1245
      %v1289 = vsel %vm1272, %v1245, %v1247
      %v1290 = vsel %vm1272, %v1247, %v1249
      %v1291 = vsel %vm1272, %v1249, %v1251
      %v1292 = vsel %vm1272, %v1251, %v1253
      %v1293 = vsel %vm1272, %v1253, %v1255
      %v1294 = vsel %vm1272, %v1257, %v1259
      %v1295 = vsel %vm1272, %v1259, %v1261
      %v1296 = vsel %vm1272, %v1261, %v1263
      %v1297 = vsel %vm1272, %v1263, %v1265
      %v1298 = vsel %vm1272, %v1265, %v1267
      %v1299 = vsel %vm1272, %v1267, %v1269
      %v1300 = vsel %vm1272, %v1269, %v1271
      %1333 = vrot.lane.b32.xlu0 %v526, 64
      %v1334 = vpop.permute.xlu0 %1333
      %1335 = vrot.lane.b32.xlu0 %v527, 64
      %v1336 = vpop.permute.xlu0 %1335
      %1337 = vrot.lane.b32.xlu0 %v528, 64
      %v1338 = vpop.permute.xlu0 %1337
      %1339 = vrot.lane.b32.xlu0 %v529, 64
      %v1340 = vpop.permute.xlu0 %1339
      %1341 = vrot.lane.b32.xlu0 %v530, 64
      %v1342 = vpop.permute.xlu0 %1341
      %1343 = vrot.lane.b32.xlu0 %v531, 64
      %v1344 = vpop.permute.xlu0 %1343
      %1345 = vrot.lane.b32.xlu0 %v532, 64
      %v1346 = vpop.permute.xlu0 %1345
      %1347 = vrot.lane.b32.xlu0 %v533, 64
      %v1348 = vpop.permute.xlu0 %1347
      %1349 = vrot.lane.b32.xlu0 %v534, 64
      %v1350 = vpop.permute.xlu0 %1349
      %1351 = vrot.lane.b32.xlu0 %v535, 64
      %v1352 = vpop.permute.xlu0 %1351
      %1353 = vrot.lane.b32.xlu0 %v536, 64
      %v1354 = vpop.permute.xlu0 %1353
      %1355 = vrot.lane.b32.xlu0 %v537, 64
      %v1356 = vpop.permute.xlu0 %1355
      %1357 = vrot.lane.b32.xlu0 %v538, 64
      %v1358 = vpop.permute.xlu0 %1357
      %1359 = vrot.lane.b32.xlu0 %v539, 64
      %v1360 = vpop.permute.xlu0 %1359
      %1361 = vrot.lane.b32.xlu0 %v540, 64
      %v1362 = vpop.permute.xlu0 %1361
      %1363 = vrot.lane.b32.xlu0 %v541, 64
      %v1364 = vpop.permute.xlu0 %1363
      %1365 = vrot.lane.b32.xlu0 %v542, 64
      %v1366 = vpop.permute.xlu0 %1365
      %1367 = vrot.lane.b32.xlu0 %v543, 64
      %v1368 = vpop.permute.xlu0 %1367
      %1369 = vrot.lane.b32.xlu0 %v544, 64
      %v1370 = vpop.permute.xlu0 %1369
      %1371 = vrot.lane.b32.xlu0 %v545, 64
      %v1372 = vpop.permute.xlu0 %1371
      %1373 = vrot.lane.b32.xlu0 %v546, 64
      %v1374 = vpop.permute.xlu0 %1373
      %1375 = vrot.lane.b32.xlu0 %v547, 64
      %v1376 = vpop.permute.xlu0 %1375
      %1377 = vrot.lane.b32.xlu0 %v548, 64
      %v1378 = vpop.permute.xlu0 %1377
      %1379 = vrot.lane.b32.xlu0 %v549, 64
      %v1380 = vpop.permute.xlu0 %1379
      %1381 = vrot.lane.b32.xlu0 %v550, 64
      %v1382 = vpop.permute.xlu0 %1381
      %1383 = vrot.lane.b32.xlu0 %v551, 64
      %v1384 = vpop.permute.xlu0 %1383
      %1385 = vrot.lane.b32.xlu0 %v552, 64
      %v1386 = vpop.permute.xlu0 %1385
      %1387 = vrot.lane.b32.xlu0 %v553, 64
      %v1388 = vpop.permute.xlu0 %1387
      %1389 = vrot.lane.b32.xlu0 %v554, 64
      %v1390 = vpop.permute.xlu0 %1389
      %1391 = vrot.lane.b32.xlu0 %v555, 64
      %v1392 = vpop.permute.xlu0 %1391
      %1393 = vrot.lane.b32.xlu0 %v556, 64
      %v1394 = vpop.permute.xlu0 %1393
      %1395 = vrot.lane.b32.xlu0 %v557, 64
      %v1396 = vpop.permute.xlu0 %1395
      %vm1397 = vcmask 523264
      %v1398 = vsel %vm1397, %v1334, %v1336
      %v1399 = vsel %vm1397, %v1336, %v1338
      %v1400 = vsel %vm1397, %v1338, %v1340
      %v1401 = vsel %vm1397, %v1340, %v1342
      %v1402 = vsel %vm1397, %v1342, %v1344
      %v1403 = vsel %vm1397, %v1344, %v1346
      %v1404 = vsel %vm1397, %v1346, %v1348
      %v1405 = vsel %vm1397, %v1350, %v1352
      %v1406 = vsel %vm1397, %v1352, %v1354
      %v1407 = vsel %vm1397, %v1354, %v1356
      %v1408 = vsel %vm1397, %v1356, %v1358
      %v1409 = vsel %vm1397, %v1358, %v1360
      %v1410 = vsel %vm1397, %v1360, %v1362
      %v1411 = vsel %vm1397, %v1362, %v1364
      %v1412 = vsel %vm1397, %v1366, %v1368
      %v1413 = vsel %vm1397, %v1368, %v1370
      %v1414 = vsel %vm1397, %v1370, %v1372
      %v1415 = vsel %vm1397, %v1372, %v1374
      %v1416 = vsel %vm1397, %v1374, %v1376
      %v1417 = vsel %vm1397, %v1376, %v1378
      %v1418 = vsel %vm1397, %v1378, %v1380
      %v1419 = vsel %vm1397, %v1382, %v1384
      %v1420 = vsel %vm1397, %v1384, %v1386
      %v1421 = vsel %vm1397, %v1386, %v1388
      %v1422 = vsel %vm1397, %v1388, %v1390
      %v1423 = vsel %vm1397, %v1390, %v1392
      %v1424 = vsel %vm1397, %v1392, %v1394
      %v1425 = vsel %vm1397, %v1394, %v1396
      %1458 = vrot.lane.b32.xlu0 %v526, 63
      %v1459 = vpop.permute.xlu0 %1458
      %1460 = vrot.lane.b32.xlu0 %v527, 63
      %v1461 = vpop.permute.xlu0 %1460
      %1462 = vrot.lane.b32.xlu0 %v528, 63
      %v1463 = vpop.permute.xlu0 %1462
      %1464 = vrot.lane.b32.xlu0 %v529, 63
      %v1465 = vpop.permute.xlu0 %1464
      %1466 = vrot.lane.b32.xlu0 %v530, 63
      %v1467 = vpop.permute.xlu0 %1466
      %1468 = vrot.lane.b32.xlu0 %v531, 63
      %v1469 = vpop.permute.xlu0 %1468
      %1470 = vrot.lane.b32.xlu0 %v532, 63
      %v1471 = vpop.permute.xlu0 %1470
      %1472 = vrot.lane.b32.xlu0 %v533, 63
      %v1473 = vpop.permute.xlu0 %1472
      %1474 = vrot.lane.b32.xlu0 %v534, 63
      %v1475 = vpop.permute.xlu0 %1474
      %1476 = vrot.lane.b32.xlu0 %v535, 63
      %v1477 = vpop.permute.xlu0 %1476
      %1478 = vrot.lane.b32.xlu0 %v536, 63
      %v1479 = vpop.permute.xlu0 %1478
      %1480 = vrot.lane.b32.xlu0 %v537, 63
      %v1481 = vpop.permute.xlu0 %1480
      %1482 = vrot.lane.b32.xlu0 %v538, 63
      %v1483 = vpop.permute.xlu0 %1482
      %1484 = vrot.lane.b32.xlu0 %v539, 63
      %v1485 = vpop.permute.xlu0 %1484
      %1486 = vrot.lane.b32.xlu0 %v540, 63
      %v1487 = vpop.permute.xlu0 %1486
      %1488 = vrot.lane.b32.xlu0 %v541, 63
      %v1489 = vpop.permute.xlu0 %1488
      %1490 = vrot.lane.b32.xlu0 %v542, 63
      %v1491 = vpop.permute.xlu0 %1490
      %1492 = vrot.lane.b32.xlu0 %v543, 63
      %v1493 = vpop.permute.xlu0 %1492
      %1494 = vrot.lane.b32.xlu0 %v544, 63
      %v1495 = vpop.permute.xlu0 %1494
      %1496 = vrot.lane.b32.xlu0 %v545, 63
      %v1497 = vpop.permute.xlu0 %1496
      %1498 = vrot.lane.b32.xlu0 %v546, 63
      %v1499 = vpop.permute.xlu0 %1498
      %1500 = vrot.lane.b32.xlu0 %v547, 63
      %v1501 = vpop.permute.xlu0 %1500
      %1502 = vrot.lane.b32.xlu0 %v548, 63
      %v1503 = vpop.permute.xlu0 %1502
      %1504 = vrot.lane.b32.xlu0 %v549, 63
      %v1505 = vpop.permute.xlu0 %1504
      %1506 = vrot.lane.b32.xlu0 %v550, 63
      %v1507 = vpop.permute.xlu0 %1506
      %1508 = vrot.lane.b32.xlu0 %v551, 63
      %v1509 = vpop.permute.xlu0 %1508
      %1510 = vrot.lane.b32.xlu0 %v552, 63
      %v1511 = vpop.permute.xlu0 %1510
      %1512 = vrot.lane.b32.xlu0 %v553, 63
      %v1513 = vpop.permute.xlu0 %1512
      %1514 = vrot.lane.b32.xlu0 %v554, 63
      %v1515 = vpop.permute.xlu0 %1514
      %1516 = vrot.lane.b32.xlu0 %v555, 63
      %v1517 = vpop.permute.xlu0 %1516
      %1518 = vrot.lane.b32.xlu0 %v556, 63
      %v1519 = vpop.permute.xlu0 %1518
      %1520 = vrot.lane.b32.xlu0 %v557, 63
      %v1521 = vpop.permute.xlu0 %1520
      %vm1522 = vcmask 515072
      %v1523 = vsel %vm1522, %v1459, %v1461
      %v1524 = vsel %vm1522, %v1461, %v1463
      %v1525 = vsel %vm1522, %v1463, %v1465
      %v1526 = vsel %vm1522, %v1465, %v1467
      %v1527 = vsel %vm1522, %v1467, %v1469
      %v1528 = vsel %vm1522, %v1469, %v1471
      %v1529 = vsel %vm1522, %v1471, %v1473
      %v1530 = vsel %vm1522, %v1475, %v1477
      %v1531 = vsel %vm1522, %v1477, %v1479
      %v1532 = vsel %vm1522, %v1479, %v1481
      %v1533 = vsel %vm1522, %v1481, %v1483
      %v1534 = vsel %vm1522, %v1483, %v1485
      %v1535 = vsel %vm1522, %v1485, %v1487
      %v1536 = vsel %vm1522, %v1487, %v1489
      %v1537 = vsel %vm1522, %v1491, %v1493
      %v1538 = vsel %vm1522, %v1493, %v1495
      %v1539 = vsel %vm1522, %v1495, %v1497
      %v1540 = vsel %vm1522, %v1497, %v1499
      %v1541 = vsel %vm1522, %v1499, %v1501
      %v1542 = vsel %vm1522, %v1501, %v1503
      %v1543 = vsel %vm1522, %v1503, %v1505
      %v1544 = vsel %vm1522, %v1507, %v1509
      %v1545 = vsel %vm1522, %v1509, %v1511
      %v1546 = vsel %vm1522, %v1511, %v1513
      %v1547 = vsel %vm1522, %v1513, %v1515
      %v1548 = vsel %vm1522, %v1515, %v1517
      %v1549 = vsel %vm1522, %v1517, %v1519
      %v1550 = vsel %vm1522, %v1519, %v1521
      %1583 = vrot.lane.b32.xlu0 %v526, 62
      %v1584 = vpop.permute.xlu0 %1583
      %1585 = vrot.lane.b32.xlu0 %v527, 62
      %v1586 = vpop.permute.xlu0 %1585
      %1587 = vrot.lane.b32.xlu0 %v528, 62
      %v1588 = vpop.permute.xlu0 %1587
      %1589 = vrot.lane.b32.xlu0 %v529, 62
      %v1590 = vpop.permute.xlu0 %1589
      %1591 = vrot.lane.b32.xlu0 %v530, 62
      %v1592 = vpop.permute.xlu0 %1591
      %1593 = vrot.lane.b32.xlu0 %v531, 62
      %v1594 = vpop.permute.xlu0 %1593
      %1595 = vrot.lane.b32.xlu0 %v532, 62
      %v1596 = vpop.permute.xlu0 %1595
      %1597 = vrot.lane.b32.xlu0 %v533, 62
      %v1598 = vpop.permute.xlu0 %1597
      %1599 = vrot.lane.b32.xlu0 %v534, 62
      %v1600 = vpop.permute.xlu0 %1599
      %1601 = vrot.lane.b32.xlu0 %v535, 62
      %v1602 = vpop.permute.xlu0 %1601
      %1603 = vrot.lane.b32.xlu0 %v536, 62
      %v1604 = vpop.permute.xlu0 %1603
      %1605 = vrot.lane.b32.xlu0 %v537, 62
      %v1606 = vpop.permute.xlu0 %1605
      %1607 = vrot.lane.b32.xlu0 %v538, 62
      %v1608 = vpop.permute.xlu0 %1607
      %1609 = vrot.lane.b32.xlu0 %v539, 62
      %v1610 = vpop.permute.xlu0 %1609
      %1611 = vrot.lane.b32.xlu0 %v540, 62
      %v1612 = vpop.permute.xlu0 %1611
      %1613 = vrot.lane.b32.xlu0 %v541, 62
      %v1614 = vpop.permute.xlu0 %1613
      %1615 = vrot.lane.b32.xlu0 %v542, 62
      %v1616 = vpop.permute.xlu0 %1615
      %1617 = vrot.lane.b32.xlu0 %v543, 62
      %v1618 = vpop.permute.xlu0 %1617
      %1619 = vrot.lane.b32.xlu0 %v544, 62
      %v1620 = vpop.permute.xlu0 %1619
      %1621 = vrot.lane.b32.xlu0 %v545, 62
      %v1622 = vpop.permute.xlu0 %1621
      %1623 = vrot.lane.b32.xlu0 %v546, 62
      %v1624 = vpop.permute.xlu0 %1623
      %1625 = vrot.lane.b32.xlu0 %v547, 62
      %v1626 = vpop.permute.xlu0 %1625
      %1627 = vrot.lane.b32.xlu0 %v548, 62
      %v1628 = vpop.permute.xlu0 %1627
      %1629 = vrot.lane.b32.xlu0 %v549, 62
      %v1630 = vpop.permute.xlu0 %1629
      %1631 = vrot.lane.b32.xlu0 %v550, 62
      %v1632 = vpop.permute.xlu0 %1631
      %1633 = vrot.lane.b32.xlu0 %v551, 62
      %v1634 = vpop.permute.xlu0 %1633
      %1635 = vrot.lane.b32.xlu0 %v552, 62
      %v1636 = vpop.permute.xlu0 %1635
      %1637 = vrot.lane.b32.xlu0 %v553, 62
      %v1638 = vpop.permute.xlu0 %1637
      %1639 = vrot.lane.b32.xlu0 %v554, 62
      %v1640 = vpop.permute.xlu0 %1639
      %1641 = vrot.lane.b32.xlu0 %v555, 62
      %v1642 = vpop.permute.xlu0 %1641
      %1643 = vrot.lane.b32.xlu0 %v556, 62
      %v1644 = vpop.permute.xlu0 %1643
      %1645 = vrot.lane.b32.xlu0 %v557, 62
      %v1646 = vpop.permute.xlu0 %1645
      %vm1647 = vcmask 506880
      %v1648 = vsel %vm1647, %v1584, %v1586
      %v1649 = vsel %vm1647, %v1586, %v1588
      %v1650 = vsel %vm1647, %v1588, %v1590
      %v1651 = vsel %vm1647, %v1590, %v1592
      %v1652 = vsel %vm1647, %v1592, %v1594
      %v1653 = vsel %vm1647, %v1594, %v1596
      %v1654 = vsel %vm1647, %v1596, %v1598
      %v1655 = vsel %vm1647, %v1600, %v1602
      %v1656 = vsel %vm1647, %v1602, %v1604
      %v1657 = vsel %vm1647, %v1604, %v1606
      %v1658 = vsel %vm1647, %v1606, %v1608
      %v1659 = vsel %vm1647, %v1608, %v1610
      %v1660 = vsel %vm1647, %v1610, %v1612
      %v1661 = vsel %vm1647, %v1612, %v1614
      %v1662 = vsel %vm1647, %v1616, %v1618
      %v1663 = vsel %vm1647, %v1618, %v1620
      %v1664 = vsel %vm1647, %v1620, %v1622
      %v1665 = vsel %vm1647, %v1622, %v1624
      %v1666 = vsel %vm1647, %v1624, %v1626
      %v1667 = vsel %vm1647, %v1626, %v1628
      %v1668 = vsel %vm1647, %v1628, %v1630
      %v1669 = vsel %vm1647, %v1632, %v1634
      %v1670 = vsel %vm1647, %v1634, %v1636
      %v1671 = vsel %vm1647, %v1636, %v1638
      %v1672 = vsel %vm1647, %v1638, %v1640
      %v1673 = vsel %vm1647, %v1640, %v1642
      %v1674 = vsel %vm1647, %v1642, %v1644
      %v1675 = vsel %vm1647, %v1644, %v1646
      %v1708 = vpack.c.bf16 %v773, %v526
      %v1709 = vpack.c.bf16 %v774, %v527
      %v1710 = vpack.c.bf16 %v775, %v528
      %v1711 = vpack.c.bf16 %v776, %v529
      %v1712 = vpack.c.bf16 %v777, %v530
      %v1713 = vpack.c.bf16 %v778, %v531
      %v1714 = vpack.c.bf16 %v779, %v532
      %v1715 = vpack.c.bf16 %v723, %v533
      %v1716 = vpack.c.bf16 %v1023, %v898
      %v1717 = vpack.c.bf16 %v1024, %v899
      %v1718 = vpack.c.bf16 %v1025, %v900
      %v1719 = vpack.c.bf16 %v1026, %v901
      %v1720 = vpack.c.bf16 %v1027, %v902
      %v1721 = vpack.c.bf16 %v1028, %v903
      %v1722 = vpack.c.bf16 %v1029, %v904
      %v1723 = vpack.c.bf16 %v973, %v848
      %v1724 = vpack.c.bf16 %v1273, %v1148
      %v1725 = vpack.c.bf16 %v1274, %v1149
      %v1726 = vpack.c.bf16 %v1275, %v1150
      %v1727 = vpack.c.bf16 %v1276, %v1151
      %v1728 = vpack.c.bf16 %v1277, %v1152
      %v1729 = vpack.c.bf16 %v1278, %v1153
      %v1730 = vpack.c.bf16 %v1279, %v1154
      %v1731 = vpack.c.bf16 %v1223, %v1098
      %v1732 = vpack.c.bf16 %v1523, %v1398
      %v1733 = vpack.c.bf16 %v1524, %v1399
      %v1734 = vpack.c.bf16 %v1525, %v1400
      %v1735 = vpack.c.bf16 %v1526, %v1401
      %v1736 = vpack.c.bf16 %v1527, %v1402
      %v1737 = vpack.c.bf16 %v1528, %v1403
      %v1738 = vpack.c.bf16 %v1529, %v1404
      %v1739 = vpack.c.bf16 %v1473, %v1348
      %v1740 = vpack.c.bf16 %v1648, %v1648
      %v1741 = vpack.c.bf16 %v1649, %v1649
      %v1742 = vpack.c.bf16 %v1650, %v1650
      %v1743 = vpack.c.bf16 %v1651, %v1651
      %v1744 = vpack.c.bf16 %v1652, %v1652
      %v1745 = vpack.c.bf16 %v1653, %v1653
      %v1746 = vpack.c.bf16 %v1654, %v1654
      %v1747 = vpack.c.bf16 %v1598, %v1598
      %v1748 = vpack.c.bf16 %v780, %v534
      %v1749 = vpack.c.bf16 %v781, %v535
      %v1750 = vpack.c.bf16 %v782, %v536
      %v1751 = vpack.c.bf16 %v783, %v537
      %v1752 = vpack.c.bf16 %v784, %v538
      %v1753 = vpack.c.bf16 %v785, %v539
      %v1754 = vpack.c.bf16 %v786, %v540
      %v1755 = vpack.c.bf16 %v739, %v541
      %v1756 = vpack.c.bf16 %v1030, %v905
      %v1757 = vpack.c.bf16 %v1031, %v906
      %v1758 = vpack.c.bf16 %v1032, %v907
      %v1759 = vpack.c.bf16 %v1033, %v908
      %v1760 = vpack.c.bf16 %v1034, %v909
      %v1761 = vpack.c.bf16 %v1035, %v910
      %v1762 = vpack.c.bf16 %v1036, %v911
      %v1763 = vpack.c.bf16 %v989, %v864
      %v1764 = vpack.c.bf16 %v1280, %v1155
      %v1765 = vpack.c.bf16 %v1281, %v1156
      %v1766 = vpack.c.bf16 %v1282, %v1157
      %v1767 = vpack.c.bf16 %v1283, %v1158
      %v1768 = vpack.c.bf16 %v1284, %v1159
      %v1769 = vpack.c.bf16 %v1285, %v1160
      %v1770 = vpack.c.bf16 %v1286, %v1161
      %v1771 = vpack.c.bf16 %v1239, %v1114
      %v1772 = vpack.c.bf16 %v1530, %v1405
      %v1773 = vpack.c.bf16 %v1531, %v1406
      %v1774 = vpack.c.bf16 %v1532, %v1407
      %v1775 = vpack.c.bf16 %v1533, %v1408
      %v1776 = vpack.c.bf16 %v1534, %v1409
      %v1777 = vpack.c.bf16 %v1535, %v1410
      %v1778 = vpack.c.bf16 %v1536, %v1411
      %v1779 = vpack.c.bf16 %v1489, %v1364
      %v1780 = vpack.c.bf16 %v1655, %v1655
      %v1781 = vpack.c.bf16 %v1656, %v1656
      %v1782 = vpack.c.bf16 %v1657, %v1657
      %v1783 = vpack.c.bf16 %v1658, %v1658
      %v1784 = vpack.c.bf16 %v1659, %v1659
      %v1785 = vpack.c.bf16 %v1660, %v1660
      %v1786 = vpack.c.bf16 %v1661, %v1661
      %v1787 = vpack.c.bf16 %v1614, %v1614
      %v1788 = vpack.c.bf16 %v787, %v542
      %v1789 = vpack.c.bf16 %v788, %v543
      %v1790 = vpack.c.bf16 %v789, %v544
      %v1791 = vpack.c.bf16 %v790, %v545
      %v1792 = vpack.c.bf16 %v791, %v546
      %v1793 = vpack.c.bf16 %v792, %v547
      %v1794 = vpack.c.bf16 %v793, %v548
      %v1795 = vpack.c.bf16 %v755, %v549
      %v1796 = vpack.c.bf16 %v1037, %v912
      %v1797 = vpack.c.bf16 %v1038, %v913
      %v1798 = vpack.c.bf16 %v1039, %v914
      %v1799 = vpack.c.bf16 %v1040, %v915
      %v1800 = vpack.c.bf16 %v1041, %v916
      %v1801 = vpack.c.bf16 %v1042, %v917
      %v1802 = vpack.c.bf16 %v1043, %v918
      %v1803 = vpack.c.bf16 %v1005, %v880
      %v1804 = vpack.c.bf16 %v1287, %v1162
      %v1805 = vpack.c.bf16 %v1288, %v1163
      %v1806 = vpack.c.bf16 %v1289, %v1164
      %v1807 = vpack.c.bf16 %v1290, %v1165
      %v1808 = vpack.c.bf16 %v1291, %v1166
      %v1809 = vpack.c.bf16 %v1292, %v1167
      %v1810 = vpack.c.bf16 %v1293, %v1168
      %v1811 = vpack.c.bf16 %v1255, %v1130
      %v1812 = vpack.c.bf16 %v1537, %v1412
      %v1813 = vpack.c.bf16 %v1538, %v1413
      %v1814 = vpack.c.bf16 %v1539, %v1414
      %v1815 = vpack.c.bf16 %v1540, %v1415
      %v1816 = vpack.c.bf16 %v1541, %v1416
      %v1817 = vpack.c.bf16 %v1542, %v1417
      %v1818 = vpack.c.bf16 %v1543, %v1418
      %v1819 = vpack.c.bf16 %v1505, %v1380
      %v1820 = vpack.c.bf16 %v1662, %v1662
      %v1821 = vpack.c.bf16 %v1663, %v1663
      %v1822 = vpack.c.bf16 %v1664, %v1664
      %v1823 = vpack.c.bf16 %v1665, %v1665
      %v1824 = vpack.c.bf16 %v1666, %v1666
      %v1825 = vpack.c.bf16 %v1667, %v1667
      %v1826 = vpack.c.bf16 %v1668, %v1668
      %v1827 = vpack.c.bf16 %v1630, %v1630
      %v1828 = vpack.c.bf16 %v794, %v550
      %v1829 = vpack.c.bf16 %v795, %v551
      %v1830 = vpack.c.bf16 %v796, %v552
      %v1831 = vpack.c.bf16 %v797, %v553
      %v1832 = vpack.c.bf16 %v798, %v554
      %v1833 = vpack.c.bf16 %v799, %v555
      %v1834 = vpack.c.bf16 %v800, %v556
      %v1835 = vpack.c.bf16 %v771, %v557
      %v1836 = vpack.c.bf16 %v1044, %v919
      %v1837 = vpack.c.bf16 %v1045, %v920
      %v1838 = vpack.c.bf16 %v1046, %v921
      %v1839 = vpack.c.bf16 %v1047, %v922
      %v1840 = vpack.c.bf16 %v1048, %v923
      %v1841 = vpack.c.bf16 %v1049, %v924
      %v1842 = vpack.c.bf16 %v1050, %v925
      %v1843 = vpack.c.bf16 %v1021, %v896
      %v1844 = vpack.c.bf16 %v1294, %v1169
      %v1845 = vpack.c.bf16 %v1295, %v1170
      %v1846 = vpack.c.bf16 %v1296, %v1171
      %v1847 = vpack.c.bf16 %v1297, %v1172
      %v1848 = vpack.c.bf16 %v1298, %v1173
      %v1849 = vpack.c.bf16 %v1299, %v1174
      %v1850 = vpack.c.bf16 %v1300, %v1175
      %v1851 = vpack.c.bf16 %v1271, %v1146
      %v1852 = vpack.c.bf16 %v1544, %v1419
      %v1853 = vpack.c.bf16 %v1545, %v1420
      %v1854 = vpack.c.bf16 %v1546, %v1421
      %v1855 = vpack.c.bf16 %v1547, %v1422
      %v1856 = vpack.c.bf16 %v1548, %v1423
      %v1857 = vpack.c.bf16 %v1549, %v1424
      %v1858 = vpack.c.bf16 %v1550, %v1425
      %v1859 = vpack.c.bf16 %v1521, %v1396
      %v1860 = vpack.c.bf16 %v1669, %v1669
      %v1861 = vpack.c.bf16 %v1670, %v1670
      %v1862 = vpack.c.bf16 %v1671, %v1671
      %v1863 = vpack.c.bf16 %v1672, %v1672
      %v1864 = vpack.c.bf16 %v1673, %v1673
      %v1865 = vpack.c.bf16 %v1674, %v1674
      %v1866 = vpack.c.bf16 %v1675, %v1675
      %v1867 = vpack.c.bf16 %v1646, %v1646
      %vm1868 = vcmask 588800
      %v1870 = vsel %vm1868, %v558, 0
      %vm1872 = vcmask 1043456
      %v1874 = vsel %vm1872, %v1740, 0
      %v1877 = vsel %vm1872, %v1741, 0
      %v1880 = vsel %vm1872, %v1742, 0
      %v1883 = vsel %vm1872, %v1743, 0
      %v1886 = vsel %vm1872, %v1744, 0
      %v1889 = vsel %vm1872, %v1745, 0
      %v1892 = vsel %vm1872, %v1746, 0
      %v1895 = vsel %vm1872, %v1747, 0
      %1897 = vmatprep.subr.bf16.mxu0 %v1709
      %1898 = vmatpush1.bf16.msra.mxu0 %v1708
      %1899 = vmatprep.subr.bf16.mxu0 %v1717
      %1900 = vmatpush1.bf16.msra.mxu0 %v1716
      %1901 = vmatprep.subr.bf16.mxu0 %v1725
      %1902 = vmatpush1.bf16.msra.mxu0 %v1724
      %1903 = vmatprep.subr.bf16.mxu0 %v1733
      %1904 = vmatpush1.bf16.msra.mxu0 %v1732
      %1905 = vmatprep.subr.bf16.mxu0 %v1877
      %1906 = vmatpush1.bf16.msra.mxu0 %v1874
      %1907 = vmatprep.subr.bf16.mxu0 0
      %1908 = vmatpush1.bf16.msra.mxu0 0
      %1909 = vmatprep.subr.bf16.mxu0 0
      %1910 = vmatpush1.bf16.msra.mxu0 0
      %1911 = vmatprep.subr.bf16.mxu0 0
      %1912 = vmatpush1.bf16.msra.mxu0 0
      %1913 = vmatprep.subr.bf16.mxu0 0
      %1914 = vmatpush1.bf16.msra.mxu0 0
      %1915 = vmatprep.subr.bf16.mxu0 0
      %1916 = vmatpush1.bf16.msra.mxu0 0
      %1917 = vmatprep.subr.bf16.mxu0 0
      %1918 = vmatpush1.bf16.msra.mxu0 0
      %1919 = vmatprep.subr.bf16.mxu0 0
      %1920 = vmatpush1.bf16.msra.mxu0 0
      %1921 = vmatprep.subr.bf16.mxu0 0
      %1922 = vmatpush1.bf16.msra.mxu0 0
      %1923 = vmatprep.subr.bf16.mxu0 0
      %1924 = vmatpush1.bf16.msra.mxu0 0
      %1925 = vmatprep.subr.bf16.mxu0 0
      %1926 = vmatpush1.bf16.msra.mxu0 0
      %1927 = vmatprep.subr.bf16.mxu0 0
      %1928 = vmatpush1.bf16.msra.mxu0 0
      %1929 = vmatprep.mubr.bf16.mxu0 0
      %1930 = vmatmul.mubr.bf16.gmra.mrb[0].mxu0 %v1870
      %v1931 = vpop.f32.mrb[0].mxu0
      %v1932 = vadd.f32 0.0, %v1931
      %v1933 = vpop.f32.mrb[0].mxu0
      %v1934 = vadd.f32 0.0, %v1933
      %v1935 = vpop.f32.mrb[0].mxu0
      %v1936 = vpop.f32.mrb[0].mxu0
      %1937 = vdwg.mxu0
      %1938 = vmatprep.subr.bf16.mxu0 %v1711
      %1939 = vmatpush1.bf16.msra.mxu0 %v1710
      %1940 = vmatprep.subr.bf16.mxu0 %v1719
      %1941 = vmatpush1.bf16.msra.mxu0 %v1718
      %1942 = vmatprep.subr.bf16.mxu0 %v1727
      %1943 = vmatpush1.bf16.msra.mxu0 %v1726
      %1944 = vmatprep.subr.bf16.mxu0 %v1735
      %1945 = vmatpush1.bf16.msra.mxu0 %v1734
      %1946 = vmatprep.subr.bf16.mxu0 %v1883
      %1947 = vmatpush1.bf16.msra.mxu0 %v1880
      %1948 = vmatprep.subr.bf16.mxu0 0
      %1949 = vmatpush1.bf16.msra.mxu0 0
      %1950 = vmatprep.subr.bf16.mxu0 0
      %1951 = vmatpush1.bf16.msra.mxu0 0
      %1952 = vmatprep.subr.bf16.mxu0 0
      %1953 = vmatpush1.bf16.msra.mxu0 0
      %1954 = vmatprep.subr.bf16.mxu0 0
      %1955 = vmatpush1.bf16.msra.mxu0 0
      %1956 = vmatprep.subr.bf16.mxu0 0
      %1957 = vmatpush1.bf16.msra.mxu0 0
      %1958 = vmatprep.subr.bf16.mxu0 0
      %1959 = vmatpush1.bf16.msra.mxu0 0
      %1960 = vmatprep.subr.bf16.mxu0 0
      %1961 = vmatpush1.bf16.msra.mxu0 0
      %1962 = vmatprep.subr.bf16.mxu0 0
      %1963 = vmatpush1.bf16.msra.mxu0 0
      %1964 = vmatprep.subr.bf16.mxu0 0
      %1965 = vmatpush1.bf16.msra.mxu0 0
      %1966 = vmatprep.subr.bf16.mxu0 0
      %1967 = vmatpush1.bf16.msra.mxu0 0
      %1968 = vmatprep.subr.bf16.mxu0 0
      %1969 = vmatpush1.bf16.msra.mxu0 0
      %1970 = vmatprep.mubr.bf16.mxu0 0
      %1971 = vmatmul.mubr.bf16.gmra.mrb[0].mxu0 %v1870
      %v1972 = vpop.f32.mrb[0].mxu0
      %v1973 = vadd.f32 0.0, %v1972
      %v1974 = vpop.f32.mrb[0].mxu0
      %v1975 = vadd.f32 0.0, %v1974
      %v1976 = vpop.f32.mrb[0].mxu0
      %v1977 = vpop.f32.mrb[0].mxu0
      %1978 = vdwg.mxu0
      %1979 = vmatprep.subr.bf16.mxu0 %v1713
      %1980 = vmatpush1.bf16.msra.mxu0 %v1712
      %1981 = vmatprep.subr.bf16.mxu0 %v1721
      %1982 = vmatpush1.bf16.msra.mxu0 %v1720
      %1983 = vmatprep.subr.bf16.mxu0 %v1729
      %1984 = vmatpush1.bf16.msra.mxu0 %v1728
      %1985 = vmatprep.subr.bf16.mxu0 %v1737
      %1986 = vmatpush1.bf16.msra.mxu0 %v1736
      %1987 = vmatprep.subr.bf16.mxu0 %v1889
      %1988 = vmatpush1.bf16.msra.mxu0 %v1886
      %1989 = vmatprep.subr.bf16.mxu0 0
      %1990 = vmatpush1.bf16.msra.mxu0 0
      %1991 = vmatprep.subr.bf16.mxu0 0
      %1992 = vmatpush1.bf16.msra.mxu0 0
      %1993 = vmatprep.subr.bf16.mxu0 0
      %1994 = vmatpush1.bf16.msra.mxu0 0
      %1995 = vmatprep.subr.bf16.mxu0 0
      %1996 = vmatpush1.bf16.msra.mxu0 0
      %1997 = vmatprep.subr.bf16.mxu0 0
      %1998 = vmatpush1.bf16.msra.mxu0 0
      %1999 = vmatprep.subr.bf16.mxu0 0
      %2000 = vmatpush1.bf16.msra.mxu0 0
      %2001 = vmatprep.subr.bf16.mxu0 0
      %2002 = vmatpush1.bf16.msra.mxu0 0
      %2003 = vmatprep.subr.bf16.mxu0 0
      %2004 = vmatpush1.bf16.msra.mxu0 0
      %2005 = vmatprep.subr.bf16.mxu0 0
      %2006 = vmatpush1.bf16.msra.mxu0 0
      %2007 = vmatprep.subr.bf16.mxu0 0
      %2008 = vmatpush1.bf16.msra.mxu0 0
      %2009 = vmatprep.subr.bf16.mxu0 0
      %2010 = vmatpush1.bf16.msra.mxu0 0
      %2011 = vmatprep.mubr.bf16.mxu0 0
      %2012 = vmatmul.mubr.bf16.gmra.mrb[0].mxu0 %v1870
      %v2013 = vpop.f32.mrb[0].mxu0
      %v2014 = vadd.f32 0.0, %v2013
      %v2015 = vpop.f32.mrb[0].mxu0
      %v2016 = vadd.f32 0.0, %v2015
      %v2017 = vpop.f32.mrb[0].mxu0
      %v2018 = vpop.f32.mrb[0].mxu0
      %2019 = vdwg.mxu0
      %2020 = vmatprep.subr.bf16.mxu0 %v1715
      %2021 = vmatpush1.bf16.msra.mxu0 %v1714
      %2022 = vmatprep.subr.bf16.mxu0 %v1723
      %2023 = vmatpush1.bf16.msra.mxu0 %v1722
      %2024 = vmatprep.subr.bf16.mxu0 %v1731
      %2025 = vmatpush1.bf16.msra.mxu0 %v1730
      %2026 = vmatprep.subr.bf16.mxu0 %v1739
      %2027 = vmatpush1.bf16.msra.mxu0 %v1738
      %2028 = vmatprep.subr.bf16.mxu0 %v1895
      %2029 = vmatpush1.bf16.msra.mxu0 %v1892
      %2030 = vmatprep.subr.bf16.mxu0 0
      %2031 = vmatpush1.bf16.msra.mxu0 0
      %2032 = vmatprep.subr.bf16.mxu0 0
      %2033 = vmatpush1.bf16.msra.mxu0 0
      %2034 = vmatprep.subr.bf16.mxu0 0
      %2035 = vmatpush1.bf16.msra.mxu0 0
      %2036 = vmatprep.subr.bf16.mxu0 0
      %2037 = vmatpush1.bf16.msra.mxu0 0
      %2038 = vmatprep.subr.bf16.mxu0 0
      %2039 = vmatpush1.bf16.msra.mxu0 0
      %2040 = vmatprep.subr.bf16.mxu0 0
      %2041 = vmatpush1.bf16.msra.mxu0 0
      %2042 = vmatprep.subr.bf16.mxu0 0
      %2043 = vmatpush1.bf16.msra.mxu0 0
      %2044 = vmatprep.subr.bf16.mxu0 0
      %2045 = vmatpush1.bf16.msra.mxu0 0
      %2046 = vmatprep.subr.bf16.mxu0 0
      %2047 = vmatpush1.bf16.msra.mxu0 0
      %2048 = vmatprep.subr.bf16.mxu0 0
      %2049 = vmatpush1.bf16.msra.mxu0 0
      %2050 = vmatprep.subr.bf16.mxu0 0
      %2051 = vmatpush1.bf16.msra.mxu0 0
      %2052 = vmatprep.mubr.bf16.mxu0 0
      %2053 = vmatmul.mubr.bf16.gmra.mrb[0].mxu0 %v1870
      %v2054 = vpop.f32.mrb[0].mxu0
      %v2055 = vadd.f32 0.0, %v2054
      %v2056 = vpop.f32.mrb[0].mxu0
      %v2057 = vadd.f32 0.0, %v2056
      %v2058 = vpop.f32.mrb[0].mxu0
      %v2059 = vpop.f32.mrb[0].mxu0
      %2060 = vdwg.mxu0
      %v2062 = vsel %vm1872, %v1780, 0
      %v2065 = vsel %vm1872, %v1781, 0
      %v2068 = vsel %vm1872, %v1782, 0
      %v2071 = vsel %vm1872, %v1783, 0
      %v2074 = vsel %vm1872, %v1784, 0
      %v2077 = vsel %vm1872, %v1785, 0
      %v2080 = vsel %vm1872, %v1786, 0
      %v2083 = vsel %vm1872, %v1787, 0
      %2085 = vmatprep.subr.bf16.mxu0 %v1749
      %2086 = vmatpush1.bf16.msra.mxu0 %v1748
      %2087 = vmatprep.subr.bf16.mxu0 %v1757
      %2088 = vmatpush1.bf16.msra.mxu0 %v1756
      %2089 = vmatprep.subr.bf16.mxu0 %v1765
      %2090 = vmatpush1.bf16.msra.mxu0 %v1764
      %2091 = vmatprep.subr.bf16.mxu0 %v1773
      %2092 = vmatpush1.bf16.msra.mxu0 %v1772
      %2093 = vmatprep.subr.bf16.mxu0 %v2065
      %2094 = vmatpush1.bf16.msra.mxu0 %v2062
      %2095 = vmatprep.subr.bf16.mxu0 0
      %2096 = vmatpush1.bf16.msra.mxu0 0
      %2097 = vmatprep.subr.bf16.mxu0 0
      %2098 = vmatpush1.bf16.msra.mxu0 0
      %2099 = vmatprep.subr.bf16.mxu0 0
      %2100 = vmatpush1.bf16.msra.mxu0 0
      %2101 = vmatprep.subr.bf16.mxu0 0
      %2102 = vmatpush1.bf16.msra.mxu0 0
      %2103 = vmatprep.subr.bf16.mxu0 0
      %2104 = vmatpush1.bf16.msra.mxu0 0
      %2105 = vmatprep.subr.bf16.mxu0 0
      %2106 = vmatpush1.bf16.msra.mxu0 0
      %2107 = vmatprep.subr.bf16.mxu0 0
      %2108 = vmatpush1.bf16.msra.mxu0 0
      %2109 = vmatprep.subr.bf16.mxu0 0
      %2110 = vmatpush1.bf16.msra.mxu0 0
      %2111 = vmatprep.subr.bf16.mxu0 0
      %2112 = vmatpush1.bf16.msra.mxu0 0
      %2113 = vmatprep.subr.bf16.mxu0 0
      %2114 = vmatpush1.bf16.msra.mxu0 0
      %2115 = vmatprep.subr.bf16.mxu0 0
      %2116 = vmatpush1.bf16.msra.mxu0 0
      %2117 = vmatprep.mubr.bf16.mxu0 0
      %2118 = vmatmul.mubr.bf16.gmra.mrb[0].mxu0 %v1870
      %v2119 = vpop.f32.mrb[0].mxu0
      %v2120 = vadd.f32 0.0, %v2119
      %v2121 = vpop.f32.mrb[0].mxu0
      %v2122 = vadd.f32 0.0, %v2121
      %v2123 = vpop.f32.mrb[0].mxu0
      %v2124 = vpop.f32.mrb[0].mxu0
      %2125 = vdwg.mxu0
      %2126 = vmatprep.subr.bf16.mxu0 %v1751
      %2127 = vmatpush1.bf16.msra.mxu0 %v1750
      %2128 = vmatprep.subr.bf16.mxu0 %v1759
      %2129 = vmatpush1.bf16.msra.mxu0 %v1758
      %2130 = vmatprep.subr.bf16.mxu0 %v1767
      %2131 = vmatpush1.bf16.msra.mxu0 %v1766
      %2132 = vmatprep.subr.bf16.mxu0 %v1775
      %2133 = vmatpush1.bf16.msra.mxu0 %v1774
      %2134 = vmatprep.subr.bf16.mxu0 %v2071
      %2135 = vmatpush1.bf16.msra.mxu0 %v2068
      %2136 = vmatprep.subr.bf16.mxu0 0
      %2137 = vmatpush1.bf16.msra.mxu0 0
      %2138 = vmatprep.subr.bf16.mxu0 0
      %2139 = vmatpush1.bf16.msra.mxu0 0
      %2140 = vmatprep.subr.bf16.mxu0 0
      %2141 = vmatpush1.bf16.msra.mxu0 0
      %2142 = vmatprep.subr.bf16.mxu0 0
      %2143 = vmatpush1.bf16.msra.mxu0 0
      %2144 = vmatprep.subr.bf16.mxu0 0
      %2145 = vmatpush1.bf16.msra.mxu0 0
      %2146 = vmatprep.subr.bf16.mxu0 0
      %2147 = vmatpush1.bf16.msra.mxu0 0
      %2148 = vmatprep.subr.bf16.mxu0 0
      %2149 = vmatpush1.bf16.msra.mxu0 0
      %2150 = vmatprep.subr.bf16.mxu0 0
      %2151 = vmatpush1.bf16.msra.mxu0 0
      %2152 = vmatprep.subr.bf16.mxu0 0
      %2153 = vmatpush1.bf16.msra.mxu0 0
      %2154 = vmatprep.subr.bf16.mxu0 0
      %2155 = vmatpush1.bf16.msra.mxu0 0
      %2156 = vmatprep.subr.bf16.mxu0 0
      %2157 = vmatpush1.bf16.msra.mxu0 0
      %2158 = vmatprep.mubr.bf16.mxu0 0
      %2159 = vmatmul.mubr.bf16.gmra.mrb[0].mxu0 %v1870
      %v2160 = vpop.f32.mrb[0].mxu0
      %v2161 = vadd.f32 0.0, %v2160
      %v2162 = vpop.f32.mrb[0].mxu0
      %v2163 = vadd.f32 0.0, %v2162
      %v2164 = vpop.f32.mrb[0].mxu0
      %v2165 = vpop.f32.mrb[0].mxu0
      %2166 = vdwg.mxu0
      %2167 = vmatprep.subr.bf16.mxu0 %v1753
      %2168 = vmatpush1.bf16.msra.mxu0 %v1752
      %2169 = vmatprep.subr.bf16.mxu0 %v1761
      %2170 = vmatpush1.bf16.msra.mxu0 %v1760
      %2171 = vmatprep.subr.bf16.mxu0 %v1769
      %2172 = vmatpush1.bf16.msra.mxu0 %v1768
      %2173 = vmatprep.subr.bf16.mxu0 %v1777
      %2174 = vmatpush1.bf16.msra.mxu0 %v1776
      %2175 = vmatprep.subr.bf16.mxu0 %v2077
      %2176 = vmatpush1.bf16.msra.mxu0 %v2074
      %2177 = vmatprep.subr.bf16.mxu0 0
      %2178 = vmatpush1.bf16.msra.mxu0 0
      %2179 = vmatprep.subr.bf16.mxu0 0
      %2180 = vmatpush1.bf16.msra.mxu0 0
      %2181 = vmatprep.subr.bf16.mxu0 0
      %2182 = vmatpush1.bf16.msra.mxu0 0
      %2183 = vmatprep.subr.bf16.mxu0 0
      %2184 = vmatpush1.bf16.msra.mxu0 0
      %2185 = vmatprep.subr.bf16.mxu0 0
      %2186 = vmatpush1.bf16.msra.mxu0 0
      %2187 = vmatprep.subr.bf16.mxu0 0
      %2188 = vmatpush1.bf16.msra.mxu0 0
      %2189 = vmatprep.subr.bf16.mxu0 0
      %2190 = vmatpush1.bf16.msra.mxu0 0
      %2191 = vmatprep.subr.bf16.mxu0 0
      %2192 = vmatpush1.bf16.msra.mxu0 0
      %2193 = vmatprep.subr.bf16.mxu0 0
      %2194 = vmatpush1.bf16.msra.mxu0 0
      %2195 = vmatprep.subr.bf16.mxu0 0
      %2196 = vmatpush1.bf16.msra.mxu0 0
      %2197 = vmatprep.subr.bf16.mxu0 0
      %2198 = vmatpush1.bf16.msra.mxu0 0
      %2199 = vmatprep.mubr.bf16.mxu0 0
      %2200 = vmatmul.mubr.bf16.gmra.mrb[0].mxu0 %v1870
      %v2201 = vpop.f32.mrb[0].mxu0
      %v2202 = vadd.f32 0.0, %v2201
      %v2203 = vpop.f32.mrb[0].mxu0
      %v2204 = vadd.f32 0.0, %v2203
      %v2205 = vpop.f32.mrb[0].mxu0
      %v2206 = vpop.f32.mrb[0].mxu0
      %2207 = vdwg.mxu0
      %2208 = vmatprep.subr.bf16.mxu0 %v1755
      %2209 = vmatpush1.bf16.msra.mxu0 %v1754
      %2210 = vmatprep.subr.bf16.mxu0 %v1763
      %2211 = vmatpush1.bf16.msra.mxu0 %v1762
      %2212 = vmatprep.subr.bf16.mxu0 %v1771
      %2213 = vmatpush1.bf16.msra.mxu0 %v1770
      %2214 = vmatprep.subr.bf16.mxu0 %v1779
      %2215 = vmatpush1.bf16.msra.mxu0 %v1778
      %2216 = vmatprep.subr.bf16.mxu0 %v2083
      %2217 = vmatpush1.bf16.msra.mxu0 %v2080
      %2218 = vmatprep.subr.bf16.mxu0 0
      %2219 = vmatpush1.bf16.msra.mxu0 0
      %2220 = vmatprep.subr.bf16.mxu0 0
      %2221 = vmatpush1.bf16.msra.mxu0 0
      %2222 = vmatprep.subr.bf16.mxu0 0
      %2223 = vmatpush1.bf16.msra.mxu0 0
      %2224 = vmatprep.subr.bf16.mxu0 0
      %2225 = vmatpush1.bf16.msra.mxu0 0
      %2226 = vmatprep.subr.bf16.mxu0 0
      %2227 = vmatpush1.bf16.msra.mxu0 0
      %2228 = vmatprep.subr.bf16.mxu0 0
      %2229 = vmatpush1.bf16.msra.mxu0 0
      %2230 = vmatprep.subr.bf16.mxu0 0
      %2231 = vmatpush1.bf16.msra.mxu0 0
      %2232 = vmatprep.subr.bf16.mxu0 0
      %2233 = vmatpush1.bf16.msra.mxu0 0
      %2234 = vmatprep.subr.bf16.mxu0 0
      %2235 = vmatpush1.bf16.msra.mxu0 0
      %2236 = vmatprep.subr.bf16.mxu0 0
      %2237 = vmatpush1.bf16.msra.mxu0 0
      %2238 = vmatprep.subr.bf16.mxu0 0
      %2239 = vmatpush1.bf16.msra.mxu0 0
      %2240 = vmatprep.mubr.bf16.mxu0 0
      %2241 = vmatmul.mubr.bf16.gmra.mrb[0].mxu0 %v1870
      %v2242 = vpop.f32.mrb[0].mxu0
      %v2243 = vadd.f32 0.0, %v2242
      %v2244 = vpop.f32.mrb[0].mxu0
      %v2245 = vadd.f32 0.0, %v2244
      %v2246 = vpop.f32.mrb[0].mxu0
      %v2247 = vpop.f32.mrb[0].mxu0
      %2248 = vdwg.mxu0
      %v2250 = vsel %vm1872, %v1820, 0
      %v2253 = vsel %vm1872, %v1821, 0
      %v2256 = vsel %vm1872, %v1822, 0
      %v2259 = vsel %vm1872, %v1823, 0
      %v2262 = vsel %vm1872, %v1824, 0
      %v2265 = vsel %vm1872, %v1825, 0
      %v2268 = vsel %vm1872, %v1826, 0
      %v2271 = vsel %vm1872, %v1827, 0
      %2273 = vmatprep.subr.bf16.mxu0 %v1789
      %2274 = vmatpush1.bf16.msra.mxu0 %v1788
      %2275 = vmatprep.subr.bf16.mxu0 %v1797
      %2276 = vmatpush1.bf16.msra.mxu0 %v1796
      %2277 = vmatprep.subr.bf16.mxu0 %v1805
      %2278 = vmatpush1.bf16.msra.mxu0 %v1804
      %2279 = vmatprep.subr.bf16.mxu0 %v1813
      %2280 = vmatpush1.bf16.msra.mxu0 %v1812
      %2281 = vmatprep.subr.bf16.mxu0 %v2253
      %2282 = vmatpush1.bf16.msra.mxu0 %v2250
      %2283 = vmatprep.subr.bf16.mxu0 0
      %2284 = vmatpush1.bf16.msra.mxu0 0
      %2285 = vmatprep.subr.bf16.mxu0 0
      %2286 = vmatpush1.bf16.msra.mxu0 0
      %2287 = vmatprep.subr.bf16.mxu0 0
      %2288 = vmatpush1.bf16.msra.mxu0 0
      %2289 = vmatprep.subr.bf16.mxu0 0
      %2290 = vmatpush1.bf16.msra.mxu0 0
      %2291 = vmatprep.subr.bf16.mxu0 0
      %2292 = vmatpush1.bf16.msra.mxu0 0
      %2293 = vmatprep.subr.bf16.mxu0 0
      %2294 = vmatpush1.bf16.msra.mxu0 0
      %2295 = vmatprep.subr.bf16.mxu0 0
      %2296 = vmatpush1.bf16.msra.mxu0 0
      %2297 = vmatprep.subr.bf16.mxu0 0
      %2298 = vmatpush1.bf16.msra.mxu0 0
      %2299 = vmatprep.subr.bf16.mxu0 0
      %2300 = vmatpush1.bf16.msra.mxu0 0
      %2301 = vmatprep.subr.bf16.mxu0 0
      %2302 = vmatpush1.bf16.msra.mxu0 0
      %2303 = vmatprep.subr.bf16.mxu0 0
      %2304 = vmatpush1.bf16.msra.mxu0 0
      %2305 = vmatprep.mubr.bf16.mxu0 0
      %2306 = vmatmul.mubr.bf16.gmra.mrb[0].mxu0 %v1870
      %v2307 = vpop.f32.mrb[0].mxu0
      %v2308 = vadd.f32 0.0, %v2307
      %v2309 = vpop.f32.mrb[0].mxu0
      %v2310 = vadd.f32 0.0, %v2309
      %v2311 = vpop.f32.mrb[0].mxu0
      %v2312 = vpop.f32.mrb[0].mxu0
      %2313 = vdwg.mxu0
      %2314 = vmatprep.subr.bf16.mxu0 %v1791
      %2315 = vmatpush1.bf16.msra.mxu0 %v1790
      %2316 = vmatprep.subr.bf16.mxu0 %v1799
      %2317 = vmatpush1.bf16.msra.mxu0 %v1798
      %2318 = vmatprep.subr.bf16.mxu0 %v1807
      %2319 = vmatpush1.bf16.msra.mxu0 %v1806
      %2320 = vmatprep.subr.bf16.mxu0 %v1815
      %2321 = vmatpush1.bf16.msra.mxu0 %v1814
      %2322 = vmatprep.subr.bf16.mxu0 %v2259
      %2323 = vmatpush1.bf16.msra.mxu0 %v2256
      %2324 = vmatprep.subr.bf16.mxu0 0
      %2325 = vmatpush1.bf16.msra.mxu0 0
      %2326 = vmatprep.subr.bf16.mxu0 0
      %2327 = vmatpush1.bf16.msra.mxu0 0
      %2328 = vmatprep.subr.bf16.mxu0 0
      %2329 = vmatpush1.bf16.msra.mxu0 0
      %2330 = vmatprep.subr.bf16.mxu0 0
      %2331 = vmatpush1.bf16.msra.mxu0 0
      %2332 = vmatprep.subr.bf16.mxu0 0
      %2333 = vmatpush1.bf16.msra.mxu0 0
      %2334 = vmatprep.subr.bf16.mxu0 0
      %2335 = vmatpush1.bf16.msra.mxu0 0
      %2336 = vmatprep.subr.bf16.mxu0 0
      %2337 = vmatpush1.bf16.msra.mxu0 0
      %2338 = vmatprep.subr.bf16.mxu0 0
      %2339 = vmatpush1.bf16.msra.mxu0 0
      %2340 = vmatprep.subr.bf16.mxu0 0
      %2341 = vmatpush1.bf16.msra.mxu0 0
      %2342 = vmatprep.subr.bf16.mxu0 0
      %2343 = vmatpush1.bf16.msra.mxu0 0
      %2344 = vmatprep.subr.bf16.mxu0 0
      %2345 = vmatpush1.bf16.msra.mxu0 0
      %2346 = vmatprep.mubr.bf16.mxu0 0
      %2347 = vmatmul.mubr.bf16.gmra.mrb[0].mxu0 %v1870
      %v2348 = vpop.f32.mrb[0].mxu0
      %v2349 = vadd.f32 0.0, %v2348
      %v2350 = vpop.f32.mrb[0].mxu0
      %v2351 = vadd.f32 0.0, %v2350
      %v2352 = vpop.f32.mrb[0].mxu0
      %v2353 = vpop.f32.mrb[0].mxu0
      %2354 = vdwg.mxu0
      %2355 = vmatprep.subr.bf16.mxu0 %v1793
      %2356 = vmatpush1.bf16.msra.mxu0 %v1792
      %2357 = vmatprep.subr.bf16.mxu0 %v1801
      %2358 = vmatpush1.bf16.msra.mxu0 %v1800
      %2359 = vmatprep.subr.bf16.mxu0 %v1809
      %2360 = vmatpush1.bf16.msra.mxu0 %v1808
      %2361 = vmatprep.subr.bf16.mxu0 %v1817
      %2362 = vmatpush1.bf16.msra.mxu0 %v1816
      %2363 = vmatprep.subr.bf16.mxu0 %v2265
      %2364 = vmatpush1.bf16.msra.mxu0 %v2262
      %2365 = vmatprep.subr.bf16.mxu0 0
      %2366 = vmatpush1.bf16.msra.mxu0 0
      %2367 = vmatprep.subr.bf16.mxu0 0
      %2368 = vmatpush1.bf16.msra.mxu0 0
      %2369 = vmatprep.subr.bf16.mxu0 0
      %2370 = vmatpush1.bf16.msra.mxu0 0
      %2371 = vmatprep.subr.bf16.mxu0 0
      %2372 = vmatpush1.bf16.msra.mxu0 0
      %2373 = vmatprep.subr.bf16.mxu0 0
      %2374 = vmatpush1.bf16.msra.mxu0 0
      %2375 = vmatprep.subr.bf16.mxu0 0
      %2376 = vmatpush1.bf16.msra.mxu0 0
      %2377 = vmatprep.subr.bf16.mxu0 0
      %2378 = vmatpush1.bf16.msra.mxu0 0
      %2379 = vmatprep.subr.bf16.mxu0 0
      %2380 = vmatpush1.bf16.msra.mxu0 0
      %2381 = vmatprep.subr.bf16.mxu0 0
      %2382 = vmatpush1.bf16.msra.mxu0 0
      %2383 = vmatprep.subr.bf16.mxu0 0
      %2384 = vmatpush1.bf16.msra.mxu0 0
      %2385 = vmatprep.subr.bf16.mxu0 0
      %2386 = vmatpush1.bf16.msra.mxu0 0
      %2387 = vmatprep.mubr.bf16.mxu0 0
      %2388 = vmatmul.mubr.bf16.gmra.mrb[0].mxu0 %v1870
      %v2389 = vpop.f32.mrb[0].mxu0
      %v2390 = vadd.f32 0.0, %v2389
      %v2391 = vpop.f32.mrb[0].mxu0
      %v2392 = vadd.f32 0.0, %v2391
      %v2393 = vpop.f32.mrb[0].mxu0
      %v2394 = vpop.f32.mrb[0].mxu0
      %2395 = vdwg.mxu0
      %2396 = vmatprep.subr.bf16.mxu0 %v1795
      %2397 = vmatpush1.bf16.msra.mxu0 %v1794
      %2398 = vmatprep.subr.bf16.mxu0 %v1803
      %2399 = vmatpush1.bf16.msra.mxu0 %v1802
      %2400 = vmatprep.subr.bf16.mxu0 %v1811
      %2401 = vmatpush1.bf16.msra.mxu0 %v1810
      %2402 = vmatprep.subr.bf16.mxu0 %v1819
      %2403 = vmatpush1.bf16.msra.mxu0 %v1818
      %2404 = vmatprep.subr.bf16.mxu0 %v2271
      %2405 = vmatpush1.bf16.msra.mxu0 %v2268
      %2406 = vmatprep.subr.bf16.mxu0 0
      %2407 = vmatpush1.bf16.msra.mxu0 0
      %2408 = vmatprep.subr.bf16.mxu0 0
      %2409 = vmatpush1.bf16.msra.mxu0 0
      %2410 = vmatprep.subr.bf16.mxu0 0
      %2411 = vmatpush1.bf16.msra.mxu0 0
      %2412 = vmatprep.subr.bf16.mxu0 0
      %2413 = vmatpush1.bf16.msra.mxu0 0
      %2414 = vmatprep.subr.bf16.mxu0 0
      %2415 = vmatpush1.bf16.msra.mxu0 0
      %2416 = vmatprep.subr.bf16.mxu0 0
      %2417 = vmatpush1.bf16.msra.mxu0 0
      %2418 = vmatprep.subr.bf16.mxu0 0
      %2419 = vmatpush1.bf16.msra.mxu0 0
      %2420 = vmatprep.subr.bf16.mxu0 0
      %2421 = vmatpush1.bf16.msra.mxu0 0
      %2422 = vmatprep.subr.bf16.mxu0 0
      %2423 = vmatpush1.bf16.msra.mxu0 0
      %2424 = vmatprep.subr.bf16.mxu0 0
      %2425 = vmatpush1.bf16.msra.mxu0 0
      %2426 = vmatprep.subr.bf16.mxu0 0
      %2427 = vmatpush1.bf16.msra.mxu0 0
      %2428 = vmatprep.mubr.bf16.mxu0 0
      %2429 = vmatmul.mubr.bf16.gmra.mrb[0].mxu0 %v1870
      %v2430 = vpop.f32.mrb[0].mxu0
      %v2431 = vadd.f32 0.0, %v2430
      %v2432 = vpop.f32.mrb[0].mxu0
      %v2433 = vadd.f32 0.0, %v2432
      %v2434 = vpop.f32.mrb[0].mxu0
      %v2435 = vpop.f32.mrb[0].mxu0
      %2436 = vdwg.mxu0
      %v2438 = vsel %vm1872, %v1860, 0
      %v2441 = vsel %vm1872, %v1861, 0
      %v2444 = vsel %vm1872, %v1862, 0
      %v2447 = vsel %vm1872, %v1863, 0
      %v2450 = vsel %vm1872, %v1864, 0
      %v2453 = vsel %vm1872, %v1865, 0
      %v2456 = vsel %vm1872, %v1866, 0
      %v2459 = vsel %vm1872, %v1867, 0
      %2461 = vmatprep.subr.bf16.mxu0 %v1829
      %2462 = vmatpush1.bf16.msra.mxu0 %v1828
      %2463 = vmatprep.subr.bf16.mxu0 %v1837
      %2464 = vmatpush1.bf16.msra.mxu0 %v1836
      %2465 = vmatprep.subr.bf16.mxu0 %v1845
      %2466 = vmatpush1.bf16.msra.mxu0 %v1844
      %2467 = vmatprep.subr.bf16.mxu0 %v1853
      %2468 = vmatpush1.bf16.msra.mxu0 %v1852
      %2469 = vmatprep.subr.bf16.mxu0 %v2441
      %2470 = vmatpush1.bf16.msra.mxu0 %v2438
      %2471 = vmatprep.subr.bf16.mxu0 0
      %2472 = vmatpush1.bf16.msra.mxu0 0
      %2473 = vmatprep.subr.bf16.mxu0 0
      %2474 = vmatpush1.bf16.msra.mxu0 0
      %2475 = vmatprep.subr.bf16.mxu0 0
      %2476 = vmatpush1.bf16.msra.mxu0 0
      %2477 = vmatprep.subr.bf16.mxu0 0
      %2478 = vmatpush1.bf16.msra.mxu0 0
      %2479 = vmatprep.subr.bf16.mxu0 0
      %2480 = vmatpush1.bf16.msra.mxu0 0
      %2481 = vmatprep.subr.bf16.mxu0 0
      %2482 = vmatpush1.bf16.msra.mxu0 0
      %2483 = vmatprep.subr.bf16.mxu0 0
      %2484 = vmatpush1.bf16.msra.mxu0 0
      %2485 = vmatprep.subr.bf16.mxu0 0
      %2486 = vmatpush1.bf16.msra.mxu0 0
      %2487 = vmatprep.subr.bf16.mxu0 0
      %2488 = vmatpush1.bf16.msra.mxu0 0
      %2489 = vmatprep.subr.bf16.mxu0 0
      %2490 = vmatpush1.bf16.msra.mxu0 0
      %2491 = vmatprep.subr.bf16.mxu0 0
      %2492 = vmatpush1.bf16.msra.mxu0 0
      %2493 = vmatprep.mubr.bf16.mxu0 0
      %2494 = vmatmul.mubr.bf16.gmra.mrb[0].mxu0 %v1870
      %v2495 = vpop.f32.mrb[0].mxu0
      %v2496 = vadd.f32 0.0, %v2495
      %v2497 = vpop.f32.mrb[0].mxu0
      %v2498 = vadd.f32 0.0, %v2497
      %v2499 = vpop.f32.mrb[0].mxu0
      %v2500 = vpop.f32.mrb[0].mxu0
      %2501 = vdwg.mxu0
      %2502 = vmatprep.subr.bf16.mxu0 %v1831
      %2503 = vmatpush1.bf16.msra.mxu0 %v1830
      %2504 = vmatprep.subr.bf16.mxu0 %v1839
      %2505 = vmatpush1.bf16.msra.mxu0 %v1838
      %2506 = vmatprep.subr.bf16.mxu0 %v1847
      %2507 = vmatpush1.bf16.msra.mxu0 %v1846
      %2508 = vmatprep.subr.bf16.mxu0 %v1855
      %2509 = vmatpush1.bf16.msra.mxu0 %v1854
      %2510 = vmatprep.subr.bf16.mxu0 %v2447
      %2511 = vmatpush1.bf16.msra.mxu0 %v2444
      %2512 = vmatprep.subr.bf16.mxu0 0
      %2513 = vmatpush1.bf16.msra.mxu0 0
      %2514 = vmatprep.subr.bf16.mxu0 0
      %2515 = vmatpush1.bf16.msra.mxu0 0
      %2516 = vmatprep.subr.bf16.mxu0 0
      %2517 = vmatpush1.bf16.msra.mxu0 0
      %2518 = vmatprep.subr.bf16.mxu0 0
      %2519 = vmatpush1.bf16.msra.mxu0 0
      %2520 = vmatprep.subr.bf16.mxu0 0
      %2521 = vmatpush1.bf16.msra.mxu0 0
      %2522 = vmatprep.subr.bf16.mxu0 0
      %2523 = vmatpush1.bf16.msra.mxu0 0
      %2524 = vmatprep.subr.bf16.mxu0 0
      %2525 = vmatpush1.bf16.msra.mxu0 0
      %2526 = vmatprep.subr.bf16.mxu0 0
      %2527 = vmatpush1.bf16.msra.mxu0 0
      %2528 = vmatprep.subr.bf16.mxu0 0
      %2529 = vmatpush1.bf16.msra.mxu0 0
      %2530 = vmatprep.subr.bf16.mxu0 0
      %2531 = vmatpush1.bf16.msra.mxu0 0
      %2532 = vmatprep.subr.bf16.mxu0 0
      %2533 = vmatpush1.bf16.msra.mxu0 0
      %2534 = vmatprep.mubr.bf16.mxu0 0
      %2535 = vmatmul.mubr.bf16.gmra.mrb[0].mxu0 %v1870
      %v2536 = vpop.f32.mrb[0].mxu0
      %v2537 = vadd.f32 0.0, %v2536
      %v2538 = vpop.f32.mrb[0].mxu0
      %v2539 = vadd.f32 0.0, %v2538
      %v2540 = vpop.f32.mrb[0].mxu0
      %v2541 = vpop.f32.mrb[0].mxu0
      %2542 = vdwg.mxu0
      %2543 = vmatprep.subr.bf16.mxu0 %v1833
      %2544 = vmatpush1.bf16.msra.mxu0 %v1832
      %2545 = vmatprep.subr.bf16.mxu0 %v1841
      %2546 = vmatpush1.bf16.msra.mxu0 %v1840
      %2547 = vmatprep.subr.bf16.mxu0 %v1849
      %2548 = vmatpush1.bf16.msra.mxu0 %v1848
      %2549 = vmatprep.subr.bf16.mxu0 %v1857
      %2550 = vmatpush1.bf16.msra.mxu0 %v1856
      %2551 = vmatprep.subr.bf16.mxu0 %v2453
      %2552 = vmatpush1.bf16.msra.mxu0 %v2450
      %2553 = vmatprep.subr.bf16.mxu0 0
      %2554 = vmatpush1.bf16.msra.mxu0 0
      %2555 = vmatprep.subr.bf16.mxu0 0
      %2556 = vmatpush1.bf16.msra.mxu0 0
      %2557 = vmatprep.subr.bf16.mxu0 0
      %2558 = vmatpush1.bf16.msra.mxu0 0
      %2559 = vmatprep.subr.bf16.mxu0 0
      %2560 = vmatpush1.bf16.msra.mxu0 0
      %2561 = vmatprep.subr.bf16.mxu0 0
      %2562 = vmatpush1.bf16.msra.mxu0 0
      %2563 = vmatprep.subr.bf16.mxu0 0
      %2564 = vmatpush1.bf16.msra.mxu0 0
      %2565 = vmatprep.subr.bf16.mxu0 0
      %2566 = vmatpush1.bf16.msra.mxu0 0
      %2567 = vmatprep.subr.bf16.mxu0 0
      %2568 = vmatpush1.bf16.msra.mxu0 0
      %2569 = vmatprep.subr.bf16.mxu0 0
      %2570 = vmatpush1.bf16.msra.mxu0 0
      %2571 = vmatprep.subr.bf16.mxu0 0
      %2572 = vmatpush1.bf16.msra.mxu0 0
      %2573 = vmatprep.subr.bf16.mxu0 0
      %2574 = vmatpush1.bf16.msra.mxu0 0
      %2575 = vmatprep.mubr.bf16.mxu0 0
      %2576 = vmatmul.mubr.bf16.gmra.mrb[0].mxu0 %v1870
      %v2577 = vpop.f32.mrb[0].mxu0
      %v2578 = vadd.f32 0.0, %v2577
      %v2579 = vpop.f32.mrb[0].mxu0
      %v2580 = vadd.f32 0.0, %v2579
      %v2581 = vpop.f32.mrb[0].mxu0
      %v2582 = vpop.f32.mrb[0].mxu0
      %2583 = vdwg.mxu0
      %2584 = vmatprep.subr.bf16.mxu0 %v1835
      %2585 = vmatpush1.bf16.msra.mxu0 %v1834
      %2586 = vmatprep.subr.bf16.mxu0 %v1843
      %2587 = vmatpush1.bf16.msra.mxu0 %v1842
      %2588 = vmatprep.subr.bf16.mxu0 %v1851
      %2589 = vmatpush1.bf16.msra.mxu0 %v1850
      %2590 = vmatprep.subr.bf16.mxu0 %v1859
      %2591 = vmatpush1.bf16.msra.mxu0 %v1858
      %2592 = vmatprep.subr.bf16.mxu0 %v2459
      %2593 = vmatpush1.bf16.msra.mxu0 %v2456
      %2594 = vmatprep.subr.bf16.mxu0 0
      %2595 = vmatpush1.bf16.msra.mxu0 0
      %2596 = vmatprep.subr.bf16.mxu0 0
      %2597 = vmatpush1.bf16.msra.mxu0 0
      %2598 = vmatprep.subr.bf16.mxu0 0
      %2599 = vmatpush1.bf16.msra.mxu0 0
      %2600 = vmatprep.subr.bf16.mxu0 0
      %2601 = vmatpush1.bf16.msra.mxu0 0
      %2602 = vmatprep.subr.bf16.mxu0 0
      %2603 = vmatpush1.bf16.msra.mxu0 0
      %2604 = vmatprep.subr.bf16.mxu0 0
      %2605 = vmatpush1.bf16.msra.mxu0 0
      %2606 = vmatprep.subr.bf16.mxu0 0
      %2607 = vmatpush1.bf16.msra.mxu0 0
      %2608 = vmatprep.subr.bf16.mxu0 0
      %2609 = vmatpush1.bf16.msra.mxu0 0
      %2610 = vmatprep.subr.bf16.mxu0 0
      %2611 = vmatpush1.bf16.msra.mxu0 0
      %2612 = vmatprep.subr.bf16.mxu0 0
      %2613 = vmatpush1.bf16.msra.mxu0 0
      %2614 = vmatprep.subr.bf16.mxu0 0
      %2615 = vmatpush1.bf16.msra.mxu0 0
      %2616 = vmatprep.mubr.bf16.mxu0 0
      %2617 = vmatmul.mubr.bf16.gmra.mrb[0].mxu0 %v1870
      %v2618 = vpop.f32.mrb[0].mxu0
      %v2619 = vadd.f32 0.0, %v2618
      %v2620 = vpop.f32.mrb[0].mxu0
      %v2621 = vadd.f32 0.0, %v2620
      %v2622 = vpop.f32.mrb[0].mxu0
      %v2623 = vpop.f32.mrb[0].mxu0
      %2624 = vdwg.mxu0
      %2657 = vrot.lane.b32.xlu0 %v1932, 127
      %v2658 = vpop.permute.xlu0 %2657
      %2659 = vrot.lane.b32.xlu0 %v1934, 127
      %v2660 = vpop.permute.xlu0 %2659
      %2661 = vrot.lane.b32.xlu0 %v1973, 127
      %v2662 = vpop.permute.xlu0 %2661
      %2663 = vrot.lane.b32.xlu0 %v1975, 127
      %v2664 = vpop.permute.xlu0 %2663
      %2665 = vrot.lane.b32.xlu0 %v2014, 127
      %v2666 = vpop.permute.xlu0 %2665
      %2667 = vrot.lane.b32.xlu0 %v2016, 127
      %v2668 = vpop.permute.xlu0 %2667
      %2669 = vrot.lane.b32.xlu0 %v2055, 127
      %v2670 = vpop.permute.xlu0 %2669
      %2671 = vrot.lane.b32.xlu0 %v2057, 127
      %v2672 = vpop.permute.xlu0 %2671
      %2673 = vrot.lane.b32.xlu0 %v2120, 127
      %v2674 = vpop.permute.xlu0 %2673
      %2675 = vrot.lane.b32.xlu0 %v2122, 127
      %v2676 = vpop.permute.xlu0 %2675
      %2677 = vrot.lane.b32.xlu0 %v2161, 127
      %v2678 = vpop.permute.xlu0 %2677
      %2679 = vrot.lane.b32.xlu0 %v2163, 127
      %v2680 = vpop.permute.xlu0 %2679
      %2681 = vrot.lane.b32.xlu0 %v2202, 127
      %v2682 = vpop.permute.xlu0 %2681
      %2683 = vrot.lane.b32.xlu0 %v2204, 127
      %v2684 = vpop.permute.xlu0 %2683
      %2685 = vrot.lane.b32.xlu0 %v2243, 127
      %v2686 = vpop.permute.xlu0 %2685
      %2687 = vrot.lane.b32.xlu0 %v2245, 127
      %v2688 = vpop.permute.xlu0 %2687
      %2689 = vrot.lane.b32.xlu0 %v2308, 127
      %v2690 = vpop.permute.xlu0 %2689
      %2691 = vrot.lane.b32.xlu0 %v2310, 127
      %v2692 = vpop.permute.xlu0 %2691
      %2693 = vrot.lane.b32.xlu0 %v2349, 127
      %v2694 = vpop.permute.xlu0 %2693
      %2695 = vrot.lane.b32.xlu0 %v2351, 127
      %v2696 = vpop.permute.xlu0 %2695
      %2697 = vrot.lane.b32.xlu0 %v2390, 127
      %v2698 = vpop.permute.xlu0 %2697
      %2699 = vrot.lane.b32.xlu0 %v2392, 127
      %v2700 = vpop.permute.xlu0 %2699
      %2701 = vrot.lane.b32.xlu0 %v2431, 127
      %v2702 = vpop.permute.xlu0 %2701
      %2703 = vrot.lane.b32.xlu0 %v2433, 127
      %v2704 = vpop.permute.xlu0 %2703
      %2705 = vrot.lane.b32.xlu0 %v2496, 127
      %v2706 = vpop.permute.xlu0 %2705
      %2707 = vrot.lane.b32.xlu0 %v2498, 127
      %v2708 = vpop.permute.xlu0 %2707
      %2709 = vrot.lane.b32.xlu0 %v2537, 127
      %v2710 = vpop.permute.xlu0 %2709
      %2711 = vrot.lane.b32.xlu0 %v2539, 127
      %v2712 = vpop.permute.xlu0 %2711
      %2713 = vrot.lane.b32.xlu0 %v2578, 127
      %v2714 = vpop.permute.xlu0 %2713
      %2715 = vrot.lane.b32.xlu0 %v2580, 127
      %v2716 = vpop.permute.xlu0 %2715
      %2717 = vrot.lane.b32.xlu0 %v2619, 127
      %v2718 = vpop.permute.xlu0 %2717
      %2719 = vrot.lane.b32.xlu0 %v2621, 127
      %v2720 = vpop.permute.xlu0 %2719
      %v2721 = vsel %vm772, %v2658, %v2660
      %v2722 = vsel %vm772, %v2660, %v2662
      %v2723 = vsel %vm772, %v2662, %v2664
      %v2724 = vsel %vm772, %v2664, %v2666
      %v2725 = vsel %vm772, %v2666, %v2668
      %v2726 = vsel %vm772, %v2668, %v2670
      %v2727 = vsel %vm772, %v2670, %v2672
      %v2728 = vsel %vm772, %v2674, %v2676
      %v2729 = vsel %vm772, %v2676, %v2678
      %v2730 = vsel %vm772, %v2678, %v2680
      %v2731 = vsel %vm772, %v2680, %v2682
      %v2732 = vsel %vm772, %v2682, %v2684
      %v2733 = vsel %vm772, %v2684, %v2686
      %v2734 = vsel %vm772, %v2686, %v2688
      %v2735 = vsel %vm772, %v2690, %v2692
      %v2736 = vsel %vm772, %v2692, %v2694
      %v2737 = vsel %vm772, %v2694, %v2696
      %v2738 = vsel %vm772, %v2696, %v2698
      %v2739 = vsel %vm772, %v2698, %v2700
      %v2740 = vsel %vm772, %v2700, %v2702
      %v2741 = vsel %vm772, %v2702, %v2704
      %v2742 = vsel %vm772, %v2706, %v2708
      %v2743 = vsel %vm772, %v2708, %v2710
      %v2744 = vsel %vm772, %v2710, %v2712
      %v2745 = vsel %vm772, %v2712, %v2714
      %v2746 = vsel %vm772, %v2714, %v2716
      %v2747 = vsel %vm772, %v2716, %v2718
      %v2748 = vsel %vm772, %v2718, %v2720
      %v2781 = vmax.f32 %v1932, %v2721
      %v2782 = vmax.f32 %v1934, %v2722
      %v2783 = vmax.f32 %v1973, %v2723
      %v2784 = vmax.f32 %v1975, %v2724
      %v2785 = vmax.f32 %v2014, %v2725
      %v2786 = vmax.f32 %v2016, %v2726
      %v2787 = vmax.f32 %v2055, %v2727
      %v2788 = vmax.f32 %v2057, %v2672
      %v2789 = vmax.f32 %v2120, %v2728
      %v2790 = vmax.f32 %v2122, %v2729
      %v2791 = vmax.f32 %v2161, %v2730
      %v2792 = vmax.f32 %v2163, %v2731
      %v2793 = vmax.f32 %v2202, %v2732
      %v2794 = vmax.f32 %v2204, %v2733
      %v2795 = vmax.f32 %v2243, %v2734
      %v2796 = vmax.f32 %v2245, %v2688
      %v2797 = vmax.f32 %v2308, %v2735
      %v2798 = vmax.f32 %v2310, %v2736
      %v2799 = vmax.f32 %v2349, %v2737
      %v2800 = vmax.f32 %v2351, %v2738
      %v2801 = vmax.f32 %v2390, %v2739
      %v2802 = vmax.f32 %v2392, %v2740
      %v2803 = vmax.f32 %v2431, %v2741
      %v2804 = vmax.f32 %v2433, %v2704
      %v2805 = vmax.f32 %v2496, %v2742
      %v2806 = vmax.f32 %v2498, %v2743
      %v2807 = vmax.f32 %v2537, %v2744
      %v2808 = vmax.f32 %v2539, %v2745
      %v2809 = vmax.f32 %v2578, %v2746
      %v2810 = vmax.f32 %v2580, %v2747
      %v2811 = vmax.f32 %v2619, %v2748
      %v2812 = vmax.f32 %v2621, %v2720
      %2813 = vrot.lane.b32.xlu0 %v1932, 96
      %v2814 = vpop.permute.xlu0 %2813
      %2815 = vrot.lane.b32.xlu0 %v1934, 96
      %v2816 = vpop.permute.xlu0 %2815
      %2817 = vrot.lane.b32.xlu0 %v1973, 96
      %v2818 = vpop.permute.xlu0 %2817
      %2819 = vrot.lane.b32.xlu0 %v1975, 96
      %v2820 = vpop.permute.xlu0 %2819
      %2821 = vrot.lane.b32.xlu0 %v2014, 96
      %v2822 = vpop.permute.xlu0 %2821
      %2823 = vrot.lane.b32.xlu0 %v2016, 96
      %v2824 = vpop.permute.xlu0 %2823
      %2825 = vrot.lane.b32.xlu0 %v2055, 96
      %v2826 = vpop.permute.xlu0 %2825
      %2827 = vrot.lane.b32.xlu0 %v2057, 96
      %v2828 = vpop.permute.xlu0 %2827
      %2829 = vrot.lane.b32.xlu0 %v2120, 96
      %v2830 = vpop.permute.xlu0 %2829
      %2831 = vrot.lane.b32.xlu0 %v2122, 96
      %v2832 = vpop.permute.xlu0 %2831
      %2833 = vrot.lane.b32.xlu0 %v2161, 96
      %v2834 = vpop.permute.xlu0 %2833
      %2835 = vrot.lane.b32.xlu0 %v2163, 96
      %v2836 = vpop.permute.xlu0 %2835
      %2837 = vrot.lane.b32.xlu0 %v2202, 96
      %v2838 = vpop.permute.xlu0 %2837
      %2839 = vrot.lane.b32.xlu0 %v2204, 96
      %v2840 = vpop.permute.xlu0 %2839
      %2841 = vrot.lane.b32.xlu0 %v2243, 96
      %v2842 = vpop.permute.xlu0 %2841
      %2843 = vrot.lane.b32.xlu0 %v2245, 96
      %v2844 = vpop.permute.xlu0 %2843
      %2845 = vrot.lane.b32.xlu0 %v2308, 96
      %v2846 = vpop.permute.xlu0 %2845
      %2847 = vrot.lane.b32.xlu0 %v2310, 96
      %v2848 = vpop.permute.xlu0 %2847
      %2849 = vrot.lane.b32.xlu0 %v2349, 96
      %v2850 = vpop.permute.xlu0 %2849
      %2851 = vrot.lane.b32.xlu0 %v2351, 96
      %v2852 = vpop.permute.xlu0 %2851
      %2853 = vrot.lane.b32.xlu0 %v2390, 96
      %v2854 = vpop.permute.xlu0 %2853
      %2855 = vrot.lane.b32.xlu0 %v2392, 96
      %v2856 = vpop.permute.xlu0 %2855
      %2857 = vrot.lane.b32.xlu0 %v2431, 96
      %v2858 = vpop.permute.xlu0 %2857
      %2859 = vrot.lane.b32.xlu0 %v2433, 96
      %v2860 = vpop.permute.xlu0 %2859
      %2861 = vrot.lane.b32.xlu0 %v2496, 96
      %v2862 = vpop.permute.xlu0 %2861
      %2863 = vrot.lane.b32.xlu0 %v2498, 96
      %v2864 = vpop.permute.xlu0 %2863
      %2865 = vrot.lane.b32.xlu0 %v2537, 96
      %v2866 = vpop.permute.xlu0 %2865
      %2867 = vrot.lane.b32.xlu0 %v2539, 96
      %v2868 = vpop.permute.xlu0 %2867
      %2869 = vrot.lane.b32.xlu0 %v2578, 96
      %v2870 = vpop.permute.xlu0 %2869
      %2871 = vrot.lane.b32.xlu0 %v2580, 96
      %v2872 = vpop.permute.xlu0 %2871
      %2873 = vrot.lane.b32.xlu0 %v2619, 96
      %v2874 = vpop.permute.xlu0 %2873
      %2875 = vrot.lane.b32.xlu0 %v2621, 96
      %v2876 = vpop.permute.xlu0 %2875
      %v2877 = vsel %vm1022, %v2814, %v2816
      %v2878 = vsel %vm1022, %v2816, %v2818
      %v2879 = vsel %vm1022, %v2818, %v2820
      %v2880 = vsel %vm1022, %v2820, %v2822
      %v2881 = vsel %vm1022, %v2822, %v2824
      %v2882 = vsel %vm1022, %v2824, %v2826
      %v2883 = vsel %vm1022, %v2826, %v2828
      %v2884 = vsel %vm1022, %v2830, %v2832
      %v2885 = vsel %vm1022, %v2832, %v2834
      %v2886 = vsel %vm1022, %v2834, %v2836
      %v2887 = vsel %vm1022, %v2836, %v2838
      %v2888 = vsel %vm1022, %v2838, %v2840
      %v2889 = vsel %vm1022, %v2840, %v2842
      %v2890 = vsel %vm1022, %v2842, %v2844
      %v2891 = vsel %vm1022, %v2846, %v2848
      %v2892 = vsel %vm1022, %v2848, %v2850
      %v2893 = vsel %vm1022, %v2850, %v2852
      %v2894 = vsel %vm1022, %v2852, %v2854
      %v2895 = vsel %vm1022, %v2854, %v2856
      %v2896 = vsel %vm1022, %v2856, %v2858
      %v2897 = vsel %vm1022, %v2858, %v2860
      %v2898 = vsel %vm1022, %v2862, %v2864
      %v2899 = vsel %vm1022, %v2864, %v2866
      %v2900 = vsel %vm1022, %v2866, %v2868
      %v2901 = vsel %vm1022, %v2868, %v2870
      %v2902 = vsel %vm1022, %v2870, %v2872
      %v2903 = vsel %vm1022, %v2872, %v2874
      %v2904 = vsel %vm1022, %v2874, %v2876
      %v2937 = vmax.f32 %v2781, %v2877
      %v2938 = vmax.f32 %v2782, %v2878
      %v2939 = vmax.f32 %v2783, %v2879
      %v2940 = vmax.f32 %v2784, %v2880
      %v2941 = vmax.f32 %v2785, %v2881
      %v2942 = vmax.f32 %v2786, %v2882
      %v2943 = vmax.f32 %v2787, %v2883
      %v2944 = vmax.f32 %v2788, %v2828
      %v2945 = vmax.f32 %v2789, %v2884
      %v2946 = vmax.f32 %v2790, %v2885
      %v2947 = vmax.f32 %v2791, %v2886
      %v2948 = vmax.f32 %v2792, %v2887
      %v2949 = vmax.f32 %v2793, %v2888
      %v2950 = vmax.f32 %v2794, %v2889
      %v2951 = vmax.f32 %v2795, %v2890
      %v2952 = vmax.f32 %v2796, %v2844
      %v2953 = vmax.f32 %v2797, %v2891
      %v2954 = vmax.f32 %v2798, %v2892
      %v2955 = vmax.f32 %v2799, %v2893
      %v2956 = vmax.f32 %v2800, %v2894
      %v2957 = vmax.f32 %v2801, %v2895
      %v2958 = vmax.f32 %v2802, %v2896
      %v2959 = vmax.f32 %v2803, %v2897
      %v2960 = vmax.f32 %v2804, %v2860
      %v2961 = vmax.f32 %v2805, %v2898
      %v2962 = vmax.f32 %v2806, %v2899
      %v2963 = vmax.f32 %v2807, %v2900
      %v2964 = vmax.f32 %v2808, %v2901
      %v2965 = vmax.f32 %v2809, %v2902
      %v2966 = vmax.f32 %v2810, %v2903
      %v2967 = vmax.f32 %v2811, %v2904
      %v2968 = vmax.f32 %v2812, %v2876
      %2969 = vrot.lane.b32.xlu0 %v1932, 95
      %v2970 = vpop.permute.xlu0 %2969
      %2971 = vrot.lane.b32.xlu0 %v1934, 95
      %v2972 = vpop.permute.xlu0 %2971
      %2973 = vrot.lane.b32.xlu0 %v1973, 95
      %v2974 = vpop.permute.xlu0 %2973
      %2975 = vrot.lane.b32.xlu0 %v1975, 95
      %v2976 = vpop.permute.xlu0 %2975
      %2977 = vrot.lane.b32.xlu0 %v2014, 95
      %v2978 = vpop.permute.xlu0 %2977
      %2979 = vrot.lane.b32.xlu0 %v2016, 95
      %v2980 = vpop.permute.xlu0 %2979
      %2981 = vrot.lane.b32.xlu0 %v2055, 95
      %v2982 = vpop.permute.xlu0 %2981
      %2983 = vrot.lane.b32.xlu0 %v2057, 95
      %v2984 = vpop.permute.xlu0 %2983
      %2985 = vrot.lane.b32.xlu0 %v2120, 95
      %v2986 = vpop.permute.xlu0 %2985
      %2987 = vrot.lane.b32.xlu0 %v2122, 95
      %v2988 = vpop.permute.xlu0 %2987
      %2989 = vrot.lane.b32.xlu0 %v2161, 95
      %v2990 = vpop.permute.xlu0 %2989
      %2991 = vrot.lane.b32.xlu0 %v2163, 95
      %v2992 = vpop.permute.xlu0 %2991
      %2993 = vrot.lane.b32.xlu0 %v2202, 95
      %v2994 = vpop.permute.xlu0 %2993
      %2995 = vrot.lane.b32.xlu0 %v2204, 95
      %v2996 = vpop.permute.xlu0 %2995
      %2997 = vrot.lane.b32.xlu0 %v2243, 95
      %v2998 = vpop.permute.xlu0 %2997
      %2999 = vrot.lane.b32.xlu0 %v2245, 95
      %v3000 = vpop.permute.xlu0 %2999
      %3001 = vrot.lane.b32.xlu0 %v2308, 95
      %v3002 = vpop.permute.xlu0 %3001
      %3003 = vrot.lane.b32.xlu0 %v2310, 95
      %v3004 = vpop.permute.xlu0 %3003
      %3005 = vrot.lane.b32.xlu0 %v2349, 95
      %v3006 = vpop.permute.xlu0 %3005
      %3007 = vrot.lane.b32.xlu0 %v2351, 95
      %v3008 = vpop.permute.xlu0 %3007
      %3009 = vrot.lane.b32.xlu0 %v2390, 95
      %v3010 = vpop.permute.xlu0 %3009
      %3011 = vrot.lane.b32.xlu0 %v2392, 95
      %v3012 = vpop.permute.xlu0 %3011
      %3013 = vrot.lane.b32.xlu0 %v2431, 95
      %v3014 = vpop.permute.xlu0 %3013
      %3015 = vrot.lane.b32.xlu0 %v2433, 95
      %v3016 = vpop.permute.xlu0 %3015
      %3017 = vrot.lane.b32.xlu0 %v2496, 95
      %v3018 = vpop.permute.xlu0 %3017
      %3019 = vrot.lane.b32.xlu0 %v2498, 95
      %v3020 = vpop.permute.xlu0 %3019
      %3021 = vrot.lane.b32.xlu0 %v2537, 95
      %v3022 = vpop.permute.xlu0 %3021
      %3023 = vrot.lane.b32.xlu0 %v2539, 95
      %v3024 = vpop.permute.xlu0 %3023
      %3025 = vrot.lane.b32.xlu0 %v2578, 95
      %v3026 = vpop.permute.xlu0 %3025
      %3027 = vrot.lane.b32.xlu0 %v2580, 95
      %v3028 = vpop.permute.xlu0 %3027
      %3029 = vrot.lane.b32.xlu0 %v2619, 95
      %v3030 = vpop.permute.xlu0 %3029
      %3031 = vrot.lane.b32.xlu0 %v2621, 95
      %v3032 = vpop.permute.xlu0 %3031
      %v3033 = vsel %vm1147, %v2970, %v2972
      %v3034 = vsel %vm1147, %v2972, %v2974
      %v3035 = vsel %vm1147, %v2974, %v2976
      %v3036 = vsel %vm1147, %v2976, %v2978
      %v3037 = vsel %vm1147, %v2978, %v2980
      %v3038 = vsel %vm1147, %v2980, %v2982
      %v3039 = vsel %vm1147, %v2982, %v2984
      %v3040 = vsel %vm1147, %v2986, %v2988
      %v3041 = vsel %vm1147, %v2988, %v2990
      %v3042 = vsel %vm1147, %v2990, %v2992
      %v3043 = vsel %vm1147, %v2992, %v2994
      %v3044 = vsel %vm1147, %v2994, %v2996
      %v3045 = vsel %vm1147, %v2996, %v2998
      %v3046 = vsel %vm1147, %v2998, %v3000
      %v3047 = vsel %vm1147, %v3002, %v3004
      %v3048 = vsel %vm1147, %v3004, %v3006
      %v3049 = vsel %vm1147, %v3006, %v3008
      %v3050 = vsel %vm1147, %v3008, %v3010
      %v3051 = vsel %vm1147, %v3010, %v3012
      %v3052 = vsel %vm1147, %v3012, %v3014
      %v3053 = vsel %vm1147, %v3014, %v3016
      %v3054 = vsel %vm1147, %v3018, %v3020
      %v3055 = vsel %vm1147, %v3020, %v3022
      %v3056 = vsel %vm1147, %v3022, %v3024
      %v3057 = vsel %vm1147, %v3024, %v3026
      %v3058 = vsel %vm1147, %v3026, %v3028
      %v3059 = vsel %vm1147, %v3028, %v3030
      %v3060 = vsel %vm1147, %v3030, %v3032
      %v3093 = vmax.f32 %v2937, %v3033
      %v3094 = vmax.f32 %v2938, %v3034
      %v3095 = vmax.f32 %v2939, %v3035
      %v3096 = vmax.f32 %v2940, %v3036
      %v3097 = vmax.f32 %v2941, %v3037
      %v3098 = vmax.f32 %v2942, %v3038
      %v3099 = vmax.f32 %v2943, %v3039
      %v3100 = vmax.f32 %v2944, %v2984
      %v3101 = vmax.f32 %v2945, %v3040
      %v3102 = vmax.f32 %v2946, %v3041
      %v3103 = vmax.f32 %v2947, %v3042
      %v3104 = vmax.f32 %v2948, %v3043
      %v3105 = vmax.f32 %v2949, %v3044
      %v3106 = vmax.f32 %v2950, %v3045
      %v3107 = vmax.f32 %v2951, %v3046
      %v3108 = vmax.f32 %v2952, %v3000
      %v3109 = vmax.f32 %v2953, %v3047
      %v3110 = vmax.f32 %v2954, %v3048
      %v3111 = vmax.f32 %v2955, %v3049
      %v3112 = vmax.f32 %v2956, %v3050
      %v3113 = vmax.f32 %v2957, %v3051
      %v3114 = vmax.f32 %v2958, %v3052
      %v3115 = vmax.f32 %v2959, %v3053
      %v3116 = vmax.f32 %v2960, %v3016
      %v3117 = vmax.f32 %v2961, %v3054
      %v3118 = vmax.f32 %v2962, %v3055
      %v3119 = vmax.f32 %v2963, %v3056
      %v3120 = vmax.f32 %v2964, %v3057
      %v3121 = vmax.f32 %v2965, %v3058
      %v3122 = vmax.f32 %v2966, %v3059
      %v3123 = vmax.f32 %v2967, %v3060
      %v3124 = vmax.f32 %v2968, %v3032
      %v3125 = vpack.c.bf16 %v3101, %v3093
      %v3126 = vpack.c.bf16 %v3102, %v3094
      %v3127 = vpack.c.bf16 %v3103, %v3095
      %v3128 = vpack.c.bf16 %v3104, %v3096
      %v3129 = vpack.c.bf16 %v3105, %v3097
      %v3130 = vpack.c.bf16 %v3106, %v3098
      %v3131 = vpack.c.bf16 %v3107, %v3099
      %v3132 = vpack.c.bf16 %v3108, %v3100
      %v3133 = vpack.c.bf16 %v3117, %v3109
      %v3134 = vpack.c.bf16 %v3118, %v3110
      %v3135 = vpack.c.bf16 %v3119, %v3111
      %v3136 = vpack.c.bf16 %v3120, %v3112
      %v3137 = vpack.c.bf16 %v3121, %v3113
      %v3138 = vpack.c.bf16 %v3122, %v3114
      %v3139 = vpack.c.bf16 %v3123, %v3115
      %v3140 = vpack.c.bf16 %v3124, %v3116
      %v3257 = vunpack.c.l.b16 %v560
      %v3258 = vunpack.c.h.b16 %v560
      %v3259 = vunpack.c.l.b16 %v561
      %v3260 = vunpack.c.h.b16 %v561
      %v3261 = vunpack.c.l.b16 %v562
      %v3262 = vunpack.c.h.b16 %v562
      %v3263 = vunpack.c.l.b16 %v563
      %v3264 = vunpack.c.h.b16 %v563
      %v3265 = vunpack.c.l.b16 %v564
      %v3266 = vunpack.c.h.b16 %v564
      %v3267 = vunpack.c.l.b16 %v565
      %v3268 = vunpack.c.h.b16 %v565
      %v3269 = vunpack.c.l.b16 %v566
      %v3270 = vunpack.c.h.b16 %v566
      %v3271 = vunpack.c.l.b16 %v567
      %v3272 = vunpack.c.h.b16 %v567
      %v3273 = vunpack.c.l.b16 %v568
      %v3274 = vunpack.c.h.b16 %v568
      %v3275 = vunpack.c.l.b16 %v569
      %v3276 = vunpack.c.h.b16 %v569
      %v3277 = vunpack.c.l.b16 %v570
      %v3278 = vunpack.c.h.b16 %v570
      %v3279 = vunpack.c.l.b16 %v571
      %v3280 = vunpack.c.h.b16 %v571
      %v3281 = vunpack.c.l.b16 %v572
      %v3282 = vunpack.c.h.b16 %v572
      %v3283 = vunpack.c.l.b16 %v573
      %v3284 = vunpack.c.h.b16 %v573
      %v3285 = vunpack.c.l.b16 %v574
      %v3286 = vunpack.c.h.b16 %v574
      %v3287 = vunpack.c.l.b16 %v575
      %v3288 = vunpack.c.h.b16 %v575
      %v3289 = vunpack.c.l.b16 %v576
      %v3290 = vunpack.c.h.b16 %v576
      %v3291 = vunpack.c.l.b16 %v577
      %v3292 = vunpack.c.h.b16 %v577
      %v3293 = vunpack.c.l.b16 %v578
      %v3294 = vunpack.c.h.b16 %v578
      %v3295 = vunpack.c.l.b16 %v579
      %v3296 = vunpack.c.h.b16 %v579
      %v3297 = vunpack.c.l.b16 %v580
      %v3298 = vunpack.c.h.b16 %v580
      %v3299 = vunpack.c.l.b16 %v581
      %v3300 = vunpack.c.h.b16 %v581
      %v3301 = vunpack.c.l.b16 %v582
      %v3302 = vunpack.c.h.b16 %v582
      %v3303 = vunpack.c.l.b16 %v583
      %v3304 = vunpack.c.h.b16 %v583
      %v3305 = vunpack.c.l.b16 %v584
      %v3306 = vunpack.c.h.b16 %v584
      %v3307 = vunpack.c.l.b16 %v585
      %v3308 = vunpack.c.h.b16 %v585
      %v3309 = vunpack.c.l.b16 %v586
      %v3310 = vunpack.c.h.b16 %v586
      %v3311 = vunpack.c.l.b16 %v587
      %v3312 = vunpack.c.h.b16 %v587
      %v3313 = vunpack.c.l.b16 %v588
      %v3314 = vunpack.c.h.b16 %v588
      %v3315 = vunpack.c.l.b16 %v589
      %v3316 = vunpack.c.h.b16 %v589
      %v3317 = vunpack.c.l.b16 %v590
      %v3318 = vunpack.c.h.b16 %v590
      %v3319 = vunpack.c.l.b16 %v591
      %v3320 = vunpack.c.h.b16 %v591
      %v3321 = vunpack.c.l.b16 %v592
      %v3322 = vunpack.c.h.b16 %v592
      %v3323 = vunpack.c.l.b16 %v593
      %v3324 = vunpack.c.h.b16 %v593
      %v3325 = vunpack.c.l.b16 %v594
      %v3326 = vunpack.c.h.b16 %v594
      %v3327 = vunpack.c.l.b16 %v595
      %v3328 = vunpack.c.h.b16 %v595
      %v3329 = vunpack.c.l.b16 %v596
      %v3330 = vunpack.c.h.b16 %v596
      %v3331 = vunpack.c.l.b16 %v597
      %v3332 = vunpack.c.h.b16 %v597
      %v3333 = vunpack.c.l.b16 %v598
      %v3334 = vunpack.c.h.b16 %v598
      %v3335 = vunpack.c.l.b16 %v599
      %v3336 = vunpack.c.h.b16 %v599
      %v3337 = vunpack.c.l.b16 %v600
      %v3338 = vunpack.c.h.b16 %v600
      %v3339 = vunpack.c.l.b16 %v601
      %v3340 = vunpack.c.h.b16 %v601
      %v3341 = vunpack.c.l.b16 %v602
      %v3342 = vunpack.c.h.b16 %v602
      %v3343 = vunpack.c.l.b16 %v603
      %v3344 = vunpack.c.h.b16 %v603
      %v3345 = vunpack.c.l.b16 %v604
      %v3346 = vunpack.c.h.b16 %v604
      %v3347 = vunpack.c.l.b16 %v605
      %v3348 = vunpack.c.h.b16 %v605
      %v3349 = vunpack.c.l.b16 %v606
      %v3350 = vunpack.c.h.b16 %v606
      %v3351 = vunpack.c.l.b16 %v607
      %v3352 = vunpack.c.h.b16 %v607
      %v3353 = vunpack.c.l.b16 %v608
      %v3354 = vunpack.c.h.b16 %v608
      %v3355 = vunpack.c.l.b16 %v609
      %v3356 = vunpack.c.h.b16 %v609
      %v3357 = vunpack.c.l.b16 %v610
      %v3358 = vunpack.c.h.b16 %v610
      %v3359 = vunpack.c.l.b16 %v611
      %v3360 = vunpack.c.h.b16 %v611
      %v3361 = vunpack.c.l.b16 %v612
      %v3362 = vunpack.c.h.b16 %v612
      %v3363 = vunpack.c.l.b16 %v613
      %v3364 = vunpack.c.h.b16 %v613
      %v3365 = vunpack.c.l.b16 %v614
      %v3366 = vunpack.c.h.b16 %v614
      %v3367 = vunpack.c.l.b16 %v615
      %v3368 = vunpack.c.h.b16 %v615
      %v3369 = vunpack.c.l.b16 %v616
      %v3370 = vunpack.c.h.b16 %v616
      %v3371 = vunpack.c.l.b16 %v617
      %v3372 = vunpack.c.h.b16 %v617
      %v3373 = vunpack.c.l.b16 %v618
      %v3374 = vunpack.c.h.b16 %v618
      %v3375 = vunpack.c.l.b16 %v619
      %v3376 = vunpack.c.h.b16 %v619
      %v3377 = vunpack.c.l.b16 %v620
      %v3378 = vunpack.c.h.b16 %v620
      %v3379 = vunpack.c.l.b16 %v621
      %v3380 = vunpack.c.h.b16 %v621
      %v3381 = vunpack.c.l.b16 %v622
      %v3382 = vunpack.c.h.b16 %v622
      %v3383 = vunpack.c.l.b16 %v623
      %v3384 = vunpack.c.h.b16 %v623
      %v3385 = vunpack.c.l.b16 %v624
      %v3386 = vunpack.c.h.b16 %v624
      %v3387 = vunpack.c.l.b16 %v625
      %v3388 = vunpack.c.h.b16 %v625
      %v3389 = vunpack.c.l.b16 %v626
      %v3390 = vunpack.c.h.b16 %v626
      %v3391 = vunpack.c.l.b16 %v627
      %v3392 = vunpack.c.h.b16 %v627
      %v3393 = vunpack.c.l.b16 %v628
      %v3394 = vunpack.c.h.b16 %v628
      %v3395 = vunpack.c.l.b16 %v629
      %v3396 = vunpack.c.h.b16 %v629
      %v3397 = vunpack.c.l.b16 %v630
      %v3398 = vunpack.c.h.b16 %v630
      %v3399 = vunpack.c.l.b16 %v631
      %v3400 = vunpack.c.h.b16 %v631
      %v3401 = vunpack.c.l.b16 %v632
      %v3402 = vunpack.c.h.b16 %v632
      %v3403 = vunpack.c.l.b16 %v633
      %v3404 = vunpack.c.h.b16 %v633
      %v3405 = vunpack.c.l.b16 %v634
      %v3406 = vunpack.c.h.b16 %v634
      %v3407 = vunpack.c.l.b16 %v635
      %v3408 = vunpack.c.h.b16 %v635
      %v3409 = vunpack.c.l.b16 %v636
      %v3410 = vunpack.c.h.b16 %v636
      %v3411 = vunpack.c.l.b16 %v637
      %v3412 = vunpack.c.h.b16 %v637
      %v3413 = vunpack.c.l.b16 %v638
      %v3414 = vunpack.c.h.b16 %v638
      %v3415 = vunpack.c.l.b16 %v639
      %v3416 = vunpack.c.h.b16 %v639
      %v3417 = vunpack.c.l.b16 %v640
      %v3418 = vunpack.c.h.b16 %v640
      %v3419 = vunpack.c.l.b16 %v641
      %v3420 = vunpack.c.h.b16 %v641
      %v3421 = vunpack.c.l.b16 %v642
      %v3422 = vunpack.c.h.b16 %v642
      %v3423 = vunpack.c.l.b16 %v643
      %v3424 = vunpack.c.h.b16 %v643
      %v3425 = vunpack.c.l.b16 %v644
      %v3426 = vunpack.c.h.b16 %v644
      %v3427 = vunpack.c.l.b16 %v645
      %v3428 = vunpack.c.h.b16 %v645
      %v3429 = vunpack.c.l.b16 %v646
      %v3430 = vunpack.c.h.b16 %v646
      %v3431 = vunpack.c.l.b16 %v647
      %v3432 = vunpack.c.h.b16 %v647
      %v3433 = vunpack.c.l.b16 %v648
      %v3434 = vunpack.c.h.b16 %v648
      %v3435 = vunpack.c.l.b16 %v649
      %v3436 = vunpack.c.h.b16 %v649
      %v3437 = vunpack.c.l.b16 %v650
      %v3438 = vunpack.c.h.b16 %v650
      %v3439 = vunpack.c.l.b16 %v651
      %v3440 = vunpack.c.h.b16 %v651
      %v3441 = vunpack.c.l.b16 %v652
      %v3442 = vunpack.c.h.b16 %v652
      %v3443 = vunpack.c.l.b16 %v653
      %v3444 = vunpack.c.h.b16 %v653
      %v3445 = vunpack.c.l.b16 %v654
      %v3446 = vunpack.c.h.b16 %v654
      %v3447 = vunpack.c.l.b16 %v655
      %v3448 = vunpack.c.h.b16 %v655
      %v3449 = vunpack.c.l.b16 %v656
      %v3450 = vunpack.c.h.b16 %v656
      %v3451 = vunpack.c.l.b16 %v657
      %v3452 = vunpack.c.h.b16 %v657
      %v3453 = vunpack.c.l.b16 %v658
      %v3454 = vunpack.c.h.b16 %v658
      %v3455 = vunpack.c.l.b16 %v659
      %v3456 = vunpack.c.h.b16 %v659
      %v3457 = vunpack.c.l.b16 %v660
      %v3458 = vunpack.c.h.b16 %v660
      %v3459 = vunpack.c.l.b16 %v661
      %v3460 = vunpack.c.h.b16 %v661
      %v3461 = vunpack.c.l.b16 %v662
      %v3462 = vunpack.c.h.b16 %v662
      %v3463 = vunpack.c.l.b16 %v663
      %v3464 = vunpack.c.h.b16 %v663
      %v3465 = vunpack.c.l.b16 %v664
      %v3466 = vunpack.c.h.b16 %v664
      %v3467 = vunpack.c.l.b16 %v665
      %v3468 = vunpack.c.h.b16 %v665
      %v3469 = vunpack.c.l.b16 %v666
      %v3470 = vunpack.c.h.b16 %v666
      %v3471 = vunpack.c.l.b16 %v667
      %v3472 = vunpack.c.h.b16 %v667
      %v3473 = vunpack.c.l.b16 %v668
      %v3474 = vunpack.c.h.b16 %v668
      %v3475 = vunpack.c.l.b16 %v669
      %v3476 = vunpack.c.h.b16 %v669
      %v3477 = vunpack.c.l.b16 %v670
      %v3478 = vunpack.c.h.b16 %v670
      %v3479 = vunpack.c.l.b16 %v671
      %v3480 = vunpack.c.h.b16 %v671
      %v3481 = vunpack.c.l.b16 %v672
      %v3482 = vunpack.c.h.b16 %v672
      %v3483 = vunpack.c.l.b16 %v673
      %v3484 = vunpack.c.h.b16 %v673
      %v3485 = vunpack.c.l.b16 %v674
      %v3486 = vunpack.c.h.b16 %v674
      %v3487 = vunpack.c.l.b16 %v675
      %v3488 = vunpack.c.h.b16 %v675
      %v3489 = vpack.c.b16 %v3259, %v3257
      %v3490 = vpack.c.b16 %v3260, %v3258
      %v3491 = vpack.c.b16 %v3263, %v3261
      %v3492 = vpack.c.b16 %v3264, %v3262
      %v3493 = vpack.c.b16 %v3267, %v3265
      %v3494 = vpack.c.b16 %v3268, %v3266
      %v3495 = vpack.c.b16 %v3271, %v3269
      %v3496 = vpack.c.b16 %v3272, %v3270
      %v3497 = vpack.c.b16 %v3275, %v3273
      %v3498 = vpack.c.b16 %v3276, %v3274
      %v3499 = vpack.c.b16 %v3279, %v3277
      %v3500 = vpack.c.b16 %v3280, %v3278
      %v3501 = vpack.c.b16 %v3283, %v3281
      %v3502 = vpack.c.b16 %v3284, %v3282
      %v3503 = vpack.c.b16 %v3287, %v3285
      %v3504 = vpack.c.b16 %v3288, %v3286
      %v3505 = vpack.c.b16 %v3291, %v3289
      %v3506 = vpack.c.b16 %v3292, %v3290
      %v3507 = vpack.c.b16 %v3295, %v3293
      %v3508 = vpack.c.b16 %v3296, %v3294
      %v3509 = vpack.c.b16 %v3299, %v3297
      %v3510 = vpack.c.b16 %v3300, %v3298
      %v3511 = vpack.c.b16 %v3303, %v3301
      %v3512 = vpack.c.b16 %v3304, %v3302
      %v3513 = vpack.c.b16 %v3307, %v3305
      %v3514 = vpack.c.b16 %v3308, %v3306
      %v3515 = vpack.c.b16 %v3311, %v3309
      %v3516 = vpack.c.b16 %v3312, %v3310
      %v3517 = vpack.c.b16 %v3315, %v3313
      %v3518 = vpack.c.b16 %v3316, %v3314
      %v3519 = vpack.c.b16 %v3319, %v3317
      %v3520 = vpack.c.b16 %v3320, %v3318
      %v3521 = vpack.c.b16 %v3323, %v3321
      %v3522 = vpack.c.b16 %v3324, %v3322
      %v3523 = vpack.c.b16 %v3327, %v3325
      %v3524 = vpack.c.b16 %v3328, %v3326
      %v3525 = vpack.c.b16 %v3331, %v3329
      %v3526 = vpack.c.b16 %v3332, %v3330
      %v3527 = vpack.c.b16 %v3335, %v3333
      %v3528 = vpack.c.b16 %v3336, %v3334
      %v3529 = vpack.c.b16 %v3339, %v3337
      %v3530 = vpack.c.b16 %v3340, %v3338
      %v3531 = vpack.c.b16 %v3343, %v3341
      %v3532 = vpack.c.b16 %v3344, %v3342
      %v3533 = vpack.c.b16 %v3347, %v3345
      %v3534 = vpack.c.b16 %v3348, %v3346
      %v3535 = vpack.c.b16 %v3351, %v3349
      %v3536 = vpack.c.b16 %v3352, %v3350
      %v3537 = vpack.c.b16 %v3355, %v3353
      %v3538 = vpack.c.b16 %v3356, %v3354
      %v3539 = vpack.c.b16 %v3359, %v3357
      %v3540 = vpack.c.b16 %v3360, %v3358
      %v3541 = vpack.c.b16 %v3363, %v3361
      %v3542 = vpack.c.b16 %v3364, %v3362
      %v3543 = vpack.c.b16 %v3367, %v3365
      %v3544 = vpack.c.b16 %v3368, %v3366
      %v3545 = vpack.c.b16 %v3371, %v3369
      %v3546 = vpack.c.b16 %v3372, %v3370
      %v3547 = vpack.c.b16 %v3375, %v3373
      %v3548 = vpack.c.b16 %v3376, %v3374
      %v3549 = vpack.c.b16 %v3379, %v3377
      %v3550 = vpack.c.b16 %v3380, %v3378
      %v3551 = vpack.c.b16 %v3383, %v3381
      %v3552 = vpack.c.b16 %v3384, %v3382
      %v3553 = vpack.c.b16 %v3387, %v3385
      %v3554 = vpack.c.b16 %v3388, %v3386
      %v3555 = vpack.c.b16 %v3391, %v3389
      %v3556 = vpack.c.b16 %v3392, %v3390
      %v3557 = vpack.c.b16 %v3395, %v3393
      %v3558 = vpack.c.b16 %v3396, %v3394
      %v3559 = vpack.c.b16 %v3399, %v3397
      %v3560 = vpack.c.b16 %v3400, %v3398
      %v3561 = vpack.c.b16 %v3403, %v3401
      %v3562 = vpack.c.b16 %v3404, %v3402
      %v3563 = vpack.c.b16 %v3407, %v3405
      %v3564 = vpack.c.b16 %v3408, %v3406
      %v3565 = vpack.c.b16 %v3411, %v3409
      %v3566 = vpack.c.b16 %v3412, %v3410
      %v3567 = vpack.c.b16 %v3415, %v3413
      %v3568 = vpack.c.b16 %v3416, %v3414
      %v3569 = vpack.c.b16 %v3419, %v3417
      %v3570 = vpack.c.b16 %v3420, %v3418
      %v3571 = vpack.c.b16 %v3423, %v3421
      %v3572 = vpack.c.b16 %v3424, %v3422
      %v3573 = vpack.c.b16 %v3427, %v3425
      %v3574 = vpack.c.b16 %v3428, %v3426
      %v3575 = vpack.c.b16 %v3431, %v3429
      %v3576 = vpack.c.b16 %v3432, %v3430
      %v3577 = vpack.c.b16 %v3435, %v3433
      %v3578 = vpack.c.b16 %v3436, %v3434
      %v3579 = vpack.c.b16 %v3439, %v3437
      %v3580 = vpack.c.b16 %v3440, %v3438
      %v3581 = vpack.c.b16 %v3443, %v3441
      %v3582 = vpack.c.b16 %v3444, %v3442
      %v3583 = vpack.c.b16 %v3447, %v3445
      %v3584 = vpack.c.b16 %v3448, %v3446
      %v3585 = vpack.c.b16 %v3451, %v3449
      %v3586 = vpack.c.b16 %v3452, %v3450
      %v3587 = vpack.c.b16 %v3455, %v3453
      %v3588 = vpack.c.b16 %v3456, %v3454
      %v3589 = vpack.c.b16 %v3459, %v3457
      %v3590 = vpack.c.b16 %v3460, %v3458
      %v3591 = vpack.c.b16 %v3463, %v3461
      %v3592 = vpack.c.b16 %v3464, %v3462
      %v3593 = vpack.c.b16 %v3467, %v3465
      %v3594 = vpack.c.b16 %v3468, %v3466
      %v3595 = vpack.c.b16 %v3471, %v3469
      %v3596 = vpack.c.b16 %v3472, %v3470
      %v3597 = vpack.c.b16 %v3475, %v3473
      %v3598 = vpack.c.b16 %v3476, %v3474
      %v3599 = vpack.c.b16 %v3479, %v3477
      %v3600 = vpack.c.b16 %v3480, %v3478
      %v3601 = vpack.c.b16 %v3483, %v3481
      %v3602 = vpack.c.b16 %v3484, %v3482
      %v3603 = vpack.c.b16 %v3487, %v3485
      %v3604 = vpack.c.b16 %v3488, %v3486
      %vm3719 = vcmask 236544
      %v3721 = vsel %vm3719, %v3132, 0
      %v3724 = vsel %vm3719, %v3140, 0
      %vm3726 = vcmask 1045504
      %vm3727 = vcmask 1046528
      %v3728 = vsel %vm3726, 4294967295, 65535
      %v3729 = vsel %vm3727, %v3728, 0
      %v3731 = vand.u32 %v3603, %v3729
      %v3734 = vand.u32 %v3604, %v3729
      %3736 = vmatprep.subr.bf16.mxu0 %v3490
      %3737 = vmatpush1.bf16.msra.mxu0 %v3489
      %3738 = vmatprep.subr.bf16.mxu0 %v3492
      %3739 = vmatpush1.bf16.msra.mxu0 %v3491
      %3740 = vmatprep.subr.bf16.mxu0 %v3494
      %3741 = vmatpush1.bf16.msra.mxu0 %v3493
      %3742 = vmatprep.subr.bf16.mxu0 %v3496
      %3743 = vmatpush1.bf16.msra.mxu0 %v3495
      %3744 = vmatprep.subr.bf16.mxu0 %v3498
      %3745 = vmatpush1.bf16.msra.mxu0 %v3497
      %3746 = vmatprep.subr.bf16.mxu0 %v3500
      %3747 = vmatpush1.bf16.msra.mxu0 %v3499
      %3748 = vmatprep.subr.bf16.mxu0 %v3502
      %3749 = vmatpush1.bf16.msra.mxu0 %v3501
      %3750 = vmatprep.subr.bf16.mxu0 %v3504
      %3751 = vmatpush1.bf16.msra.mxu0 %v3503
      %3752 = vmatprep.subr.bf16.mxu0 %v3506
      %3753 = vmatpush1.bf16.msra.mxu0 %v3505
      %3754 = vmatprep.subr.bf16.mxu0 %v3508
      %3755 = vmatpush1.bf16.msra.mxu0 %v3507
      %3756 = vmatprep.subr.bf16.mxu0 %v3510
      %3757 = vmatpush1.bf16.msra.mxu0 %v3509
      %3758 = vmatprep.subr.bf16.mxu0 %v3512
      %3759 = vmatpush1.bf16.msra.mxu0 %v3511
      %3760 = vmatprep.subr.bf16.mxu0 %v3514
      %3761 = vmatpush1.bf16.msra.mxu0 %v3513
      %3762 = vmatprep.subr.bf16.mxu0 %v3516
      %3763 = vmatpush1.bf16.msra.mxu0 %v3515
      %3764 = vmatprep.subr.bf16.mxu0 %v3518
      %3765 = vmatpush1.bf16.msra.mxu0 %v3517
      %3766 = vmatprep.subr.bf16.mxu0 %v3520
      %3767 = vmatpush1.bf16.msra.mxu0 %v3519
      %3768 = vmatprep.mubr.bf16.mxu0 %v3126
      %3769 = vmatmul.mubr.bf16.gmra.mrb[0].mxu0 %v3125
      %v3770 = vpop.f32.mrb[0].mxu0
      %v3771 = vadd.f32 0.0, %v3770
      %v3772 = vpop.f32.mrb[0].mxu0
      %v3773 = vadd.f32 0.0, %v3772
      %v3774 = vpop.f32.mrb[0].mxu0
      %v3775 = vadd.f32 0.0, %v3774
      %v3776 = vpop.f32.mrb[0].mxu0
      %v3777 = vadd.f32 0.0, %v3776
      %3778 = vmatprep.mubr.bf16.mxu0 %v3134
      %3779 = vmatmul.mubr.bf16.gmra.mrb[0].mxu0 %v3133
      %v3780 = vpop.f32.mrb[0].mxu0
      %v3781 = vadd.f32 0.0, %v3780
      %v3782 = vpop.f32.mrb[0].mxu0
      %v3783 = vadd.f32 0.0, %v3782
      %v3784 = vpop.f32.mrb[0].mxu0
      %v3785 = vadd.f32 0.0, %v3784
      %v3786 = vpop.f32.mrb[0].mxu0
      %v3787 = vadd.f32 0.0, %v3786
      %3788 = vdwg.mxu0
      %3789 = vmatprep.subr.bf16.mxu0 %v3522
      %3790 = vmatpush1.bf16.msra.mxu0 %v3521
      %3791 = vmatprep.subr.bf16.mxu0 %v3524
      %3792 = vmatpush1.bf16.msra.mxu0 %v3523
      %3793 = vmatprep.subr.bf16.mxu0 %v3526
      %3794 = vmatpush1.bf16.msra.mxu0 %v3525
      %3795 = vmatprep.subr.bf16.mxu0 %v3528
      %3796 = vmatpush1.bf16.msra.mxu0 %v3527
      %3797 = vmatprep.subr.bf16.mxu0 %v3530
      %3798 = vmatpush1.bf16.msra.mxu0 %v3529
      %3799 = vmatprep.subr.bf16.mxu0 %v3532
      %3800 = vmatpush1.bf16.msra.mxu0 %v3531
      %3801 = vmatprep.subr.bf16.mxu0 %v3534
      %3802 = vmatpush1.bf16.msra.mxu0 %v3533
      %3803 = vmatprep.subr.bf16.mxu0 %v3536
      %3804 = vmatpush1.bf16.msra.mxu0 %v3535
      %3805 = vmatprep.subr.bf16.mxu0 %v3538
      %3806 = vmatpush1.bf16.msra.mxu0 %v3537
      %3807 = vmatprep.subr.bf16.mxu0 %v3540
      %3808 = vmatpush1.bf16.msra.mxu0 %v3539
      %3809 = vmatprep.subr.bf16.mxu0 %v3542
      %3810 = vmatpush1.bf16.msra.mxu0 %v3541
      %3811 = vmatprep.subr.bf16.mxu0 %v3544
      %3812 = vmatpush1.bf16.msra.mxu0 %v3543
      %3813 = vmatprep.subr.bf16.mxu0 %v3546
      %3814 = vmatpush1.bf16.msra.mxu0 %v3545
      %3815 = vmatprep.subr.bf16.mxu0 %v3548
      %3816 = vmatpush1.bf16.msra.mxu0 %v3547
      %3817 = vmatprep.subr.bf16.mxu0 %v3550
      %3818 = vmatpush1.bf16.msra.mxu0 %v3549
      %3819 = vmatprep.subr.bf16.mxu0 %v3552
      %3820 = vmatpush1.bf16.msra.mxu0 %v3551
      %3821 = vmatprep.mubr.bf16.mxu0 %v3128
      %3822 = vmatmul.mubr.bf16.gmra.mrb[0].mxu0 %v3127
      %v3823 = vpop.f32.mrb[0].mxu0
      %v3824 = vadd.f32 %v3771, %v3823
      %v3825 = vpop.f32.mrb[0].mxu0
      %v3826 = vadd.f32 %v3773, %v3825
      %v3827 = vpop.f32.mrb[0].mxu0
      %v3828 = vadd.f32 %v3775, %v3827
      %v3829 = vpop.f32.mrb[0].mxu0
      %v3830 = vadd.f32 %v3777, %v3829
      %3831 = vmatprep.mubr.bf16.mxu0 %v3136
      %3832 = vmatmul.mubr.bf16.gmra.mrb[0].mxu0 %v3135
      %v3833 = vpop.f32.mrb[0].mxu0
      %v3834 = vadd.f32 %v3781, %v3833
      %v3835 = vpop.f32.mrb[0].mxu0
      %v3836 = vadd.f32 %v3783, %v3835
      %v3837 = vpop.f32.mrb[0].mxu0
      %v3838 = vadd.f32 %v3785, %v3837
      %v3839 = vpop.f32.mrb[0].mxu0
      %v3840 = vadd.f32 %v3787, %v3839
      %3841 = vdwg.mxu0
      %3842 = vmatprep.subr.bf16.mxu0 %v3554
      %3843 = vmatpush1.bf16.msra.mxu0 %v3553
      %3844 = vmatprep.subr.bf16.mxu0 %v3556
      %3845 = vmatpush1.bf16.msra.mxu0 %v3555
      %3846 = vmatprep.subr.bf16.mxu0 %v3558
      %3847 = vmatpush1.bf16.msra.mxu0 %v3557
      %3848 = vmatprep.subr.bf16.mxu0 %v3560
      %3849 = vmatpush1.bf16.msra.mxu0 %v3559
      %3850 = vmatprep.subr.bf16.mxu0 %v3562
      %3851 = vmatpush1.bf16.msra.mxu0 %v3561
      %3852 = vmatprep.subr.bf16.mxu0 %v3564
      %3853 = vmatpush1.bf16.msra.mxu0 %v3563
      %3854 = vmatprep.subr.bf16.mxu0 %v3566
      %3855 = vmatpush1.bf16.msra.mxu0 %v3565
      %3856 = vmatprep.subr.bf16.mxu0 %v3568
      %3857 = vmatpush1.bf16.msra.mxu0 %v3567
      %3858 = vmatprep.subr.bf16.mxu0 %v3570
      %3859 = vmatpush1.bf16.msra.mxu0 %v3569
      %3860 = vmatprep.subr.bf16.mxu0 %v3572
      %3861 = vmatpush1.bf16.msra.mxu0 %v3571
      %3862 = vmatprep.subr.bf16.mxu0 %v3574
      %3863 = vmatpush1.bf16.msra.mxu0 %v3573
      %3864 = vmatprep.subr.bf16.mxu0 %v3576
      %3865 = vmatpush1.bf16.msra.mxu0 %v3575
      %3866 = vmatprep.subr.bf16.mxu0 %v3578
      %3867 = vmatpush1.bf16.msra.mxu0 %v3577
      %3868 = vmatprep.subr.bf16.mxu0 %v3580
      %3869 = vmatpush1.bf16.msra.mxu0 %v3579
      %3870 = vmatprep.subr.bf16.mxu0 %v3582
      %3871 = vmatpush1.bf16.msra.mxu0 %v3581
      %3872 = vmatprep.subr.bf16.mxu0 %v3584
      %3873 = vmatpush1.bf16.msra.mxu0 %v3583
      %3874 = vmatprep.mubr.bf16.mxu0 %v3130
      %3875 = vmatmul.mubr.bf16.gmra.mrb[0].mxu0 %v3129
      %v3876 = vpop.f32.mrb[0].mxu0
      %v3877 = vadd.f32 %v3824, %v3876
      %v3878 = vpop.f32.mrb[0].mxu0
      %v3879 = vadd.f32 %v3826, %v3878
      %v3880 = vpop.f32.mrb[0].mxu0
      %v3881 = vadd.f32 %v3828, %v3880
      %v3882 = vpop.f32.mrb[0].mxu0
      %v3883 = vadd.f32 %v3830, %v3882
      %3884 = vmatprep.mubr.bf16.mxu0 %v3138
      %3885 = vmatmul.mubr.bf16.gmra.mrb[0].mxu0 %v3137
      %v3886 = vpop.f32.mrb[0].mxu0
      %v3887 = vadd.f32 %v3834, %v3886
      %v3888 = vpop.f32.mrb[0].mxu0
      %v3889 = vadd.f32 %v3836, %v3888
      %v3890 = vpop.f32.mrb[0].mxu0
      %v3891 = vadd.f32 %v3838, %v3890
      %v3892 = vpop.f32.mrb[0].mxu0
      %v3893 = vadd.f32 %v3840, %v3892
      %3894 = vdwg.mxu0
      %3895 = vmatprep.subr.bf16.mxu0 %v3586
      %3896 = vmatpush1.bf16.msra.mxu0 %v3585
      %3897 = vmatprep.subr.bf16.mxu0 %v3588
      %3898 = vmatpush1.bf16.msra.mxu0 %v3587
      %3899 = vmatprep.subr.bf16.mxu0 %v3590
      %3900 = vmatpush1.bf16.msra.mxu0 %v3589
      %3901 = vmatprep.subr.bf16.mxu0 %v3592
      %3902 = vmatpush1.bf16.msra.mxu0 %v3591
      %3903 = vmatprep.subr.bf16.mxu0 %v3594
      %3904 = vmatpush1.bf16.msra.mxu0 %v3593
      %3905 = vmatprep.subr.bf16.mxu0 %v3596
      %3906 = vmatpush1.bf16.msra.mxu0 %v3595
      %3907 = vmatprep.subr.bf16.mxu0 %v3598
      %3908 = vmatpush1.bf16.msra.mxu0 %v3597
      %3909 = vmatprep.subr.bf16.mxu0 %v3600
      %3910 = vmatpush1.bf16.msra.mxu0 %v3599
      %3911 = vmatprep.subr.bf16.mxu0 %v3602
      %3912 = vmatpush1.bf16.msra.mxu0 %v3601
      %3913 = vmatprep.subr.bf16.mxu0 %v3734
      %3914 = vmatpush1.bf16.msra.mxu0 %v3731
      %3915 = vmatprep.subr.bf16.mxu0 0
      %3916 = vmatpush1.bf16.msra.mxu0 0
      %3917 = vmatprep.subr.bf16.mxu0 0
      %3918 = vmatpush1.bf16.msra.mxu0 0
      %3919 = vmatprep.subr.bf16.mxu0 0
      %3920 = vmatpush1.bf16.msra.mxu0 0
      %3921 = vmatprep.subr.bf16.mxu0 0
      %3922 = vmatpush1.bf16.msra.mxu0 0
      %3923 = vmatprep.subr.bf16.mxu0 0
      %3924 = vmatpush1.bf16.msra.mxu0 0
      %3925 = vmatprep.subr.bf16.mxu0 0
      %3926 = vmatpush1.bf16.msra.mxu0 0
      %3927 = vmatprep.mubr.bf16.mxu0 %v3721
      %3928 = vmatmul.mubr.bf16.gmra.mrb[0].mxu0 %v3131
      %v3929 = vpop.f32.mrb[0].mxu0
      %v3930 = vadd.f32 %v3877, %v3929
      %v3931 = vpop.f32.mrb[0].mxu0
      %v3932 = vadd.f32 %v3879, %v3931
      %v3933 = vpop.f32.mrb[0].mxu0
      %v3934 = vadd.f32 %v3881, %v3933
      %v3935 = vpop.f32.mrb[0].mxu0
      %v3936 = vadd.f32 %v3883, %v3935
      %3937 = vmatprep.mubr.bf16.mxu0 %v3724
      %3938 = vmatmul.mubr.bf16.gmra.mrb[0].mxu0 %v3139
      %v3939 = vpop.f32.mrb[0].mxu0
      %v3940 = vadd.f32 %v3887, %v3939
      %v3941 = vpop.f32.mrb[0].mxu0
      %v3942 = vadd.f32 %v3889, %v3941
      %v3943 = vpop.f32.mrb[0].mxu0
      %v3944 = vadd.f32 %v3891, %v3943
      %v3945 = vpop.f32.mrb[0].mxu0
      %v3946 = vadd.f32 %v3893, %v3945
      %3947 = vdwg.mxu0
      %3949 = vset.pattern.permute.xlu0 0
      %3950 = vperm.xlu0 %3949, %v559
      %v3951 = vpop.permute.xlu0 %3950
      %v3953 = vadd.f32 %v3930, %v3951
      %v3954 = vadd.f32 %v3932, %v3951
      %v3955 = vadd.f32 %v3934, %v3951
      %v3956 = vadd.f32 %v3936, %v3951
      %v3957 = vadd.f32 %v3940, %v3951
      %v3958 = vadd.f32 %v3942, %v3951
      %v3959 = vadd.f32 %v3944, %v3951
      %v3960 = vadd.f32 %v3946, %v3951
      %vm3961 = vcmp.gt.f32.partialorder %v3953, 0.0
      %vm3962 = vcmp.gt.f32.partialorder %v3954, 0.0
      %vm3963 = vcmp.gt.f32.partialorder %v3955, 0.0
      %vm3964 = vcmp.gt.f32.partialorder %v3956, 0.0
      %vm3965 = vcmp.gt.f32.partialorder %v3957, 0.0
      %vm3966 = vcmp.gt.f32.partialorder %v3958, 0.0
      %vm3967 = vcmp.gt.f32.partialorder %v3959, 0.0
      %vm3968 = vcmp.gt.f32.partialorder %v3960, 0.0
      %v3969 = vmul.f32 %v3953, 0.1
      %v3970 = vmul.f32 %v3954, 0.1
      %v3971 = vmul.f32 %v3955, 0.1
      %v3972 = vmul.f32 %v3956, 0.1
      %v3973 = vmul.f32 %v3957, 0.1
      %v3974 = vmul.f32 %v3958, 0.1
      %v3975 = vmul.f32 %v3959, 0.1
      %v3976 = vmul.f32 %v3960, 0.1
      %v3977 = vsel %vm3961, %v3953, %v3969
      %v3978 = vsel %vm3962, %v3954, %v3970
      %v3979 = vsel %vm3963, %v3955, %v3971
      %v3980 = vsel %vm3964, %v3956, %v3972
      %v3981 = vsel %vm3965, %v3957, %v3973
      %v3982 = vsel %vm3966, %v3958, %v3974
      %v3983 = vsel %vm3967, %v3959, %v3975
      %v3984 = vsel %vm3968, %v3960, %v3976
      %v3985 = vld [vmem:[%s4] sm:$0xf]
      %v3986 = vld [vmem:[%s4 + $0x4] sm:$0xf]
      %v3987 = vld [vmem:[%s5] sm:$0xff]
      %v3988 = vld [vmem:[%s5 + $0x8] sm:$0xff]
      %v3989 = vld [vmem:[%s6] sm:$0xf]
      %v3990 = vld [vmem:[%s6 + $0x4] sm:$0xf]
      %v3991 = vld [vmem:[%s6 + $0x8] sm:$0xf]
      %v3992 = vld [vmem:[%s6 + $0xc] sm:$0xf]
      %v3993 = vld [vmem:[%s6 + $0x10] sm:$0xf]
      %v3994 = vld [vmem:[%s6 + $0x14] sm:$0xf]
      %v3995 = vld [vmem:[%s6 + $0x18] sm:$0xf]
      %v3996 = vld [vmem:[%s6 + $0x1c] sm:$0xf]
      %v3997 = vld [vmem:[%s6 + $0x20] sm:$0xf]
      %v3998 = vld [vmem:[%s6 + $0x24] sm:$0xf]
      %v3999 = vld [vmem:[%s6 + $0x28] sm:$0xf]
      %v4000 = vld [vmem:[%s6 + $0x2c] sm:$0xf]
      %v4001 = vld [vmem:[%s6 + $0x30] sm:$0xf]
      %v4002 = vld [vmem:[%s6 + $0x34] sm:$0xf]
      %v4003 = vld [vmem:[%s6 + $0x38] sm:$0xf]
      %v4004 = vld [vmem:[%s6 + $0x3c] sm:$0xf]
      %v4005 = vld [vmem:[%s6 + $0x40] sm:$0xf]
      %v4006 = vld [vmem:[%s6 + $0x44] sm:$0xf]
      %v4007 = vld [vmem:[%s6 + $0x48] sm:$0xf]
      %v4008 = vld [vmem:[%s6 + $0x4c] sm:$0xf]
      %v4009 = vld [vmem:[%s6 + $0x50] sm:$0xf]
      %v4010 = vld [vmem:[%s6 + $0x54] sm:$0xf]
      %v4011 = vld [vmem:[%s6 + $0x58] sm:$0x1]
      %4020 = vrot.lane.b32.xlu0 %v3977, 127
      %v4021 = vpop.permute.xlu0 %4020
      %4022 = vrot.lane.b32.xlu0 %v3978, 127
      %v4023 = vpop.permute.xlu0 %4022
      %4024 = vrot.lane.b32.xlu0 %v3979, 127
      %v4025 = vpop.permute.xlu0 %4024
      %4026 = vrot.lane.b32.xlu0 %v3980, 127
      %v4027 = vpop.permute.xlu0 %4026
      %4028 = vrot.lane.b32.xlu0 %v3981, 127
      %v4029 = vpop.permute.xlu0 %4028
      %4030 = vrot.lane.b32.xlu0 %v3982, 127
      %v4031 = vpop.permute.xlu0 %4030
      %4032 = vrot.lane.b32.xlu0 %v3983, 127
      %v4033 = vpop.permute.xlu0 %4032
      %4034 = vrot.lane.b32.xlu0 %v3984, 127
      %v4035 = vpop.permute.xlu0 %4034
      %v4036 = vsel %vm772, %v4021, %v4023
      %v4037 = vsel %vm772, %v4025, %v4027
      %v4038 = vsel %vm772, %v4029, %v4031
      %v4039 = vsel %vm772, %v4033, %v4035
      %4048 = vrot.lane.b32.xlu0 %v3977, 126
      %v4049 = vpop.permute.xlu0 %4048
      %4050 = vrot.lane.b32.xlu0 %v3978, 126
      %v4051 = vpop.permute.xlu0 %4050
      %4052 = vrot.lane.b32.xlu0 %v3979, 126
      %v4053 = vpop.permute.xlu0 %4052
      %4054 = vrot.lane.b32.xlu0 %v3980, 126
      %v4055 = vpop.permute.xlu0 %4054
      %4056 = vrot.lane.b32.xlu0 %v3981, 126
      %v4057 = vpop.permute.xlu0 %4056
      %4058 = vrot.lane.b32.xlu0 %v3982, 126
      %v4059 = vpop.permute.xlu0 %4058
      %4060 = vrot.lane.b32.xlu0 %v3983, 126
      %v4061 = vpop.permute.xlu0 %4060
      %4062 = vrot.lane.b32.xlu0 %v3984, 126
      %v4063 = vpop.permute.xlu0 %4062
      %v4064 = vsel %vm897, %v4049, %v4051
      %v4065 = vsel %vm897, %v4053, %v4055
      %v4066 = vsel %vm897, %v4057, %v4059
      %v4067 = vsel %vm897, %v4061, %v4063
      %4076 = vrot.lane.b32.xlu0 %v3977, 113
      %v4077 = vpop.permute.xlu0 %4076
      %4078 = vrot.lane.b32.xlu0 %v3978, 113
      %v4079 = vpop.permute.xlu0 %4078
      %4080 = vrot.lane.b32.xlu0 %v3979, 113
      %v4081 = vpop.permute.xlu0 %4080
      %4082 = vrot.lane.b32.xlu0 %v3980, 113
      %v4083 = vpop.permute.xlu0 %4082
      %4084 = vrot.lane.b32.xlu0 %v3981, 113
      %v4085 = vpop.permute.xlu0 %4084
      %4086 = vrot.lane.b32.xlu0 %v3982, 113
      %v4087 = vpop.permute.xlu0 %4086
      %4088 = vrot.lane.b32.xlu0 %v3983, 113
      %v4089 = vpop.permute.xlu0 %4088
      %4090 = vrot.lane.b32.xlu0 %v3984, 113
      %v4091 = vpop.permute.xlu0 %4090
      %vm4092 = vcmask 924672
      %v4093 = vsel %vm4092, %v4077, %v4079
      %v4094 = vsel %vm4092, %v4081, %v4083
      %v4095 = vsel %vm4092, %v4085, %v4087
      %v4096 = vsel %vm4092, %v4089, %v4091
      %4105 = vrot.lane.b32.xlu0 %v3977, 112
      %v4106 = vpop.permute.xlu0 %4105
      %4107 = vrot.lane.b32.xlu0 %v3978, 112
      %v4108 = vpop.permute.xlu0 %4107
      %4109 = vrot.lane.b32.xlu0 %v3979, 112
      %v4110 = vpop.permute.xlu0 %4109
      %4111 = vrot.lane.b32.xlu0 %v3980, 112
      %v4112 = vpop.permute.xlu0 %4111
      %4113 = vrot.lane.b32.xlu0 %v3981, 112
      %v4114 = vpop.permute.xlu0 %4113
      %4115 = vrot.lane.b32.xlu0 %v3982, 112
      %v4116 = vpop.permute.xlu0 %4115
      %4117 = vrot.lane.b32.xlu0 %v3983, 112
      %v4118 = vpop.permute.xlu0 %4117
      %4119 = vrot.lane.b32.xlu0 %v3984, 112
      %v4120 = vpop.permute.xlu0 %4119
      %vm4121 = vcmask 916480
      %v4122 = vsel %vm4121, %v4106, %v4108
      %v4123 = vsel %vm4121, %v4110, %v4112
      %v4124 = vsel %vm4121, %v4114, %v4116
      %v4125 = vsel %vm4121, %v4118, %v4120
      %4134 = vrot.lane.b32.xlu0 %v3977, 111
      %v4135 = vpop.permute.xlu0 %4134
      %4136 = vrot.lane.b32.xlu0 %v3978, 111
      %v4137 = vpop.permute.xlu0 %4136
      %4138 = vrot.lane.b32.xlu0 %v3979, 111
      %v4139 = vpop.permute.xlu0 %4138
      %4140 = vrot.lane.b32.xlu0 %v3980, 111
      %v4141 = vpop.permute.xlu0 %4140
      %4142 = vrot.lane.b32.xlu0 %v3981, 111
      %v4143 = vpop.permute.xlu0 %4142
      %4144 = vrot.lane.b32.xlu0 %v3982, 111
      %v4145 = vpop.permute.xlu0 %4144
      %4146 = vrot.lane.b32.xlu0 %v3983, 111
      %v4147 = vpop.permute.xlu0 %4146
      %4148 = vrot.lane.b32.xlu0 %v3984, 111
      %v4149 = vpop.permute.xlu0 %4148
      %vm4150 = vcmask 908288
      %v4151 = vsel %vm4150, %v4135, %v4137
      %v4152 = vsel %vm4150, %v4139, %v4141
      %v4153 = vsel %vm4150, %v4143, %v4145
      %v4154 = vsel %vm4150, %v4147, %v4149
      %4163 = vrot.lane.b32.xlu0 %v3977, 98
      %v4164 = vpop.permute.xlu0 %4163
      %4165 = vrot.lane.b32.xlu0 %v3978, 98
      %v4166 = vpop.permute.xlu0 %4165
      %4167 = vrot.lane.b32.xlu0 %v3979, 98
      %v4168 = vpop.permute.xlu0 %4167
      %4169 = vrot.lane.b32.xlu0 %v3980, 98
      %v4170 = vpop.permute.xlu0 %4169
      %4171 = vrot.lane.b32.xlu0 %v3981, 98
      %v4172 = vpop.permute.xlu0 %4171
      %4173 = vrot.lane.b32.xlu0 %v3982, 98
      %v4174 = vpop.permute.xlu0 %4173
      %4175 = vrot.lane.b32.xlu0 %v3983, 98
      %v4176 = vpop.permute.xlu0 %4175
      %4177 = vrot.lane.b32.xlu0 %v3984, 98
      %v4178 = vpop.permute.xlu0 %4177
      %vm4179 = vcmask 801792
      %v4180 = vsel %vm4179, %v4164, %v4166
      %v4181 = vsel %vm4179, %v4168, %v4170
      %v4182 = vsel %vm4179, %v4172, %v4174
      %v4183 = vsel %vm4179, %v4176, %v4178
      %4192 = vrot.lane.b32.xlu0 %v3977, 97
      %v4193 = vpop.permute.xlu0 %4192
      %4194 = vrot.lane.b32.xlu0 %v3978, 97
      %v4195 = vpop.permute.xlu0 %4194
      %4196 = vrot.lane.b32.xlu0 %v3979, 97
      %v4197 = vpop.permute.xlu0 %4196
      %4198 = vrot.lane.b32.xlu0 %v3980, 97
      %v4199 = vpop.permute.xlu0 %4198
      %4200 = vrot.lane.b32.xlu0 %v3981, 97
      %v4201 = vpop.permute.xlu0 %4200
      %4202 = vrot.lane.b32.xlu0 %v3982, 97
      %v4203 = vpop.permute.xlu0 %4202
      %4204 = vrot.lane.b32.xlu0 %v3983, 97
      %v4205 = vpop.permute.xlu0 %4204
      %4206 = vrot.lane.b32.xlu0 %v3984, 97
      %v4207 = vpop.permute.xlu0 %4206
      %vm4208 = vcmask 793600
      %v4209 = vsel %vm4208, %v4193, %v4195
      %v4210 = vsel %vm4208, %v4197, %v4199
      %v4211 = vsel %vm4208, %v4201, %v4203
      %v4212 = vsel %vm4208, %v4205, %v4207
      %4221 = vrot.lane.b32.xlu0 %v3977, 96
      %v4222 = vpop.permute.xlu0 %4221
      %4223 = vrot.lane.b32.xlu0 %v3978, 96
      %v4224 = vpop.permute.xlu0 %4223
      %4225 = vrot.lane.b32.xlu0 %v3979, 96
      %v4226 = vpop.permute.xlu0 %4225
      %4227 = vrot.lane.b32.xlu0 %v3980, 96
      %v4228 = vpop.permute.xlu0 %4227
      %4229 = vrot.lane.b32.xlu0 %v3981, 96
      %v4230 = vpop.permute.xlu0 %4229
      %4231 = vrot.lane.b32.xlu0 %v3982, 96
      %v4232 = vpop.permute.xlu0 %4231
      %4233 = vrot.lane.b32.xlu0 %v3983, 96
      %v4234 = vpop.permute.xlu0 %4233
      %4235 = vrot.lane.b32.xlu0 %v3984, 96
      %v4236 = vpop.permute.xlu0 %4235
      %v4237 = vsel %vm1022, %v4222, %v4224
      %v4238 = vsel %vm1022, %v4226, %v4228
      %v4239 = vsel %vm1022, %v4230, %v4232
      %v4240 = vsel %vm1022, %v4234, %v4236
      %v4249 = vpack.c.bf16 %v4036, %v3977
      %v4250 = vpack.c.bf16 %v4023, %v3978
      %v4251 = vpack.c.bf16 %v4093, %v4064
      %v4252 = vpack.c.bf16 %v4079, %v4051
      %v4253 = vpack.c.bf16 %v4151, %v4122
      %v4254 = vpack.c.bf16 %v4137, %v4108
      %v4255 = vpack.c.bf16 %v4209, %v4180
      %v4256 = vpack.c.bf16 %v4195, %v4166
      %v4257 = vpack.c.bf16 %v4237, %v4237
      %v4258 = vpack.c.bf16 %v4224, %v4224
      %v4259 = vpack.c.bf16 %v4037, %v3979
      %v4260 = vpack.c.bf16 %v4027, %v3980
      %v4261 = vpack.c.bf16 %v4094, %v4065
      %v4262 = vpack.c.bf16 %v4083, %v4055
      %v4263 = vpack.c.bf16 %v4152, %v4123
      %v4264 = vpack.c.bf16 %v4141, %v4112
      %v4265 = vpack.c.bf16 %v4210, %v4181
      %v4266 = vpack.c.bf16 %v4199, %v4170
      %v4267 = vpack.c.bf16 %v4238, %v4238
      %v4268 = vpack.c.bf16 %v4228, %v4228
      %v4269 = vpack.c.bf16 %v4038, %v3981
      %v4270 = vpack.c.bf16 %v4031, %v3982
      %v4271 = vpack.c.bf16 %v4095, %v4066
      %v4272 = vpack.c.bf16 %v4087, %v4059
      %v4273 = vpack.c.bf16 %v4153, %v4124
      %v4274 = vpack.c.bf16 %v4145, %v4116
      %v4275 = vpack.c.bf16 %v4211, %v4182
      %v4276 = vpack.c.bf16 %v4203, %v4174
      %v4277 = vpack.c.bf16 %v4239, %v4239
      %v4278 = vpack.c.bf16 %v4232, %v4232
      %v4279 = vpack.c.bf16 %v4039, %v3983
      %v4280 = vpack.c.bf16 %v4035, %v3984
      %v4281 = vpack.c.bf16 %v4096, %v4067
      %v4282 = vpack.c.bf16 %v4091, %v4063
      %v4283 = vpack.c.bf16 %v4154, %v4125
      %v4284 = vpack.c.bf16 %v4149, %v4120
      %v4285 = vpack.c.bf16 %v4212, %v4183
      %v4286 = vpack.c.bf16 %v4207, %v4178
      %v4287 = vpack.c.bf16 %v4240, %v4240
      %v4288 = vpack.c.bf16 %v4236, %v4236
      %v4291 = vunpack.c.l.b16 %v3985
      %v4292 = vunpack.c.l.b16 %v3986
      %v4293 = vpack.c.b16 %v4292, %v4291
      %v4295 = vsel %vm1868, %v4293, 0
      %v4298 = vsel %vm1872, %v4257, 0
      %v4301 = vsel %vm1872, %v4258, 0
      %4303 = vmatprep.subr.bf16.mxu0 %v4250
      %4304 = vmatpush1.bf16.msra.mxu0 %v4249
      %4305 = vmatprep.subr.bf16.mxu0 %v4252
      %4306 = vmatpush1.bf16.msra.mxu0 %v4251
      %4307 = vmatprep.subr.bf16.mxu0 %v4254
      %4308 = vmatpush1.bf16.msra.mxu0 %v4253
      %4309 = vmatprep.subr.bf16.mxu0 %v4256
      %4310 = vmatpush1.bf16.msra.mxu0 %v4255
      %4311 = vmatprep.subr.bf16.mxu0 %v4301
      %4312 = vmatpush1.bf16.msra.mxu0 %v4298
      %4313 = vmatprep.subr.bf16.mxu0 0
      %4314 = vmatpush1.bf16.msra.mxu0 0
      %4315 = vmatprep.subr.bf16.mxu0 0
      %4316 = vmatpush1.bf16.msra.mxu0 0
      %4317 = vmatprep.subr.bf16.mxu0 0
      %4318 = vmatpush1.bf16.msra.mxu0 0
      %4319 = vmatprep.subr.bf16.mxu0 0
      %4320 = vmatpush1.bf16.msra.mxu0 0
      %4321 = vmatprep.subr.bf16.mxu0 0
      %4322 = vmatpush1.bf16.msra.mxu0 0
      %4323 = vmatprep.subr.bf16.mxu0 0
      %4324 = vmatpush1.bf16.msra.mxu0 0
      %4325 = vmatprep.subr.bf16.mxu0 0
      %4326 = vmatpush1.bf16.msra.mxu0 0
      %4327 = vmatprep.subr.bf16.mxu0 0
      %4328 = vmatpush1.bf16.msra.mxu0 0
      %4329 = vmatprep.subr.bf16.mxu0 0
      %4330 = vmatpush1.bf16.msra.mxu0 0
      %4331 = vmatprep.subr.bf16.mxu0 0
      %4332 = vmatpush1.bf16.msra.mxu0 0
      %4333 = vmatprep.subr.bf16.mxu0 0
      %4334 = vmatpush1.bf16.msra.mxu0 0
      %4335 = vmatprep.mubr.bf16.mxu0 0
      %4336 = vmatmul.mubr.bf16.gmra.mrb[0].mxu0 %v4295
      %v4337 = vpop.f32.mrb[0].mxu0
      %v4338 = vadd.f32 0.0, %v4337
      %v4339 = vpop.f32.mrb[0].mxu0
      %v4340 = vadd.f32 0.0, %v4339
      %v4341 = vpop.f32.mrb[0].mxu0
      %v4342 = vadd.f32 0.0, %v4341
      %v4343 = vpop.f32.mrb[0].mxu0
      %v4344 = vadd.f32 0.0, %v4343
      %4345 = vdwg.mxu0
      %v4347 = vsel %vm1872, %v4267, 0
      %v4350 = vsel %vm1872, %v4268, 0
      %4352 = vmatprep.subr.bf16.mxu0 %v4260
      %4353 = vmatpush1.bf16.msra.mxu0 %v4259
      %4354 = vmatprep.subr.bf16.mxu0 %v4262
      %4355 = vmatpush1.bf16.msra.mxu0 %v4261
      %4356 = vmatprep.subr.bf16.mxu0 %v4264
      %4357 = vmatpush1.bf16.msra.mxu0 %v4263
      %4358 = vmatprep.subr.bf16.mxu0 %v4266
      %4359 = vmatpush1.bf16.msra.mxu0 %v4265
      %4360 = vmatprep.subr.bf16.mxu0 %v4350
      %4361 = vmatpush1.bf16.msra.mxu0 %v4347
      %4362 = vmatprep.subr.bf16.mxu0 0
      %4363 = vmatpush1.bf16.msra.mxu0 0
      %4364 = vmatprep.subr.bf16.mxu0 0
      %4365 = vmatpush1.bf16.msra.mxu0 0
      %4366 = vmatprep.subr.bf16.mxu0 0
      %4367 = vmatpush1.bf16.msra.mxu0 0
      %4368 = vmatprep.subr.bf16.mxu0 0
      %4369 = vmatpush1.bf16.msra.mxu0 0
      %4370 = vmatprep.subr.bf16.mxu0 0
      %4371 = vmatpush1.bf16.msra.mxu0 0
      %4372 = vmatprep.subr.bf16.mxu0 0
      %4373 = vmatpush1.bf16.msra.mxu0 0
      %4374 = vmatprep.subr.bf16.mxu0 0
      %4375 = vmatpush1.bf16.msra.mxu0 0
      %4376 = vmatprep.subr.bf16.mxu0 0
      %4377 = vmatpush1.bf16.msra.mxu0 0
      %4378 = vmatprep.subr.bf16.mxu0 0
      %4379 = vmatpush1.bf16.msra.mxu0 0
      %4380 = vmatprep.subr.bf16.mxu0 0
      %4381 = vmatpush1.bf16.msra.mxu0 0
      %4382 = vmatprep.subr.bf16.mxu0 0
      %4383 = vmatpush1.bf16.msra.mxu0 0
      %4384 = vmatprep.mubr.bf16.mxu0 0
      %4385 = vmatmul.mubr.bf16.gmra.mrb[0].mxu0 %v4295
      %v4386 = vpop.f32.mrb[0].mxu0
      %v4387 = vadd.f32 0.0, %v4386
      %v4388 = vpop.f32.mrb[0].mxu0
      %v4389 = vadd.f32 0.0, %v4388
      %v4390 = vpop.f32.mrb[0].mxu0
      %v4391 = vadd.f32 0.0, %v4390
      %v4392 = vpop.f32.mrb[0].mxu0
      %v4393 = vadd.f32 0.0, %v4392
      %4394 = vdwg.mxu0
      %v4396 = vsel %vm1872, %v4277, 0
      %v4399 = vsel %vm1872, %v4278, 0
      %4401 = vmatprep.subr.bf16.mxu0 %v4270
      %4402 = vmatpush1.bf16.msra.mxu0 %v4269
      %4403 = vmatprep.subr.bf16.mxu0 %v4272
      %4404 = vmatpush1.bf16.msra.mxu0 %v4271
      %4405 = vmatprep.subr.bf16.mxu0 %v4274
      %4406 = vmatpush1.bf16.msra.mxu0 %v4273
      %4407 = vmatprep.subr.bf16.mxu0 %v4276
      %4408 = vmatpush1.bf16.msra.mxu0 %v4275
      %4409 = vmatprep.subr.bf16.mxu0 %v4399
      %4410 = vmatpush1.bf16.msra.mxu0 %v4396
      %4411 = vmatprep.subr.bf16.mxu0 0
      %4412 = vmatpush1.bf16.msra.mxu0 0
      %4413 = vmatprep.subr.bf16.mxu0 0
      %4414 = vmatpush1.bf16.msra.mxu0 0
      %4415 = vmatprep.subr.bf16.mxu0 0
      %4416 = vmatpush1.bf16.msra.mxu0 0
      %4417 = vmatprep.subr.bf16.mxu0 0
      %4418 = vmatpush1.bf16.msra.mxu0 0
      %4419 = vmatprep.subr.bf16.mxu0 0
      %4420 = vmatpush1.bf16.msra.mxu0 0
      %4421 = vmatprep.subr.bf16.mxu0 0
      %4422 = vmatpush1.bf16.msra.mxu0 0
      %4423 = vmatprep.subr.bf16.mxu0 0
      %4424 = vmatpush1.bf16.msra.mxu0 0
      %4425 = vmatprep.subr.bf16.mxu0 0
      %4426 = vmatpush1.bf16.msra.mxu0 0
      %4427 = vmatprep.subr.bf16.mxu0 0
      %4428 = vmatpush1.bf16.msra.mxu0 0
      %4429 = vmatprep.subr.bf16.mxu0 0
      %4430 = vmatpush1.bf16.msra.mxu0 0
      %4431 = vmatprep.subr.bf16.mxu0 0
      %4432 = vmatpush1.bf16.msra.mxu0 0
      %4433 = vmatprep.mubr.bf16.mxu0 0
      %4434 = vmatmul.mubr.bf16.gmra.mrb[0].mxu0 %v4295
      %v4435 = vpop.f32.mrb[0].mxu0
      %v4436 = vadd.f32 0.0, %v4435
      %v4437 = vpop.f32.mrb[0].mxu0
      %v4438 = vadd.f32 0.0, %v4437
      %v4439 = vpop.f32.mrb[0].mxu0
      %v4440 = vadd.f32 0.0, %v4439
      %v4441 = vpop.f32.mrb[0].mxu0
      %v4442 = vadd.f32 0.0, %v4441
      %4443 = vdwg.mxu0
      %v4445 = vsel %vm1872, %v4287, 0
      %v4448 = vsel %vm1872, %v4288, 0
      %4450 = vmatprep.subr.bf16.mxu0 %v4280
      %4451 = vmatpush1.bf16.msra.mxu0 %v4279
      %4452 = vmatprep.subr.bf16.mxu0 %v4282
      %4453 = vmatpush1.bf16.msra.mxu0 %v4281
      %4454 = vmatprep.subr.bf16.mxu0 %v4284
      %4455 = vmatpush1.bf16.msra.mxu0 %v4283
      %4456 = vmatprep.subr.bf16.mxu0 %v4286
      %4457 = vmatpush1.bf16.msra.mxu0 %v4285
      %4458 = vmatprep.subr.bf16.mxu0 %v4448
      %4459 = vmatpush1.bf16.msra.mxu0 %v4445
      %4460 = vmatprep.subr.bf16.mxu0 0
      %4461 = vmatpush1.bf16.msra.mxu0 0
      %4462 = vmatprep.subr.bf16.mxu0 0
      %4463 = vmatpush1.bf16.msra.mxu0 0
      %4464 = vmatprep.subr.bf16.mxu0 0
      %4465 = vmatpush1.bf16.msra.mxu0 0
      %4466 = vmatprep.subr.bf16.mxu0 0
      %4467 = vmatpush1.bf16.msra.mxu0 0
      %4468 = vmatprep.subr.bf16.mxu0 0
      %4469 = vmatpush1.bf16.msra.mxu0 0
      %4470 = vmatprep.subr.bf16.mxu0 0
      %4471 = vmatpush1.bf16.msra.mxu0 0
      %4472 = vmatprep.subr.bf16.mxu0 0
      %4473 = vmatpush1.bf16.msra.mxu0 0
      %4474 = vmatprep.subr.bf16.mxu0 0
      %4475 = vmatpush1.bf16.msra.mxu0 0
      %4476 = vmatprep.subr.bf16.mxu0 0
      %4477 = vmatpush1.bf16.msra.mxu0 0
      %4478 = vmatprep.subr.bf16.mxu0 0
      %4479 = vmatpush1.bf16.msra.mxu0 0
      %4480 = vmatprep.subr.bf16.mxu0 0
      %4481 = vmatpush1.bf16.msra.mxu0 0
      %4482 = vmatprep.mubr.bf16.mxu0 0
      %4483 = vmatmul.mubr.bf16.gmra.mrb[0].mxu0 %v4295
      %v4484 = vpop.f32.mrb[0].mxu0
      %v4485 = vadd.f32 0.0, %v4484
      %v4486 = vpop.f32.mrb[0].mxu0
      %v4487 = vadd.f32 0.0, %v4486
      %v4488 = vpop.f32.mrb[0].mxu0
      %v4489 = vadd.f32 0.0, %v4488
      %v4490 = vpop.f32.mrb[0].mxu0
      %v4491 = vadd.f32 0.0, %v4490
      %4492 = vdwg.mxu0
      %4509 = vrot.lane.b32.xlu0 %v4338, 127
      %v4510 = vpop.permute.xlu0 %4509
      %4511 = vrot.lane.b32.xlu0 %v4340, 127
      %v4512 = vpop.permute.xlu0 %4511
      %4513 = vrot.lane.b32.xlu0 %v4342, 127
      %v4514 = vpop.permute.xlu0 %4513
      %4515 = vrot.lane.b32.xlu0 %v4344, 127
      %v4516 = vpop.permute.xlu0 %4515
      %4517 = vrot.lane.b32.xlu0 %v4387, 127
      %v4518 = vpop.permute.xlu0 %4517
      %4519 = vrot.lane.b32.xlu0 %v4389, 127
      %v4520 = vpop.permute.xlu0 %4519
      %4521 = vrot.lane.b32.xlu0 %v4391, 127
      %v4522 = vpop.permute.xlu0 %4521
      %4523 = vrot.lane.b32.xlu0 %v4393, 127
      %v4524 = vpop.permute.xlu0 %4523
      %4525 = vrot.lane.b32.xlu0 %v4436, 127
      %v4526 = vpop.permute.xlu0 %4525
      %4527 = vrot.lane.b32.xlu0 %v4438, 127
      %v4528 = vpop.permute.xlu0 %4527
      %4529 = vrot.lane.b32.xlu0 %v4440, 127
      %v4530 = vpop.permute.xlu0 %4529
      %4531 = vrot.lane.b32.xlu0 %v4442, 127
      %v4532 = vpop.permute.xlu0 %4531
      %4533 = vrot.lane.b32.xlu0 %v4485, 127
      %v4534 = vpop.permute.xlu0 %4533
      %4535 = vrot.lane.b32.xlu0 %v4487, 127
      %v4536 = vpop.permute.xlu0 %4535
      %4537 = vrot.lane.b32.xlu0 %v4489, 127
      %v4538 = vpop.permute.xlu0 %4537
      %4539 = vrot.lane.b32.xlu0 %v4491, 127
      %v4540 = vpop.permute.xlu0 %4539
      %v4541 = vsel %vm772, %v4510, %v4512
      %v4542 = vsel %vm772, %v4514, %v4516
      %v4543 = vsel %vm772, %v4518, %v4520
      %v4544 = vsel %vm772, %v4522, %v4524
      %v4545 = vsel %vm772, %v4526, %v4528
      %v4546 = vsel %vm772, %v4530, %v4532
      %v4547 = vsel %vm772, %v4534, %v4536
      %v4548 = vsel %vm772, %v4538, %v4540
      %v4565 = vmax.f32 %v4338, %v4541
      %v4566 = vmax.f32 %v4340, %v4512
      %v4567 = vmax.f32 %v4342, %v4542
      %v4568 = vmax.f32 %v4344, %v4516
      %v4569 = vmax.f32 %v4387, %v4543
      %v4570 = vmax.f32 %v4389, %v4520
      %v4571 = vmax.f32 %v4391, %v4544
      %v4572 = vmax.f32 %v4393, %v4524
      %v4573 = vmax.f32 %v4436, %v4545
      %v4574 = vmax.f32 %v4438, %v4528
      %v4575 = vmax.f32 %v4440, %v4546
      %v4576 = vmax.f32 %v4442, %v4532
      %v4577 = vmax.f32 %v4485, %v4547
      %v4578 = vmax.f32 %v4487, %v4536
      %v4579 = vmax.f32 %v4489, %v4548
      %v4580 = vmax.f32 %v4491, %v4540
      %4581 = vrot.lane.b32.xlu0 %v4338, 113
      %v4582 = vpop.permute.xlu0 %4581
      %4583 = vrot.lane.b32.xlu0 %v4340, 113
      %v4584 = vpop.permute.xlu0 %4583
      %4585 = vrot.lane.b32.xlu0 %v4342, 113
      %v4586 = vpop.permute.xlu0 %4585
      %4587 = vrot.lane.b32.xlu0 %v4344, 113
      %v4588 = vpop.permute.xlu0 %4587
      %4589 = vrot.lane.b32.xlu0 %v4387, 113
      %v4590 = vpop.permute.xlu0 %4589
      %4591 = vrot.lane.b32.xlu0 %v4389, 113
      %v4592 = vpop.permute.xlu0 %4591
      %4593 = vrot.lane.b32.xlu0 %v4391, 113
      %v4594 = vpop.permute.xlu0 %4593
      %4595 = vrot.lane.b32.xlu0 %v4393, 113
      %v4596 = vpop.permute.xlu0 %4595
      %4597 = vrot.lane.b32.xlu0 %v4436, 113
      %v4598 = vpop.permute.xlu0 %4597
      %4599 = vrot.lane.b32.xlu0 %v4438, 113
      %v4600 = vpop.permute.xlu0 %4599
      %4601 = vrot.lane.b32.xlu0 %v4440, 113
      %v4602 = vpop.permute.xlu0 %4601
      %4603 = vrot.lane.b32.xlu0 %v4442, 113
      %v4604 = vpop.permute.xlu0 %4603
      %4605 = vrot.lane.b32.xlu0 %v4485, 113
      %v4606 = vpop.permute.xlu0 %4605
      %4607 = vrot.lane.b32.xlu0 %v4487, 113
      %v4608 = vpop.permute.xlu0 %4607
      %4609 = vrot.lane.b32.xlu0 %v4489, 113
      %v4610 = vpop.permute.xlu0 %4609
      %4611 = vrot.lane.b32.xlu0 %v4491, 113
      %v4612 = vpop.permute.xlu0 %4611
      %v4613 = vsel %vm4092, %v4582, %v4584
      %v4614 = vsel %vm4092, %v4586, %v4588
      %v4615 = vsel %vm4092, %v4590, %v4592
      %v4616 = vsel %vm4092, %v4594, %v4596
      %v4617 = vsel %vm4092, %v4598, %v4600
      %v4618 = vsel %vm4092, %v4602, %v4604
      %v4619 = vsel %vm4092, %v4606, %v4608
      %v4620 = vsel %vm4092, %v4610, %v4612
      %v4637 = vmax.f32 %v4565, %v4613
      %v4638 = vmax.f32 %v4566, %v4584
      %v4639 = vmax.f32 %v4567, %v4614
      %v4640 = vmax.f32 %v4568, %v4588
      %v4641 = vmax.f32 %v4569, %v4615
      %v4642 = vmax.f32 %v4570, %v4592
      %v4643 = vmax.f32 %v4571, %v4616
      %v4644 = vmax.f32 %v4572, %v4596
      %v4645 = vmax.f32 %v4573, %v4617
      %v4646 = vmax.f32 %v4574, %v4600
      %v4647 = vmax.f32 %v4575, %v4618
      %v4648 = vmax.f32 %v4576, %v4604
      %v4649 = vmax.f32 %v4577, %v4619
      %v4650 = vmax.f32 %v4578, %v4608
      %v4651 = vmax.f32 %v4579, %v4620
      %v4652 = vmax.f32 %v4580, %v4612
      %4653 = vrot.lane.b32.xlu0 %v4338, 112
      %v4654 = vpop.permute.xlu0 %4653
      %4655 = vrot.lane.b32.xlu0 %v4340, 112
      %v4656 = vpop.permute.xlu0 %4655
      %4657 = vrot.lane.b32.xlu0 %v4342, 112
      %v4658 = vpop.permute.xlu0 %4657
      %4659 = vrot.lane.b32.xlu0 %v4344, 112
      %v4660 = vpop.permute.xlu0 %4659
      %4661 = vrot.lane.b32.xlu0 %v4387, 112
      %v4662 = vpop.permute.xlu0 %4661
      %4663 = vrot.lane.b32.xlu0 %v4389, 112
      %v4664 = vpop.permute.xlu0 %4663
      %4665 = vrot.lane.b32.xlu0 %v4391, 112
      %v4666 = vpop.permute.xlu0 %4665
      %4667 = vrot.lane.b32.xlu0 %v4393, 112
      %v4668 = vpop.permute.xlu0 %4667
      %4669 = vrot.lane.b32.xlu0 %v4436, 112
      %v4670 = vpop.permute.xlu0 %4669
      %4671 = vrot.lane.b32.xlu0 %v4438, 112
      %v4672 = vpop.permute.xlu0 %4671
      %4673 = vrot.lane.b32.xlu0 %v4440, 112
      %v4674 = vpop.permute.xlu0 %4673
      %4675 = vrot.lane.b32.xlu0 %v4442, 112
      %v4676 = vpop.permute.xlu0 %4675
      %4677 = vrot.lane.b32.xlu0 %v4485, 112
      %v4678 = vpop.permute.xlu0 %4677
      %4679 = vrot.lane.b32.xlu0 %v4487, 112
      %v4680 = vpop.permute.xlu0 %4679
      %4681 = vrot.lane.b32.xlu0 %v4489, 112
      %v4682 = vpop.permute.xlu0 %4681
      %4683 = vrot.lane.b32.xlu0 %v4491, 112
      %v4684 = vpop.permute.xlu0 %4683
      %v4685 = vsel %vm4121, %v4654, %v4656
      %v4686 = vsel %vm4121, %v4658, %v4660
      %v4687 = vsel %vm4121, %v4662, %v4664
      %v4688 = vsel %vm4121, %v4666, %v4668
      %v4689 = vsel %vm4121, %v4670, %v4672
      %v4690 = vsel %vm4121, %v4674, %v4676
      %v4691 = vsel %vm4121, %v4678, %v4680
      %v4692 = vsel %vm4121, %v4682, %v4684
      %v4709 = vmax.f32 %v4637, %v4685
      %v4710 = vmax.f32 %v4638, %v4656
      %v4711 = vmax.f32 %v4639, %v4686
      %v4712 = vmax.f32 %v4640, %v4660
      %v4713 = vmax.f32 %v4641, %v4687
      %v4714 = vmax.f32 %v4642, %v4664
      %v4715 = vmax.f32 %v4643, %v4688
      %v4716 = vmax.f32 %v4644, %v4668
      %v4717 = vmax.f32 %v4645, %v4689
      %v4718 = vmax.f32 %v4646, %v4672
      %v4719 = vmax.f32 %v4647, %v4690
      %v4720 = vmax.f32 %v4648, %v4676
      %v4721 = vmax.f32 %v4649, %v4691
      %v4722 = vmax.f32 %v4650, %v4680
      %v4723 = vmax.f32 %v4651, %v4692
      %v4724 = vmax.f32 %v4652, %v4684
      %v4725 = vpack.c.bf16 %v4711, %v4709
      %v4726 = vpack.c.bf16 %v4712, %v4710
      %v4727 = vpack.c.bf16 %v4715, %v4713
      %v4728 = vpack.c.bf16 %v4716, %v4714
      %v4729 = vpack.c.bf16 %v4719, %v4717
      %v4730 = vpack.c.bf16 %v4720, %v4718
      %v4731 = vpack.c.bf16 %v4723, %v4721
      %v4732 = vpack.c.bf16 %v4724, %v4722
      %v4756 = vunpack.c.l.b16 %v3989
      %v4757 = vunpack.c.l.b16 %v3990
      %v4758 = vunpack.c.l.b16 %v3991
      %v4759 = vunpack.c.l.b16 %v3992
      %v4760 = vunpack.c.l.b16 %v3993
      %v4761 = vunpack.c.l.b16 %v3994
      %v4762 = vunpack.c.l.b16 %v3995
      %v4763 = vunpack.c.l.b16 %v3996
      %v4764 = vunpack.c.l.b16 %v3997
      %v4765 = vunpack.c.l.b16 %v3998
      %v4766 = vunpack.c.l.b16 %v3999
      %v4767 = vunpack.c.l.b16 %v4000
      %v4768 = vunpack.c.l.b16 %v4001
      %v4769 = vunpack.c.l.b16 %v4002
      %v4770 = vunpack.c.l.b16 %v4003
      %v4771 = vunpack.c.l.b16 %v4004
      %v4772 = vunpack.c.l.b16 %v4005
      %v4773 = vunpack.c.l.b16 %v4006
      %v4774 = vunpack.c.l.b16 %v4007
      %v4775 = vunpack.c.l.b16 %v4008
      %v4776 = vunpack.c.l.b16 %v4009
      %v4777 = vunpack.c.l.b16 %v4010
      %v4778 = vunpack.c.l.b16 %v4011
      %v4779 = vpack.c.b16 %v4757, %v4756
      %v4780 = vpack.c.b16 %v4759, %v4758
      %v4781 = vpack.c.b16 %v4761, %v4760
      %v4782 = vpack.c.b16 %v4763, %v4762
      %v4783 = vpack.c.b16 %v4765, %v4764
      %v4784 = vpack.c.b16 %v4767, %v4766
      %v4785 = vpack.c.b16 %v4769, %v4768
      %v4786 = vpack.c.b16 %v4771, %v4770
      %v4787 = vpack.c.b16 %v4773, %v4772
      %v4788 = vpack.c.b16 %v4775, %v4774
      %v4789 = vpack.c.b16 %v4777, %v4776
      %v4790 = vpack.c.b16 %v4778, %v4778
      %vm4802 = vcmask 400384
      %v4804 = vsel %vm4802, %v4726, 0
      %v4807 = vsel %vm4802, %v4728, 0
      %v4810 = vsel %vm4802, %v4730, 0
      %v4813 = vsel %vm4802, %v4732, 0
      %vm4815 = vcmask 1040384
      %v4816 = vsel 0, 4294967295, 65535
      %v4817 = vsel %vm4815, %v4816, 0
      %v4819 = vand.u32 %v4790, %v4817
      %4821 = vmatprep.subr.bf16.mxu0 0
      %4822 = vmatpush1.bf16.msra.mxu0 %v4779
      %4823 = vmatprep.subr.bf16.mxu0 0
      %4824 = vmatpush1.bf16.msra.mxu0 %v4780
      %4825 = vmatprep.subr.bf16.mxu0 0
      %4826 = vmatpush1.bf16.msra.mxu0 %v4781
      %4827 = vmatprep.subr.bf16.mxu0 0
      %4828 = vmatpush1.bf16.msra.mxu0 %v4782
      %4829 = vmatprep.subr.bf16.mxu0 0
      %4830 = vmatpush1.bf16.msra.mxu0 %v4783
      %4831 = vmatprep.subr.bf16.mxu0 0
      %4832 = vmatpush1.bf16.msra.mxu0 %v4784
      %4833 = vmatprep.subr.bf16.mxu0 0
      %4834 = vmatpush1.bf16.msra.mxu0 %v4785
      %4835 = vmatprep.subr.bf16.mxu0 0
      %4836 = vmatpush1.bf16.msra.mxu0 %v4786
      %4837 = vmatprep.subr.bf16.mxu0 0
      %4838 = vmatpush1.bf16.msra.mxu0 %v4787
      %4839 = vmatprep.subr.bf16.mxu0 0
      %4840 = vmatpush1.bf16.msra.mxu0 %v4788
      %4841 = vmatprep.subr.bf16.mxu0 0
      %4842 = vmatpush1.bf16.msra.mxu0 %v4789
      %4843 = vmatprep.subr.bf16.mxu0 0
      %4844 = vmatpush1.bf16.msra.mxu0 %v4819
      %4845 = vmatprep.subr.bf16.mxu0 0
      %4846 = vmatpush1.bf16.msra.mxu0 0
      %4847 = vmatprep.subr.bf16.mxu0 0
      %4848 = vmatpush1.bf16.msra.mxu0 0
      %4849 = vmatprep.subr.bf16.mxu0 0
      %4850 = vmatpush1.bf16.msra.mxu0 0
      %4851 = vmatprep.subr.bf16.mxu0 0
      %4852 = vmatpush1.bf16.msra.mxu0 0
      %4853 = vmatprep.mubr.bf16.mxu0 %v4804
      %4854 = vmatmul.mubr.bf16.gmra.mrb[0].mxu0 %v4725
      %v4855 = vpop.f32.mrb[0].mxu0
      %v4856 = vadd.f32 0.0, %v4855
      %v4857 = vpop.f32.mrb[0].mxu0
      %v4858 = vpop.f32.mrb[0].mxu0
      %v4859 = vadd.f32 0.0, %v4858
      %v4860 = vpop.f32.mrb[0].mxu0
      %4861 = vmatprep.mubr.bf16.mxu0 %v4807
      %4862 = vmatmul.mubr.bf16.gmra.mrb[0].mxu0 %v4727
      %v4863 = vpop.f32.mrb[0].mxu0
      %v4864 = vadd.f32 0.0, %v4863
      %v4865 = vpop.f32.mrb[0].mxu0
      %v4866 = vpop.f32.mrb[0].mxu0
      %v4867 = vadd.f32 0.0, %v4866
      %v4868 = vpop.f32.mrb[0].mxu0
      %4869 = vmatprep.mubr.bf16.mxu0 %v4810
      %4870 = vmatmul.mubr.bf16.gmra.mrb[0].mxu0 %v4729
      %v4871 = vpop.f32.mrb[0].mxu0
      %v4872 = vadd.f32 0.0, %v4871
      %v4873 = vpop.f32.mrb[0].mxu0
      %v4874 = vpop.f32.mrb[0].mxu0
      %v4875 = vadd.f32 0.0, %v4874
      %v4876 = vpop.f32.mrb[0].mxu0
      %4877 = vmatprep.mubr.bf16.mxu0 %v4813
      %4878 = vmatmul.mubr.bf16.gmra.mrb[0].mxu0 %v4731
      %v4879 = vpop.f32.mrb[0].mxu0
      %v4880 = vadd.f32 0.0, %v4879
      %v4881 = vpop.f32.mrb[0].mxu0
      %v4882 = vpop.f32.mrb[0].mxu0
      %v4883 = vadd.f32 0.0, %v4882
      %v4884 = vpop.f32.mrb[0].mxu0
      %4885 = vdwg.mxu0
      %4887 = vset.pattern.permute.xlu0 0
      %4888 = vperm.xlu0 %4887, %v3987
      %v4889 = vpop.permute.xlu0 %4888
      %4892 = vset.pattern.permute.xlu0 0
      %4893 = vperm.xlu0 %4892, %v3988
      %v4894 = vpop.permute.xlu0 %4893
      %v4896 = vadd.f32 %v4856, %v4889
      %v4897 = vadd.f32 %v4859, %v4894
      %v4898 = vadd.f32 %v4864, %v4889
      %v4899 = vadd.f32 %v4867, %v4894
      %v4900 = vadd.f32 %v4872, %v4889
      %v4901 = vadd.f32 %v4875, %v4894
      %v4902 = vadd.f32 %v4880, %v4889
      %v4903 = vadd.f32 %v4883, %v4894
      %vm4904 = vcmp.gt.f32.partialorder %v4896, 0.0
      %vm4905 = vcmp.gt.f32.partialorder %v4897, 0.0
      %vm4906 = vcmp.gt.f32.partialorder %v4898, 0.0
      %vm4907 = vcmp.gt.f32.partialorder %v4899, 0.0
      %vm4908 = vcmp.gt.f32.partialorder %v4900, 0.0
      %vm4909 = vcmp.gt.f32.partialorder %v4901, 0.0
      %vm4910 = vcmp.gt.f32.partialorder %v4902, 0.0
      %vm4911 = vcmp.gt.f32.partialorder %v4903, 0.0
      %v4912 = vmul.f32 %v4896, 0.1
      %v4913 = vmul.f32 %v4897, 0.1
      %v4914 = vmul.f32 %v4898, 0.1
      %v4915 = vmul.f32 %v4899, 0.1
      %v4916 = vmul.f32 %v4900, 0.1
      %v4917 = vmul.f32 %v4901, 0.1
      %v4918 = vmul.f32 %v4902, 0.1
      %v4919 = vmul.f32 %v4903, 0.1
      %v4920 = vsel %vm4904, %v4896, %v4912
      %v4921 = vsel %vm4905, %v4897, %v4913
      %v4922 = vsel %vm4906, %v4898, %v4914
      %v4923 = vsel %vm4907, %v4899, %v4915
      %v4924 = vsel %vm4908, %v4900, %v4916
      %v4925 = vsel %vm4909, %v4901, %v4917
      %v4926 = vsel %vm4910, %v4902, %v4918
      %v4927 = vsel %vm4911, %v4903, %v4919
      %v4928 = vld [vmem:[%s7] sm:$0xff]
      %v4929 = vld [vmem:[%s7 + $0x8] sm:$0xff]
      %v4930 = vld [vmem:[%s7 + $0x10] sm:$0xff]
      %v4931 = vld [vmem:[%s7 + $0x18] sm:$0xff]
      %v4932 = vld [vmem:[%s8] sm:$0xff]
      %v4933 = vld [vmem:[%s8 + $0x8] sm:$0xff]
      %v4934 = vld [vmem:[%s8 + $0x10] sm:$0xff]
      %v4935 = vld [vmem:[%s8 + $0x18] sm:$0xff]
      %v4936 = vld [vmem:[%s9] sm:$0xf]
      %v4937 = vld [vmem:[%s9 + $0x4] sm:$0xf]
      %4946 = vrot.lane.b32.xlu0 %v4920, 127
      %v4947 = vpop.permute.xlu0 %4946
      %4948 = vrot.lane.b32.xlu0 %v4921, 127
      %v4949 = vpop.permute.xlu0 %4948
      %4950 = vrot.lane.b32.xlu0 %v4922, 127
      %v4951 = vpop.permute.xlu0 %4950
      %4952 = vrot.lane.b32.xlu0 %v4923, 127
      %v4953 = vpop.permute.xlu0 %4952
      %4954 = vrot.lane.b32.xlu0 %v4924, 127
      %v4955 = vpop.permute.xlu0 %4954
      %4956 = vrot.lane.b32.xlu0 %v4925, 127
      %v4957 = vpop.permute.xlu0 %4956
      %4958 = vrot.lane.b32.xlu0 %v4926, 127
      %v4959 = vpop.permute.xlu0 %4958
      %4960 = vrot.lane.b32.xlu0 %v4927, 127
      %v4961 = vpop.permute.xlu0 %4960
      %4970 = vrot.lane.b32.xlu0 %v4920, 126
      %v4971 = vpop.permute.xlu0 %4970
      %4972 = vrot.lane.b32.xlu0 %v4921, 126
      %v4973 = vpop.permute.xlu0 %4972
      %4974 = vrot.lane.b32.xlu0 %v4922, 126
      %v4975 = vpop.permute.xlu0 %4974
      %4976 = vrot.lane.b32.xlu0 %v4923, 126
      %v4977 = vpop.permute.xlu0 %4976
      %4978 = vrot.lane.b32.xlu0 %v4924, 126
      %v4979 = vpop.permute.xlu0 %4978
      %4980 = vrot.lane.b32.xlu0 %v4925, 126
      %v4981 = vpop.permute.xlu0 %4980
      %4982 = vrot.lane.b32.xlu0 %v4926, 126
      %v4983 = vpop.permute.xlu0 %4982
      %4984 = vrot.lane.b32.xlu0 %v4927, 126
      %v4985 = vpop.permute.xlu0 %4984
      %4994 = vrot.lane.b32.xlu0 %v4920, 122
      %v4995 = vpop.permute.xlu0 %4994
      %4996 = vrot.lane.b32.xlu0 %v4921, 122
      %v4997 = vpop.permute.xlu0 %4996
      %4998 = vrot.lane.b32.xlu0 %v4922, 122
      %v4999 = vpop.permute.xlu0 %4998
      %5000 = vrot.lane.b32.xlu0 %v4923, 122
      %v5001 = vpop.permute.xlu0 %5000
      %5002 = vrot.lane.b32.xlu0 %v4924, 122
      %v5003 = vpop.permute.xlu0 %5002
      %5004 = vrot.lane.b32.xlu0 %v4925, 122
      %v5005 = vpop.permute.xlu0 %5004
      %5006 = vrot.lane.b32.xlu0 %v4926, 122
      %v5007 = vpop.permute.xlu0 %5006
      %5008 = vrot.lane.b32.xlu0 %v4927, 122
      %v5009 = vpop.permute.xlu0 %5008
      %5018 = vrot.lane.b32.xlu0 %v4920, 121
      %v5019 = vpop.permute.xlu0 %5018
      %5020 = vrot.lane.b32.xlu0 %v4921, 121
      %v5021 = vpop.permute.xlu0 %5020
      %5022 = vrot.lane.b32.xlu0 %v4922, 121
      %v5023 = vpop.permute.xlu0 %5022
      %5024 = vrot.lane.b32.xlu0 %v4923, 121
      %v5025 = vpop.permute.xlu0 %5024
      %5026 = vrot.lane.b32.xlu0 %v4924, 121
      %v5027 = vpop.permute.xlu0 %5026
      %5028 = vrot.lane.b32.xlu0 %v4925, 121
      %v5029 = vpop.permute.xlu0 %5028
      %5030 = vrot.lane.b32.xlu0 %v4926, 121
      %v5031 = vpop.permute.xlu0 %5030
      %5032 = vrot.lane.b32.xlu0 %v4927, 121
      %v5033 = vpop.permute.xlu0 %5032
      %5042 = vrot.lane.b32.xlu0 %v4920, 120
      %v5043 = vpop.permute.xlu0 %5042
      %5044 = vrot.lane.b32.xlu0 %v4921, 120
      %v5045 = vpop.permute.xlu0 %5044
      %5046 = vrot.lane.b32.xlu0 %v4922, 120
      %v5047 = vpop.permute.xlu0 %5046
      %5048 = vrot.lane.b32.xlu0 %v4923, 120
      %v5049 = vpop.permute.xlu0 %5048
      %5050 = vrot.lane.b32.xlu0 %v4924, 120
      %v5051 = vpop.permute.xlu0 %5050
      %5052 = vrot.lane.b32.xlu0 %v4925, 120
      %v5053 = vpop.permute.xlu0 %5052
      %5054 = vrot.lane.b32.xlu0 %v4926, 120
      %v5055 = vpop.permute.xlu0 %5054
      %5056 = vrot.lane.b32.xlu0 %v4927, 120
      %v5057 = vpop.permute.xlu0 %5056
      %5066 = vrot.lane.b32.xlu0 %v4920, 116
      %v5067 = vpop.permute.xlu0 %5066
      %5068 = vrot.lane.b32.xlu0 %v4921, 116
      %v5069 = vpop.permute.xlu0 %5068
      %5070 = vrot.lane.b32.xlu0 %v4922, 116
      %v5071 = vpop.permute.xlu0 %5070
      %5072 = vrot.lane.b32.xlu0 %v4923, 116
      %v5073 = vpop.permute.xlu0 %5072
      %5074 = vrot.lane.b32.xlu0 %v4924, 116
      %v5075 = vpop.permute.xlu0 %5074
      %5076 = vrot.lane.b32.xlu0 %v4925, 116
      %v5077 = vpop.permute.xlu0 %5076
      %5078 = vrot.lane.b32.xlu0 %v4926, 116
      %v5079 = vpop.permute.xlu0 %5078
      %5080 = vrot.lane.b32.xlu0 %v4927, 116
      %v5081 = vpop.permute.xlu0 %5080
      %5090 = vrot.lane.b32.xlu0 %v4920, 115
      %v5091 = vpop.permute.xlu0 %5090
      %5092 = vrot.lane.b32.xlu0 %v4921, 115
      %v5093 = vpop.permute.xlu0 %5092
      %5094 = vrot.lane.b32.xlu0 %v4922, 115
      %v5095 = vpop.permute.xlu0 %5094
      %5096 = vrot.lane.b32.xlu0 %v4923, 115
      %v5097 = vpop.permute.xlu0 %5096
      %5098 = vrot.lane.b32.xlu0 %v4924, 115
      %v5099 = vpop.permute.xlu0 %5098
      %5100 = vrot.lane.b32.xlu0 %v4925, 115
      %v5101 = vpop.permute.xlu0 %5100
      %5102 = vrot.lane.b32.xlu0 %v4926, 115
      %v5103 = vpop.permute.xlu0 %5102
      %5104 = vrot.lane.b32.xlu0 %v4927, 115
      %v5105 = vpop.permute.xlu0 %5104
      %5114 = vrot.lane.b32.xlu0 %v4920, 114
      %v5115 = vpop.permute.xlu0 %5114
      %5116 = vrot.lane.b32.xlu0 %v4921, 114
      %v5117 = vpop.permute.xlu0 %5116
      %5118 = vrot.lane.b32.xlu0 %v4922, 114
      %v5119 = vpop.permute.xlu0 %5118
      %5120 = vrot.lane.b32.xlu0 %v4923, 114
      %v5121 = vpop.permute.xlu0 %5120
      %5122 = vrot.lane.b32.xlu0 %v4924, 114
      %v5123 = vpop.permute.xlu0 %5122
      %5124 = vrot.lane.b32.xlu0 %v4925, 114
      %v5125 = vpop.permute.xlu0 %5124
      %5126 = vrot.lane.b32.xlu0 %v4926, 114
      %v5127 = vpop.permute.xlu0 %5126
      %5128 = vrot.lane.b32.xlu0 %v4927, 114
      %v5129 = vpop.permute.xlu0 %5128
      %v5138 = vpack.c.bf16 %v4921, %v4920
      %v5139 = vpack.c.bf16 %v4949, %v4947
      %v5140 = vpack.c.bf16 %v4973, %v4971
      %v5141 = vpack.c.bf16 %v4997, %v4995
      %v5142 = vpack.c.bf16 %v5021, %v5019
      %v5143 = vpack.c.bf16 %v5045, %v5043
      %v5144 = vpack.c.bf16 %v5069, %v5067
      %v5145 = vpack.c.bf16 %v5093, %v5091
      %v5146 = vpack.c.bf16 %v5117, %v5115
      %v5147 = vpack.c.bf16 %v4923, %v4922
      %v5148 = vpack.c.bf16 %v4953, %v4951
      %v5149 = vpack.c.bf16 %v4977, %v4975
      %v5150 = vpack.c.bf16 %v5001, %v4999
      %v5151 = vpack.c.bf16 %v5025, %v5023
      %v5152 = vpack.c.bf16 %v5049, %v5047
      %v5153 = vpack.c.bf16 %v5073, %v5071
      %v5154 = vpack.c.bf16 %v5097, %v5095
      %v5155 = vpack.c.bf16 %v5121, %v5119
      %v5156 = vpack.c.bf16 %v4925, %v4924
      %v5157 = vpack.c.bf16 %v4957, %v4955
      %v5158 = vpack.c.bf16 %v4981, %v4979
      %v5159 = vpack.c.bf16 %v5005, %v5003
      %v5160 = vpack.c.bf16 %v5029, %v5027
      %v5161 = vpack.c.bf16 %v5053, %v5051
      %v5162 = vpack.c.bf16 %v5077, %v5075
      %v5163 = vpack.c.bf16 %v5101, %v5099
      %v5164 = vpack.c.bf16 %v5125, %v5123
      %v5165 = vpack.c.bf16 %v4927, %v4926
      %v5166 = vpack.c.bf16 %v4961, %v4959
      %v5167 = vpack.c.bf16 %v4985, %v4983
      %v5168 = vpack.c.bf16 %v5009, %v5007
      %v5169 = vpack.c.bf16 %v5033, %v5031
      %v5170 = vpack.c.bf16 %v5057, %v5055
      %v5171 = vpack.c.bf16 %v5081, %v5079
      %v5172 = vpack.c.bf16 %v5105, %v5103
      %v5173 = vpack.c.bf16 %v5129, %v5127
      %v5178 = vunpack.c.l.b16 %v4928
      %v5179 = vunpack.c.h.b16 %v4928
      %v5180 = vunpack.c.l.b16 %v4929
      %v5181 = vunpack.c.h.b16 %v4929
      %v5182 = vunpack.c.l.b16 %v4930
      %v5183 = vunpack.c.h.b16 %v4930
      %v5184 = vunpack.c.l.b16 %v4931
      %v5185 = vunpack.c.h.b16 %v4931
      %v5186 = vpack.c.b16 %v5180, %v5178
      %v5187 = vpack.c.b16 %v5181, %v5179
      %v5188 = vpack.c.b16 %v5184, %v5182
      %v5189 = vpack.c.b16 %v5185, %v5183
      %vm5192 = vcmask 130048
      %v5194 = vsel %vm5192, %v5187, 0
      %v5197 = vsel %vm5192, %v5189, 0
      %5199 = vmatprep.subr.bf16.mxu0 0
      %5200 = vmatpush1.bf16.msra.mxu0 %v5138
      %5201 = vmatprep.subr.bf16.mxu0 0
      %5202 = vmatpush1.bf16.msra.mxu0 %v5139
      %5203 = vmatprep.subr.bf16.mxu0 0
      %5204 = vmatpush1.bf16.msra.mxu0 %v5140
      %5205 = vmatprep.subr.bf16.mxu0 0
      %5206 = vmatpush1.bf16.msra.mxu0 %v5141
      %5207 = vmatprep.subr.bf16.mxu0 0
      %5208 = vmatpush1.bf16.msra.mxu0 %v5142
      %5209 = vmatprep.subr.bf16.mxu0 0
      %5210 = vmatpush1.bf16.msra.mxu0 %v5143
      %5211 = vmatprep.subr.bf16.mxu0 0
      %5212 = vmatpush1.bf16.msra.mxu0 %v5144
      %5213 = vmatprep.subr.bf16.mxu0 0
      %5214 = vmatpush1.bf16.msra.mxu0 %v5145
      %5215 = vmatprep.subr.bf16.mxu0 0
      %5216 = vmatpush1.bf16.msra.mxu0 %v5146
      %5217 = vmatprep.subr.bf16.mxu0 0
      %5218 = vmatpush1.bf16.msra.mxu0 0
      %5219 = vmatprep.subr.bf16.mxu0 0
      %5220 = vmatpush1.bf16.msra.mxu0 0
      %5221 = vmatprep.subr.bf16.mxu0 0
      %5222 = vmatpush1.bf16.msra.mxu0 0
      %5223 = vmatprep.subr.bf16.mxu0 0
      %5224 = vmatpush1.bf16.msra.mxu0 0
      %5225 = vmatprep.subr.bf16.mxu0 0
      %5226 = vmatpush1.bf16.msra.mxu0 0
      %5227 = vmatprep.subr.bf16.mxu0 0
      %5228 = vmatpush1.bf16.msra.mxu0 0
      %5229 = vmatprep.subr.bf16.mxu0 0
      %5230 = vmatpush1.bf16.msra.mxu0 0
      %5231 = vmatprep.mubr.bf16.mxu0 %v5194
      %5232 = vmatmul.mubr.bf16.gmra.mrb[0].mxu0 %v5186
      %v5233 = vpop.f32.mrb[0].mxu0
      %v5234 = vadd.f32 0.0, %v5233
      %v5235 = vpop.f32.mrb[0].mxu0
      %v5236 = vpop.f32.mrb[0].mxu0
      %v5237 = vadd.f32 0.0, %v5236
      %v5238 = vpop.f32.mrb[0].mxu0
      %5239 = vmatprep.mubr.bf16.mxu0 %v5197
      %5240 = vmatmul.mubr.bf16.gmra.mrb[0].mxu0 %v5188
      %v5241 = vpop.f32.mrb[0].mxu0
      %v5242 = vadd.f32 0.0, %v5241
      %v5243 = vpop.f32.mrb[0].mxu0
      %v5244 = vpop.f32.mrb[0].mxu0
      %v5245 = vadd.f32 0.0, %v5244
      %v5246 = vpop.f32.mrb[0].mxu0
      %5247 = vdwg.mxu0
      %5248 = vmatprep.subr.bf16.mxu0 0
      %5249 = vmatpush1.bf16.msra.mxu0 %v5147
      %5250 = vmatprep.subr.bf16.mxu0 0
      %5251 = vmatpush1.bf16.msra.mxu0 %v5148
      %5252 = vmatprep.subr.bf16.mxu0 0
      %5253 = vmatpush1.bf16.msra.mxu0 %v5149
      %5254 = vmatprep.subr.bf16.mxu0 0
      %5255 = vmatpush1.bf16.msra.mxu0 %v5150
      %5256 = vmatprep.subr.bf16.mxu0 0
      %5257 = vmatpush1.bf16.msra.mxu0 %v5151
      %5258 = vmatprep.subr.bf16.mxu0 0
      %5259 = vmatpush1.bf16.msra.mxu0 %v5152
      %5260 = vmatprep.subr.bf16.mxu0 0
      %5261 = vmatpush1.bf16.msra.mxu0 %v5153
      %5262 = vmatprep.subr.bf16.mxu0 0
      %5263 = vmatpush1.bf16.msra.mxu0 %v5154
      %5264 = vmatprep.subr.bf16.mxu0 0
      %5265 = vmatpush1.bf16.msra.mxu0 %v5155
      %5266 = vmatprep.subr.bf16.mxu0 0
      %5267 = vmatpush1.bf16.msra.mxu0 0
      %5268 = vmatprep.subr.bf16.mxu0 0
      %5269 = vmatpush1.bf16.msra.mxu0 0
      %5270 = vmatprep.subr.bf16.mxu0 0
      %5271 = vmatpush1.bf16.msra.mxu0 0
      %5272 = vmatprep.subr.bf16.mxu0 0
      %5273 = vmatpush1.bf16.msra.mxu0 0
      %5274 = vmatprep.subr.bf16.mxu0 0
      %5275 = vmatpush1.bf16.msra.mxu0 0
      %5276 = vmatprep.subr.bf16.mxu0 0
      %5277 = vmatpush1.bf16.msra.mxu0 0
      %5278 = vmatprep.subr.bf16.mxu0 0
      %5279 = vmatpush1.bf16.msra.mxu0 0
      %5280 = vmatprep.mubr.bf16.mxu0 %v5194
      %5281 = vmatmul.mubr.bf16.gmra.mrb[0].mxu0 %v5186
      %v5282 = vpop.f32.mrb[0].mxu0
      %v5283 = vadd.f32 0.0, %v5282
      %v5284 = vpop.f32.mrb[0].mxu0
      %v5285 = vpop.f32.mrb[0].mxu0
      %v5286 = vadd.f32 0.0, %v5285
      %v5287 = vpop.f32.mrb[0].mxu0
      %5288 = vmatprep.mubr.bf16.mxu0 %v5197
      %5289 = vmatmul.mubr.bf16.gmra.mrb[0].mxu0 %v5188
      %v5290 = vpop.f32.mrb[0].mxu0
      %v5291 = vadd.f32 0.0, %v5290
      %v5292 = vpop.f32.mrb[0].mxu0
      %v5293 = vpop.f32.mrb[0].mxu0
      %v5294 = vadd.f32 0.0, %v5293
      %v5295 = vpop.f32.mrb[0].mxu0
      %5296 = vdwg.mxu0
      %5297 = vmatprep.subr.bf16.mxu0 0
      %5298 = vmatpush1.bf16.msra.mxu0 %v5156
      %5299 = vmatprep.subr.bf16.mxu0 0
      %5300 = vmatpush1.bf16.msra.mxu0 %v5157
      %5301 = vmatprep.subr.bf16.mxu0 0
      %5302 = vmatpush1.bf16.msra.mxu0 %v5158
      %5303 = vmatprep.subr.bf16.mxu0 0
      %5304 = vmatpush1.bf16.msra.mxu0 %v5159
      %5305 = vmatprep.subr.bf16.mxu0 0
      %5306 = vmatpush1.bf16.msra.mxu0 %v5160
      %5307 = vmatprep.subr.bf16.mxu0 0
      %5308 = vmatpush1.bf16.msra.mxu0 %v5161
      %5309 = vmatprep.subr.bf16.mxu0 0
      %5310 = vmatpush1.bf16.msra.mxu0 %v5162
      %5311 = vmatprep.subr.bf16.mxu0 0
      %5312 = vmatpush1.bf16.msra.mxu0 %v5163
      %5313 = vmatprep.subr.bf16.mxu0 0
      %5314 = vmatpush1.bf16.msra.mxu0 %v5164
      %5315 = vmatprep.subr.bf16.mxu0 0
      %5316 = vmatpush1.bf16.msra.mxu0 0
      %5317 = vmatprep.subr.bf16.mxu0 0
      %5318 = vmatpush1.bf16.msra.mxu0 0
      %5319 = vmatprep.subr.bf16.mxu0 0
      %5320 = vmatpush1.bf16.msra.mxu0 0
      %5321 = vmatprep.subr.bf16.mxu0 0
      %5322 = vmatpush1.bf16.msra.mxu0 0
      %5323 = vmatprep.subr.bf16.mxu0 0
      %5324 = vmatpush1.bf16.msra.mxu0 0
      %5325 = vmatprep.subr.bf16.mxu0 0
      %5326 = vmatpush1.bf16.msra.mxu0 0
      %5327 = vmatprep.subr.bf16.mxu0 0
      %5328 = vmatpush1.bf16.msra.mxu0 0
      %5329 = vmatprep.mubr.bf16.mxu0 %v5194
      %5330 = vmatmul.mubr.bf16.gmra.mrb[0].mxu0 %v5186
      %v5331 = vpop.f32.mrb[0].mxu0
      %v5332 = vadd.f32 0.0, %v5331
      %v5333 = vpop.f32.mrb[0].mxu0
      %v5334 = vpop.f32.mrb[0].mxu0
      %v5335 = vadd.f32 0.0, %v5334
      %v5336 = vpop.f32.mrb[0].mxu0
      %5337 = vmatprep.mubr.bf16.mxu0 %v5197
      %5338 = vmatmul.mubr.bf16.gmra.mrb[0].mxu0 %v5188
      %v5339 = vpop.f32.mrb[0].mxu0
      %v5340 = vadd.f32 0.0, %v5339
      %v5341 = vpop.f32.mrb[0].mxu0
      %v5342 = vpop.f32.mrb[0].mxu0
      %v5343 = vadd.f32 0.0, %v5342
      %v5344 = vpop.f32.mrb[0].mxu0
      %5345 = vdwg.mxu0
      %5346 = vmatprep.subr.bf16.mxu0 0
      %5347 = vmatpush1.bf16.msra.mxu0 %v5165
      %5348 = vmatprep.subr.bf16.mxu0 0
      %5349 = vmatpush1.bf16.msra.mxu0 %v5166
      %5350 = vmatprep.subr.bf16.mxu0 0
      %5351 = vmatpush1.bf16.msra.mxu0 %v5167
      %5352 = vmatprep.subr.bf16.mxu0 0
      %5353 = vmatpush1.bf16.msra.mxu0 %v5168
      %5354 = vmatprep.subr.bf16.mxu0 0
      %5355 = vmatpush1.bf16.msra.mxu0 %v5169
      %5356 = vmatprep.subr.bf16.mxu0 0
      %5357 = vmatpush1.bf16.msra.mxu0 %v5170
      %5358 = vmatprep.subr.bf16.mxu0 0
      %5359 = vmatpush1.bf16.msra.mxu0 %v5171
      %5360 = vmatprep.subr.bf16.mxu0 0
      %5361 = vmatpush1.bf16.msra.mxu0 %v5172
      %5362 = vmatprep.subr.bf16.mxu0 0
      %5363 = vmatpush1.bf16.msra.mxu0 %v5173
      %5364 = vmatprep.subr.bf16.mxu0 0
      %5365 = vmatpush1.bf16.msra.mxu0 0
      %5366 = vmatprep.subr.bf16.mxu0 0
      %5367 = vmatpush1.bf16.msra.mxu0 0
      %5368 = vmatprep.subr.bf16.mxu0 0
      %5369 = vmatpush1.bf16.msra.mxu0 0
      %5370 = vmatprep.subr.bf16.mxu0 0
      %5371 = vmatpush1.bf16.msra.mxu0 0
      %5372 = vmatprep.subr.bf16.mxu0 0
      %5373 = vmatpush1.bf16.msra.mxu0 0
      %5374 = vmatprep.subr.bf16.mxu0 0
      %5375 = vmatpush1.bf16.msra.mxu0 0
      %5376 = vmatprep.subr.bf16.mxu0 0
      %5377 = vmatpush1.bf16.msra.mxu0 0
      %5378 = vmatprep.mubr.bf16.mxu0 %v5194
      %5379 = vmatmul.mubr.bf16.gmra.mrb[0].mxu0 %v5186
      %v5380 = vpop.f32.mrb[0].mxu0
      %v5381 = vadd.f32 0.0, %v5380
      %v5382 = vpop.f32.mrb[0].mxu0
      %v5383 = vpop.f32.mrb[0].mxu0
      %v5384 = vadd.f32 0.0, %v5383
      %v5385 = vpop.f32.mrb[0].mxu0
      %5386 = vmatprep.mubr.bf16.mxu0 %v5197
      %5387 = vmatmul.mubr.bf16.gmra.mrb[0].mxu0 %v5188
      %v5388 = vpop.f32.mrb[0].mxu0
      %v5389 = vadd.f32 0.0, %v5388
      %v5390 = vpop.f32.mrb[0].mxu0
      %v5391 = vpop.f32.mrb[0].mxu0
      %v5392 = vadd.f32 0.0, %v5391
      %v5393 = vpop.f32.mrb[0].mxu0
      %5394 = vdwg.mxu0
      %5411 = vrot.lane.b32.xlu0 %v5234, 127
      %v5412 = vpop.permute.xlu0 %5411
      %5413 = vrot.lane.b32.xlu0 %v5237, 127
      %v5414 = vpop.permute.xlu0 %5413
      %5415 = vrot.lane.b32.xlu0 %v5242, 127
      %v5416 = vpop.permute.xlu0 %5415
      %5417 = vrot.lane.b32.xlu0 %v5245, 127
      %v5418 = vpop.permute.xlu0 %5417
      %5419 = vrot.lane.b32.xlu0 %v5283, 127
      %v5420 = vpop.permute.xlu0 %5419
      %5421 = vrot.lane.b32.xlu0 %v5286, 127
      %v5422 = vpop.permute.xlu0 %5421
      %5423 = vrot.lane.b32.xlu0 %v5291, 127
      %v5424 = vpop.permute.xlu0 %5423
      %5425 = vrot.lane.b32.xlu0 %v5294, 127
      %v5426 = vpop.permute.xlu0 %5425
      %5427 = vrot.lane.b32.xlu0 %v5332, 127
      %v5428 = vpop.permute.xlu0 %5427
      %5429 = vrot.lane.b32.xlu0 %v5335, 127
      %v5430 = vpop.permute.xlu0 %5429
      %5431 = vrot.lane.b32.xlu0 %v5340, 127
      %v5432 = vpop.permute.xlu0 %5431
      %5433 = vrot.lane.b32.xlu0 %v5343, 127
      %v5434 = vpop.permute.xlu0 %5433
      %5435 = vrot.lane.b32.xlu0 %v5381, 127
      %v5436 = vpop.permute.xlu0 %5435
      %5437 = vrot.lane.b32.xlu0 %v5384, 127
      %v5438 = vpop.permute.xlu0 %5437
      %5439 = vrot.lane.b32.xlu0 %v5389, 127
      %v5440 = vpop.permute.xlu0 %5439
      %5441 = vrot.lane.b32.xlu0 %v5392, 127
      %v5442 = vpop.permute.xlu0 %5441
      %v5459 = vmax.f32 %v5234, %v5412
      %v5460 = vmax.f32 %v5237, %v5414
      %v5461 = vmax.f32 %v5242, %v5416
      %v5462 = vmax.f32 %v5245, %v5418
      %v5463 = vmax.f32 %v5283, %v5420
      %v5464 = vmax.f32 %v5286, %v5422
      %v5465 = vmax.f32 %v5291, %v5424
      %v5466 = vmax.f32 %v5294, %v5426
      %v5467 = vmax.f32 %v5332, %v5428
      %v5468 = vmax.f32 %v5335, %v5430
      %v5469 = vmax.f32 %v5340, %v5432
      %v5470 = vmax.f32 %v5343, %v5434
      %v5471 = vmax.f32 %v5381, %v5436
      %v5472 = vmax.f32 %v5384, %v5438
      %v5473 = vmax.f32 %v5389, %v5440
      %v5474 = vmax.f32 %v5392, %v5442
      %5475 = vrot.lane.b32.xlu0 %v5234, 122
      %v5476 = vpop.permute.xlu0 %5475
      %5477 = vrot.lane.b32.xlu0 %v5237, 122
      %v5478 = vpop.permute.xlu0 %5477
      %5479 = vrot.lane.b32.xlu0 %v5242, 122
      %v5480 = vpop.permute.xlu0 %5479
      %5481 = vrot.lane.b32.xlu0 %v5245, 122
      %v5482 = vpop.permute.xlu0 %5481
      %5483 = vrot.lane.b32.xlu0 %v5283, 122
      %v5484 = vpop.permute.xlu0 %5483
      %5485 = vrot.lane.b32.xlu0 %v5286, 122
      %v5486 = vpop.permute.xlu0 %5485
      %5487 = vrot.lane.b32.xlu0 %v5291, 122
      %v5488 = vpop.permute.xlu0 %5487
      %5489 = vrot.lane.b32.xlu0 %v5294, 122
      %v5490 = vpop.permute.xlu0 %5489
      %5491 = vrot.lane.b32.xlu0 %v5332, 122
      %v5492 = vpop.permute.xlu0 %5491
      %5493 = vrot.lane.b32.xlu0 %v5335, 122
      %v5494 = vpop.permute.xlu0 %5493
      %5495 = vrot.lane.b32.xlu0 %v5340, 122
      %v5496 = vpop.permute.xlu0 %5495
      %5497 = vrot.lane.b32.xlu0 %v5343, 122
      %v5498 = vpop.permute.xlu0 %5497
      %5499 = vrot.lane.b32.xlu0 %v5381, 122
      %v5500 = vpop.permute.xlu0 %5499
      %5501 = vrot.lane.b32.xlu0 %v5384, 122
      %v5502 = vpop.permute.xlu0 %5501
      %5503 = vrot.lane.b32.xlu0 %v5389, 122
      %v5504 = vpop.permute.xlu0 %5503
      %5505 = vrot.lane.b32.xlu0 %v5392, 122
      %v5506 = vpop.permute.xlu0 %5505
      %v5523 = vmax.f32 %v5459, %v5476
      %v5524 = vmax.f32 %v5460, %v5478
      %v5525 = vmax.f32 %v5461, %v5480
      %v5526 = vmax.f32 %v5462, %v5482
      %v5527 = vmax.f32 %v5463, %v5484
      %v5528 = vmax.f32 %v5464, %v5486
      %v5529 = vmax.f32 %v5465, %v5488
      %v5530 = vmax.f32 %v5466, %v5490
      %v5531 = vmax.f32 %v5467, %v5492
      %v5532 = vmax.f32 %v5468, %v5494
      %v5533 = vmax.f32 %v5469, %v5496
      %v5534 = vmax.f32 %v5470, %v5498
      %v5535 = vmax.f32 %v5471, %v5500
      %v5536 = vmax.f32 %v5472, %v5502
      %v5537 = vmax.f32 %v5473, %v5504
      %v5538 = vmax.f32 %v5474, %v5506
      %5539 = vrot.lane.b32.xlu0 %v5234, 121
      %v5540 = vpop.permute.xlu0 %5539
      %5541 = vrot.lane.b32.xlu0 %v5237, 121
      %v5542 = vpop.permute.xlu0 %5541
      %5543 = vrot.lane.b32.xlu0 %v5242, 121
      %v5544 = vpop.permute.xlu0 %5543
      %5545 = vrot.lane.b32.xlu0 %v5245, 121
      %v5546 = vpop.permute.xlu0 %5545
      %5547 = vrot.lane.b32.xlu0 %v5283, 121
      %v5548 = vpop.permute.xlu0 %5547
      %5549 = vrot.lane.b32.xlu0 %v5286, 121
      %v5550 = vpop.permute.xlu0 %5549
      %5551 = vrot.lane.b32.xlu0 %v5291, 121
      %v5552 = vpop.permute.xlu0 %5551
      %5553 = vrot.lane.b32.xlu0 %v5294, 121
      %v5554 = vpop.permute.xlu0 %5553
      %5555 = vrot.lane.b32.xlu0 %v5332, 121
      %v5556 = vpop.permute.xlu0 %5555
      %5557 = vrot.lane.b32.xlu0 %v5335, 121
      %v5558 = vpop.permute.xlu0 %5557
      %5559 = vrot.lane.b32.xlu0 %v5340, 121
      %v5560 = vpop.permute.xlu0 %5559
      %5561 = vrot.lane.b32.xlu0 %v5343, 121
      %v5562 = vpop.permute.xlu0 %5561
      %5563 = vrot.lane.b32.xlu0 %v5381, 121
      %v5564 = vpop.permute.xlu0 %5563
      %5565 = vrot.lane.b32.xlu0 %v5384, 121
      %v5566 = vpop.permute.xlu0 %5565
      %5567 = vrot.lane.b32.xlu0 %v5389, 121
      %v5568 = vpop.permute.xlu0 %5567
      %5569 = vrot.lane.b32.xlu0 %v5392, 121
      %v5570 = vpop.permute.xlu0 %5569
      %v5587 = vmax.f32 %v5523, %v5540
      %v5588 = vmax.f32 %v5524, %v5542
      %v5589 = vmax.f32 %v5525, %v5544
      %v5590 = vmax.f32 %v5526, %v5546
      %v5591 = vmax.f32 %v5527, %v5548
      %v5592 = vmax.f32 %v5528, %v5550
      %v5593 = vmax.f32 %v5529, %v5552
      %v5594 = vmax.f32 %v5530, %v5554
      %v5595 = vmax.f32 %v5531, %v5556
      %v5596 = vmax.f32 %v5532, %v5558
      %v5597 = vmax.f32 %v5533, %v5560
      %v5598 = vmax.f32 %v5534, %v5562
      %v5599 = vmax.f32 %v5535, %v5564
      %v5600 = vmax.f32 %v5536, %v5566
      %v5601 = vmax.f32 %v5537, %v5568
      %v5602 = vmax.f32 %v5538, %v5570
      %v5603 = vpack.c.bf16 %v5588, %v5587
      %v5604 = vpack.c.bf16 %v5590, %v5589
      %v5605 = vpack.c.bf16 %v5592, %v5591
      %v5606 = vpack.c.bf16 %v5594, %v5593
      %v5607 = vpack.c.bf16 %v5596, %v5595
      %v5608 = vpack.c.bf16 %v5598, %v5597
      %v5609 = vpack.c.bf16 %v5600, %v5599
      %v5610 = vpack.c.bf16 %v5602, %v5601
      %v5613 = vunpack.c.l.b16 %v4936
      %v5614 = vunpack.c.l.b16 %v4937
      %v5615 = vpack.c.b16 %v5614, %v5613
      %vm5616 = vcmask 121856
      %v5618 = vsel %vm5616, %v5603, 0
      %v5621 = vsel %vm5616, %v5604, 0
      %v5624 = vsel %vm5616, %v5605, 0
      %v5627 = vsel %vm5616, %v5606, 0
      %v5630 = vsel %vm5616, %v5607, 0
      %v5633 = vsel %vm5616, %v5608, 0
      %v5636 = vsel %vm5616, %v5609, 0
      %v5639 = vsel %vm5616, %v5610, 0
      %vm5641 = vcmask 1047552
      %v5642 = vsel %vm3727, 4294967295, 65535
      %v5643 = vsel %vm5641, %v5642, 0
      %v5645 = vand.u32 %v5615, %v5643
      %5647 = vmatprep.subr.bf16.mxu0 0
      %5648 = vmatpush1.bf16.msra.mxu0 %v5645
      %5649 = vmatprep.subr.bf16.mxu0 0
      %5650 = vmatpush1.bf16.msra.mxu0 0
      %5651 = vmatprep.subr.bf16.mxu0 0
      %5652 = vmatpush1.bf16.msra.mxu0 0
      %5653 = vmatprep.subr.bf16.mxu0 0
      %5654 = vmatpush1.bf16.msra.mxu0 0
      %5655 = vmatprep.subr.bf16.mxu0 0
      %5656 = vmatpush1.bf16.msra.mxu0 0
      %5657 = vmatprep.subr.bf16.mxu0 0
      %5658 = vmatpush1.bf16.msra.mxu0 0
      %5659 = vmatprep.subr.bf16.mxu0 0
      %5660 = vmatpush1.bf16.msra.mxu0 0
      %5661 = vmatprep.subr.bf16.mxu0 0
      %5662 = vmatpush1.bf16.msra.mxu0 0
      %5663 = vmatprep.subr.bf16.mxu0 0
      %5664 = vmatpush1.bf16.msra.mxu0 0
      %5665 = vmatprep.subr.bf16.mxu0 0
      %5666 = vmatpush1.bf16.msra.mxu0 0
      %5667 = vmatprep.subr.bf16.mxu0 0
      %5668 = vmatpush1.bf16.msra.mxu0 0
      %5669 = vmatprep.subr.bf16.mxu0 0
      %5670 = vmatpush1.bf16.msra.mxu0 0
      %5671 = vmatprep.subr.bf16.mxu0 0
      %5672 = vmatpush1.bf16.msra.mxu0 0
      %5673 = vmatprep.subr.bf16.mxu0 0
      %5674 = vmatpush1.bf16.msra.mxu0 0
      %5675 = vmatprep.subr.bf16.mxu0 0
      %5676 = vmatpush1.bf16.msra.mxu0 0
      %5677 = vmatprep.subr.bf16.mxu0 0
      %5678 = vmatpush1.bf16.msra.mxu0 0
      %5679 = vmatprep.mubr.bf16.mxu0 0
      %5680 = vmatmul.mubr.bf16.gmra.mrb[0].mxu0 %v5618
      %v5681 = vpop.f32.mrb[0].mxu0
      %v5682 = vadd.f32 0.0, %v5681
      %v5683 = vpop.f32.mrb[0].mxu0
      %v5684 = vpop.f32.mrb[0].mxu0
      %v5685 = vadd.f32 0.0, %v5684
      %v5686 = vpop.f32.mrb[0].mxu0
      %5687 = vmatprep.mubr.bf16.mxu0 0
      %5688 = vmatmul.mubr.bf16.gmra.mrb[0].mxu0 %v5621
      %v5689 = vpop.f32.mrb[0].mxu0
      %v5690 = vadd.f32 0.0, %v5689
      %v5691 = vpop.f32.mrb[0].mxu0
      %v5692 = vpop.f32.mrb[0].mxu0
      %v5693 = vadd.f32 0.0, %v5692
      %v5694 = vpop.f32.mrb[0].mxu0
      %5695 = vmatprep.mubr.bf16.mxu0 0
      %5696 = vmatmul.mubr.bf16.gmra.mrb[0].mxu0 %v5624
      %v5697 = vpop.f32.mrb[0].mxu0
      %v5698 = vadd.f32 0.0, %v5697
      %v5699 = vpop.f32.mrb[0].mxu0
      %v5700 = vpop.f32.mrb[0].mxu0
      %v5701 = vadd.f32 0.0, %v5700
      %v5702 = vpop.f32.mrb[0].mxu0
      %5703 = vmatprep.mubr.bf16.mxu0 0
      %5704 = vmatmul.mubr.bf16.gmra.mrb[0].mxu0 %v5627
      %v5705 = vpop.f32.mrb[0].mxu0
      %v5706 = vadd.f32 0.0, %v5705
      %v5707 = vpop.f32.mrb[0].mxu0
      %v5708 = vpop.f32.mrb[0].mxu0
      %v5709 = vadd.f32 0.0, %v5708
      %v5710 = vpop.f32.mrb[0].mxu0
      %5711 = vmatprep.mubr.bf16.mxu0 0
      %5712 = vmatmul.mubr.bf16.gmra.mrb[0].mxu0 %v5630
      %v5713 = vpop.f32.mrb[0].mxu0
      %v5714 = vadd.f32 0.0, %v5713
      %v5715 = vpop.f32.mrb[0].mxu0
      %v5716 = vpop.f32.mrb[0].mxu0
      %v5717 = vadd.f32 0.0, %v5716
      %v5718 = vpop.f32.mrb[0].mxu0
      %5719 = vmatprep.mubr.bf16.mxu0 0
      %5720 = vmatmul.mubr.bf16.gmra.mrb[0].mxu0 %v5633
      %v5721 = vpop.f32.mrb[0].mxu0
      %v5722 = vadd.f32 0.0, %v5721
      %v5723 = vpop.f32.mrb[0].mxu0
      %v5724 = vpop.f32.mrb[0].mxu0
      %v5725 = vadd.f32 0.0, %v5724
      %v5726 = vpop.f32.mrb[0].mxu0
      %5727 = vmatprep.mubr.bf16.mxu0 0
      %5728 = vmatmul.mubr.bf16.gmra.mrb[0].mxu0 %v5636
      %v5729 = vpop.f32.mrb[0].mxu0
      %v5730 = vadd.f32 0.0, %v5729
      %v5731 = vpop.f32.mrb[0].mxu0
      %v5732 = vpop.f32.mrb[0].mxu0
      %v5733 = vadd.f32 0.0, %v5732
      %v5734 = vpop.f32.mrb[0].mxu0
      %5735 = vmatprep.mubr.bf16.mxu0 0
      %5736 = vmatmul.mubr.bf16.gmra.mrb[0].mxu0 %v5639
      %v5737 = vpop.f32.mrb[0].mxu0
      %v5738 = vadd.f32 0.0, %v5737
      %v5739 = vpop.f32.mrb[0].mxu0
      %v5740 = vpop.f32.mrb[0].mxu0
      %v5741 = vadd.f32 0.0, %v5740
      %v5742 = vpop.f32.mrb[0].mxu0
      %5743 = vdwg.mxu0
      %5745 = vset.pattern.permute.xlu0 0
      %5746 = vperm.xlu0 %5745, %v4932
      %v5747 = vpop.permute.xlu0 %5746
      %5750 = vset.pattern.permute.xlu0 0
      %5751 = vperm.xlu0 %5750, %v4933
      %v5752 = vpop.permute.xlu0 %5751
      %5755 = vset.pattern.permute.xlu0 0
      %5756 = vperm.xlu0 %5755, %v4934
      %v5757 = vpop.permute.xlu0 %5756
      %5760 = vset.pattern.permute.xlu0 0
      %5761 = vperm.xlu0 %5760, %v4935
      %v5762 = vpop.permute.xlu0 %5761
      %v5764 = vadd.f32 %v5682, %v5747
      %v5765 = vadd.f32 %v5685, %v5752
      %v5766 = vadd.f32 %v5690, %v5757
      %v5767 = vadd.f32 %v5693, %v5762
      %v5768 = vadd.f32 %v5698, %v5747
      %v5769 = vadd.f32 %v5701, %v5752
      %v5770 = vadd.f32 %v5706, %v5757
      %v5771 = vadd.f32 %v5709, %v5762
      %v5772 = vadd.f32 %v5714, %v5747
      %v5773 = vadd.f32 %v5717, %v5752
      %v5774 = vadd.f32 %v5722, %v5757
      %v5775 = vadd.f32 %v5725, %v5762
      %v5776 = vadd.f32 %v5730, %v5747
      %v5777 = vadd.f32 %v5733, %v5752
      %v5778 = vadd.f32 %v5738, %v5757
      %v5779 = vadd.f32 %v5741, %v5762
      %vm5780 = vcmp.gt.f32.partialorder %v5764, 0.0
      %vm5781 = vcmp.gt.f32.partialorder %v5765, 0.0
      %vm5782 = vcmp.gt.f32.partialorder %v5766, 0.0
      %vm5783 = vcmp.gt.f32.partialorder %v5767, 0.0
      %vm5784 = vcmp.gt.f32.partialorder %v5768, 0.0
      %vm5785 = vcmp.gt.f32.partialorder %v5769, 0.0
      %vm5786 = vcmp.gt.f32.partialorder %v5770, 0.0
      %vm5787 = vcmp.gt.f32.partialorder %v5771, 0.0
      %vm5788 = vcmp.gt.f32.partialorder %v5772, 0.0
      %vm5789 = vcmp.gt.f32.partialorder %v5773, 0.0
      %vm5790 = vcmp.gt.f32.partialorder %v5774, 0.0
      %vm5791 = vcmp.gt.f32.partialorder %v5775, 0.0
      %vm5792 = vcmp.gt.f32.partialorder %v5776, 0.0
      %vm5793 = vcmp.gt.f32.partialorder %v5777, 0.0
      %vm5794 = vcmp.gt.f32.partialorder %v5778, 0.0
      %vm5795 = vcmp.gt.f32.partialorder %v5779, 0.0
      %v5796 = vmul.f32 %v5764, 0.1
      %v5797 = vmul.f32 %v5765, 0.1
      %v5798 = vmul.f32 %v5766, 0.1
      %v5799 = vmul.f32 %v5767, 0.1
      %v5800 = vmul.f32 %v5768, 0.1
      %v5801 = vmul.f32 %v5769, 0.1
      %v5802 = vmul.f32 %v5770, 0.1
      %v5803 = vmul.f32 %v5771, 0.1
      %v5804 = vmul.f32 %v5772, 0.1
      %v5805 = vmul.f32 %v5773, 0.1
      %v5806 = vmul.f32 %v5774, 0.1
      %v5807 = vmul.f32 %v5775, 0.1
      %v5808 = vmul.f32 %v5776, 0.1
      %v5809 = vmul.f32 %v5777, 0.1
      %v5810 = vmul.f32 %v5778, 0.1
      %v5811 = vmul.f32 %v5779, 0.1
      %v5812 = vsel %vm5780, %v5764, %v5796
      %v5813 = vsel %vm5781, %v5765, %v5797
      %v5814 = vsel %vm5782, %v5766, %v5798
      %v5815 = vsel %vm5783, %v5767, %v5799
      %v5816 = vsel %vm5784, %v5768, %v5800
      %v5817 = vsel %vm5785, %v5769, %v5801
      %v5818 = vsel %vm5786, %v5770, %v5802
      %v5819 = vsel %vm5787, %v5771, %v5803
      %v5820 = vsel %vm5788, %v5772, %v5804
      %v5821 = vsel %vm5789, %v5773, %v5805
      %v5822 = vsel %vm5790, %v5774, %v5806
      %v5823 = vsel %vm5791, %v5775, %v5807
      %v5824 = vsel %vm5792, %v5776, %v5808
      %v5825 = vsel %vm5793, %v5777, %v5809
      %v5826 = vsel %vm5794, %v5778, %v5810
      %v5827 = vsel %vm5795, %v5779, %v5811
      %v5828 = vpack.c.bf16 %v5813, %v5812
      %v5829 = vpack.c.bf16 %v5815, %v5814
      %v5830 = vpack.c.bf16 %v5817, %v5816
      %v5831 = vpack.c.bf16 %v5819, %v5818
      %v5832 = vpack.c.bf16 %v5821, %v5820
      %v5833 = vpack.c.bf16 %v5823, %v5822
      %v5834 = vpack.c.bf16 %v5825, %v5824
      %v5835 = vpack.c.bf16 %v5827, %v5826
      %v5836 = vld [vmem:[%s10] sm:$0xf]
      %v5837 = vld [vmem:[%s10 + $0x4] sm:$0xf]
      %v5838 = vld [vmem:[%s10 + $0x8] sm:$0xf]
      %v5839 = vld [vmem:[%s10 + $0xc] sm:$0xf]
      %v5840 = vld [vmem:[%s10 + $0x10] sm:$0xf]
      %v5841 = vld [vmem:[%s10 + $0x14] sm:$0xf]
      %v5842 = vld [vmem:[%s10 + $0x18] sm:$0xf]
      %v5843 = vld [vmem:[%s10 + $0x1c] sm:$0xf]
      %v5844 = vld [vmem:[%s10 + $0x20] sm:$0xf]
      %v5845 = vld [vmem:[%s10 + $0x24] sm:$0xf]
      %v5846 = vld [vmem:[%s10 + $0x28] sm:$0xf]
      %v5847 = vld [vmem:[%s10 + $0x2c] sm:$0xf]
      %v5848 = vld [vmem:[%s10 + $0x30] sm:$0xf]
      %v5849 = vld [vmem:[%s10 + $0x34] sm:$0xf]
      %v5850 = vld [vmem:[%s10 + $0x38] sm:$0xf]
      %v5851 = vld [vmem:[%s10 + $0x3c] sm:$0xf]
      %v5852 = vld [vmem:[%s11] sm:$0xff]
      %v5853 = vld [vmem:[%s11 + $0x8] sm:$0xff]
      %v5854 = vld [vmem:[%s11 + $0x10] sm:$0xff]
      %v5855 = vld [vmem:[%s11 + $0x18] sm:$0xff]
      %5858 = vrot.lane.b32.xlu0 %v5830, 1
      %v5859 = vpop.permute.xlu0 %5858
      %5860 = vrot.lane.b32.xlu0 %v5831, 1
      %v5861 = vpop.permute.xlu0 %5860
      %5864 = vrot.lane.b32.xlu0 %v5832, 2
      %v5865 = vpop.permute.xlu0 %5864
      %5866 = vrot.lane.b32.xlu0 %v5833, 2
      %v5867 = vpop.permute.xlu0 %5866
      %5870 = vrot.lane.b32.xlu0 %v5834, 3
      %v5871 = vpop.permute.xlu0 %5870
      %5872 = vrot.lane.b32.xlu0 %v5835, 3
      %v5873 = vpop.permute.xlu0 %5872
      %vm5874 = vcmask 7168
      %v5877 = vsel %vm5874, %v5828, %v5859
      %v5880 = vsel %vm5874, %v5829, %v5861
      %vm5881 = vcmask 15360
      %v5883 = vsel %vm5881, %v5877, %v5865
      %v5885 = vsel %vm5881, %v5880, %v5867
      %vm5886 = vcmask 23552
      %v5888 = vsel %vm5886, %v5883, %v5871
      %v5891 = vsel %vm5886, %v5885, %v5873
      %v5897 = vunpack.c.l.b16 %v5836
      %v5898 = vunpack.c.l.b16 %v5837
      %v5899 = vunpack.c.l.b16 %v5838
      %v5900 = vunpack.c.l.b16 %v5839
      %v5901 = vpack.c.b16 %v5898, %v5897
      %v5902 = vpack.c.b16 %v5900, %v5899
      %vm5903 = vcmask 261120
      %v5905 = vsel %vm5903, %v5901, 0
      %v5908 = vsel %vm5903, %v5902, 0
      %5910 = vmatprep.subr.bf16.mxu0 0
      %5911 = vmatpush1.bf16.msra.mxu0 %v5888
      %5912 = vmatprep.subr.bf16.mxu0 0
      %5913 = vmatpush1.bf16.msra.mxu0 %v5891
      %5914 = vmatprep.subr.bf16.mxu0 0
      %5915 = vmatpush1.bf16.msra.mxu0 0
      %5916 = vmatprep.subr.bf16.mxu0 0
      %5917 = vmatpush1.bf16.msra.mxu0 0
      %5918 = vmatprep.subr.bf16.mxu0 0
      %5919 = vmatpush1.bf16.msra.mxu0 0
      %5920 = vmatprep.subr.bf16.mxu0 0
      %5921 = vmatpush1.bf16.msra.mxu0 0
      %5922 = vmatprep.subr.bf16.mxu0 0
      %5923 = vmatpush1.bf16.msra.mxu0 0
      %5924 = vmatprep.subr.bf16.mxu0 0
      %5925 = vmatpush1.bf16.msra.mxu0 0
      %5926 = vmatprep.subr.bf16.mxu0 0
      %5927 = vmatpush1.bf16.msra.mxu0 0
      %5928 = vmatprep.subr.bf16.mxu0 0
      %5929 = vmatpush1.bf16.msra.mxu0 0
      %5930 = vmatprep.subr.bf16.mxu0 0
      %5931 = vmatpush1.bf16.msra.mxu0 0
      %5932 = vmatprep.subr.bf16.mxu0 0
      %5933 = vmatpush1.bf16.msra.mxu0 0
      %5934 = vmatprep.subr.bf16.mxu0 0
      %5935 = vmatpush1.bf16.msra.mxu0 0
      %5936 = vmatprep.subr.bf16.mxu0 0
      %5937 = vmatpush1.bf16.msra.mxu0 0
      %5938 = vmatprep.subr.bf16.mxu0 0
      %5939 = vmatpush1.bf16.msra.mxu0 0
      %5940 = vmatprep.subr.bf16.mxu0 0
      %5941 = vmatpush1.bf16.msra.mxu0 0
      %5942 = vmatprep.mubr.bf16.mxu0 0
      %5943 = vmatmul.mubr.bf16.gmra.mrb[0].mxu0 %v5905
      %v5944 = vpop.f32.mrb[0].mxu0
      %v5945 = vadd.f32 0.0, %v5944
      %v5946 = vpop.f32.mrb[0].mxu0
      %v5947 = vpop.f32.mrb[0].mxu0
      %v5948 = vadd.f32 0.0, %v5947
      %v5949 = vpop.f32.mrb[0].mxu0
      %5950 = vmatprep.mubr.bf16.mxu0 0
      %5951 = vmatmul.mubr.bf16.gmra.mrb[0].mxu0 %v5908
      %v5952 = vpop.f32.mrb[0].mxu0
      %v5953 = vadd.f32 0.0, %v5952
      %v5954 = vpop.f32.mrb[0].mxu0
      %v5955 = vpop.f32.mrb[0].mxu0
      %v5956 = vadd.f32 0.0, %v5955
      %v5957 = vpop.f32.mrb[0].mxu0
      %5958 = vdwg.mxu0
      %5960 = vset.pattern.permute.xlu0 0
      %5961 = vperm.xlu0 %5960, %v5852
      %v5962 = vpop.permute.xlu0 %5961
      %5965 = vset.pattern.permute.xlu0 0
      %5966 = vperm.xlu0 %5965, %v5853
      %v5967 = vpop.permute.xlu0 %5966
      %5970 = vset.pattern.permute.xlu0 0
      %5971 = vperm.xlu0 %5970, %v5854
      %v5972 = vpop.permute.xlu0 %5971
      %5975 = vset.pattern.permute.xlu0 0
      %5976 = vperm.xlu0 %5975, %v5855
      %v5977 = vpop.permute.xlu0 %5976
      %v5979 = vadd.f32 %v5962, %v5945
      %v5980 = vadd.f32 %v5967, %v5948
      %v5981 = vadd.f32 %v5972, %v5953
      %v5982 = vadd.f32 %v5977, %v5956
      %5985 = vrot.lane.b32.xlu0 %v5828, 127
      %v5986 = vpop.permute.xlu0 %5985
      %5987 = vrot.lane.b32.xlu0 %v5829, 127
      %v5988 = vpop.permute.xlu0 %5987
      %5989 = vrot.lane.b32.xlu0 %v5832, 1
      %v5990 = vpop.permute.xlu0 %5989
      %5991 = vrot.lane.b32.xlu0 %v5833, 1
      %v5992 = vpop.permute.xlu0 %5991
      %5993 = vrot.lane.b32.xlu0 %v5834, 2
      %v5994 = vpop.permute.xlu0 %5993
      %5995 = vrot.lane.b32.xlu0 %v5835, 2
      %v5996 = vpop.permute.xlu0 %5995
      %v5999 = vsel %vm5874, %v5986, %v5830
      %v6002 = vsel %vm5874, %v5988, %v5831
      %v6004 = vsel %vm5881, %v5999, %v5990
      %v6006 = vsel %vm5881, %v6002, %v5992
      %v6008 = vsel %vm5886, %v6004, %v5994
      %v6011 = vsel %vm5886, %v6006, %v5996
      %v6017 = vunpack.c.l.b16 %v5840
      %v6018 = vunpack.c.l.b16 %v5841
      %v6019 = vunpack.c.l.b16 %v5842
      %v6020 = vunpack.c.l.b16 %v5843
      %v6021 = vpack.c.b16 %v6018, %v6017
      %v6022 = vpack.c.b16 %v6020, %v6019
      %v6024 = vsel %vm5903, %v6021, 0
      %v6027 = vsel %vm5903, %v6022, 0
      %6029 = vmatprep.subr.bf16.mxu0 0
      %6030 = vmatpush1.bf16.msra.mxu0 %v6008
      %6031 = vmatprep.subr.bf16.mxu0 0
      %6032 = vmatpush1.bf16.msra.mxu0 %v6011
      %6033 = vmatprep.subr.bf16.mxu0 0
      %6034 = vmatpush1.bf16.msra.mxu0 0
      %6035 = vmatprep.subr.bf16.mxu0 0
      %6036 = vmatpush1.bf16.msra.mxu0 0
      %6037 = vmatprep.subr.bf16.mxu0 0
      %6038 = vmatpush1.bf16.msra.mxu0 0
      %6039 = vmatprep.subr.bf16.mxu0 0
      %6040 = vmatpush1.bf16.msra.mxu0 0
      %6041 = vmatprep.subr.bf16.mxu0 0
      %6042 = vmatpush1.bf16.msra.mxu0 0
      %6043 = vmatprep.subr.bf16.mxu0 0
      %6044 = vmatpush1.bf16.msra.mxu0 0
      %6045 = vmatprep.subr.bf16.mxu0 0
      %6046 = vmatpush1.bf16.msra.mxu0 0
      %6047 = vmatprep.subr.bf16.mxu0 0
      %6048 = vmatpush1.bf16.msra.mxu0 0
      %6049 = vmatprep.subr.bf16.mxu0 0
      %6050 = vmatpush1.bf16.msra.mxu0 0
      %6051 = vmatprep.subr.bf16.mxu0 0
      %6052 = vmatpush1.bf16.msra.mxu0 0
      %6053 = vmatprep.subr.bf16.mxu0 0
      %6054 = vmatpush1.bf16.msra.mxu0 0
      %6055 = vmatprep.subr.bf16.mxu0 0
      %6056 = vmatpush1.bf16.msra.mxu0 0
      %6057 = vmatprep.subr.bf16.mxu0 0
      %6058 = vmatpush1.bf16.msra.mxu0 0
      %6059 = vmatprep.subr.bf16.mxu0 0
      %6060 = vmatpush1.bf16.msra.mxu0 0
      %6061 = vmatprep.mubr.bf16.mxu0 0
      %6062 = vmatmul.mubr.bf16.gmra.mrb[0].mxu0 %v6024
      %v6063 = vpop.f32.mrb[0].mxu0
      %v6064 = vadd.f32 0.0, %v6063
      %v6065 = vpop.f32.mrb[0].mxu0
      %v6066 = vpop.f32.mrb[0].mxu0
      %v6067 = vadd.f32 0.0, %v6066
      %v6068 = vpop.f32.mrb[0].mxu0
      %6069 = vmatprep.mubr.bf16.mxu0 0
      %6070 = vmatmul.mubr.bf16.gmra.mrb[0].mxu0 %v6027
      %v6071 = vpop.f32.mrb[0].mxu0
      %v6072 = vadd.f32 0.0, %v6071
      %v6073 = vpop.f32.mrb[0].mxu0
      %v6074 = vpop.f32.mrb[0].mxu0
      %v6075 = vadd.f32 0.0, %v6074
      %v6076 = vpop.f32.mrb[0].mxu0
      %6077 = vdwg.mxu0
      %v6078 = vadd.f32 %v5979, %v6064
      %v6079 = vadd.f32 %v5980, %v6067
      %v6080 = vadd.f32 %v5981, %v6072
      %v6081 = vadd.f32 %v5982, %v6075
      %6082 = vrot.lane.b32.xlu0 %v5828, 126
      %v6083 = vpop.permute.xlu0 %6082
      %6084 = vrot.lane.b32.xlu0 %v5829, 126
      %v6085 = vpop.permute.xlu0 %6084
      %6086 = vrot.lane.b32.xlu0 %v5830, 127
      %v6087 = vpop.permute.xlu0 %6086
      %6088 = vrot.lane.b32.xlu0 %v5831, 127
      %v6089 = vpop.permute.xlu0 %6088
      %6090 = vrot.lane.b32.xlu0 %v5834, 1
      %v6091 = vpop.permute.xlu0 %6090
      %6092 = vrot.lane.b32.xlu0 %v5835, 1
      %v6093 = vpop.permute.xlu0 %6092
      %v6096 = vsel %vm5874, %v6083, %v6087
      %v6099 = vsel %vm5874, %v6085, %v6089
      %v6101 = vsel %vm5881, %v6096, %v5832
      %v6103 = vsel %vm5881, %v6099, %v5833
      %v6105 = vsel %vm5886, %v6101, %v6091
      %v6108 = vsel %vm5886, %v6103, %v6093
      %v6114 = vunpack.c.l.b16 %v5844
      %v6115 = vunpack.c.l.b16 %v5845
      %v6116 = vunpack.c.l.b16 %v5846
      %v6117 = vunpack.c.l.b16 %v5847
      %v6118 = vpack.c.b16 %v6115, %v6114
      %v6119 = vpack.c.b16 %v6117, %v6116
      %v6121 = vsel %vm5903, %v6118, 0
      %v6124 = vsel %vm5903, %v6119, 0
      %6126 = vmatprep.subr.bf16.mxu0 0
      %6127 = vmatpush1.bf16.msra.mxu0 %v6105
      %6128 = vmatprep.subr.bf16.mxu0 0
      %6129 = vmatpush1.bf16.msra.mxu0 %v6108
      %6130 = vmatprep.subr.bf16.mxu0 0
      %6131 = vmatpush1.bf16.msra.mxu0 0
      %6132 = vmatprep.subr.bf16.mxu0 0
      %6133 = vmatpush1.bf16.msra.mxu0 0
      %6134 = vmatprep.subr.bf16.mxu0 0
      %6135 = vmatpush1.bf16.msra.mxu0 0
      %6136 = vmatprep.subr.bf16.mxu0 0
      %6137 = vmatpush1.bf16.msra.mxu0 0
      %6138 = vmatprep.subr.bf16.mxu0 0
      %6139 = vmatpush1.bf16.msra.mxu0 0
      %6140 = vmatprep.subr.bf16.mxu0 0
      %6141 = vmatpush1.bf16.msra.mxu0 0
      %6142 = vmatprep.subr.bf16.mxu0 0
      %6143 = vmatpush1.bf16.msra.mxu0 0
      %6144 = vmatprep.subr.bf16.mxu0 0
      %6145 = vmatpush1.bf16.msra.mxu0 0
      %6146 = vmatprep.subr.bf16.mxu0 0
      %6147 = vmatpush1.bf16.msra.mxu0 0
      %6148 = vmatprep.subr.bf16.mxu0 0
      %6149 = vmatpush1.bf16.msra.mxu0 0
      %6150 = vmatprep.subr.bf16.mxu0 0
      %6151 = vmatpush1.bf16.msra.mxu0 0
      %6152 = vmatprep.subr.bf16.mxu0 0
      %6153 = vmatpush1.bf16.msra.mxu0 0
      %6154 = vmatprep.subr.bf16.mxu0 0
      %6155 = vmatpush1.bf16.msra.mxu0 0
      %6156 = vmatprep.subr.bf16.mxu0 0
      %6157 = vmatpush1.bf16.msra.mxu0 0
      %6158 = vmatprep.mubr.bf16.mxu0 0
      %6159 = vmatmul.mubr.bf16.gmra.mrb[0].mxu0 %v6121
      %v6160 = vpop.f32.mrb[0].mxu0
      %v6161 = vadd.f32 0.0, %v6160
      %v6162 = vpop.f32.mrb[0].mxu0
      %v6163 = vpop.f32.mrb[0].mxu0
      %v6164 = vadd.f32 0.0, %v6163
      %v6165 = vpop.f32.mrb[0].mxu0
      %6166 = vmatprep.mubr.bf16.mxu0 0
      %6167 = vmatmul.mubr.bf16.gmra.mrb[0].mxu0 %v6124
      %v6168 = vpop.f32.mrb[0].mxu0
      %v6169 = vadd.f32 0.0, %v6168
      %v6170 = vpop.f32.mrb[0].mxu0
      %v6171 = vpop.f32.mrb[0].mxu0
      %v6172 = vadd.f32 0.0, %v6171
      %v6173 = vpop.f32.mrb[0].mxu0
      %6174 = vdwg.mxu0
      %v6175 = vadd.f32 %v6078, %v6161
      %v6176 = vadd.f32 %v6079, %v6164
      %v6177 = vadd.f32 %v6080, %v6169
      %v6178 = vadd.f32 %v6081, %v6172
      %6179 = vrot.lane.b32.xlu0 %v5828, 125
      %v6180 = vpop.permute.xlu0 %6179
      %6181 = vrot.lane.b32.xlu0 %v5829, 125
      %v6182 = vpop.permute.xlu0 %6181
      %6183 = vrot.lane.b32.xlu0 %v5830, 126
      %v6184 = vpop.permute.xlu0 %6183
      %6185 = vrot.lane.b32.xlu0 %v5831, 126
      %v6186 = vpop.permute.xlu0 %6185
      %6187 = vrot.lane.b32.xlu0 %v5832, 127
      %v6188 = vpop.permute.xlu0 %6187
      %6189 = vrot.lane.b32.xlu0 %v5833, 127
      %v6190 = vpop.permute.xlu0 %6189
      %v6193 = vsel %vm5874, %v6180, %v6184
      %v6196 = vsel %vm5874, %v6182, %v6186
      %v6198 = vsel %vm5881, %v6193, %v6188
      %v6200 = vsel %vm5881, %v6196, %v6190
      %v6202 = vsel %vm5886, %v6198, %v5834
      %v6205 = vsel %vm5886, %v6200, %v5835
      %v6211 = vunpack.c.l.b16 %v5848
      %v6212 = vunpack.c.l.b16 %v5849
      %v6213 = vunpack.c.l.b16 %v5850
      %v6214 = vunpack.c.l.b16 %v5851
      %v6215 = vpack.c.b16 %v6212, %v6211
      %v6216 = vpack.c.b16 %v6214, %v6213
      %v6218 = vsel %vm5903, %v6215, 0
      %v6221 = vsel %vm5903, %v6216, 0
      %6223 = vmatprep.subr.bf16.mxu0 0
      %6224 = vmatpush1.bf16.msra.mxu0 %v6202
      %6225 = vmatprep.subr.bf16.mxu0 0
      %6226 = vmatpush1.bf16.msra.mxu0 %v6205
      %6227 = vmatprep.subr.bf16.mxu0 0
      %6228 = vmatpush1.bf16.msra.mxu0 0
      %6229 = vmatprep.subr.bf16.mxu0 0
      %6230 = vmatpush1.bf16.msra.mxu0 0
      %6231 = vmatprep.subr.bf16.mxu0 0
      %6232 = vmatpush1.bf16.msra.mxu0 0
      %6233 = vmatprep.subr.bf16.mxu0 0
      %6234 = vmatpush1.bf16.msra.mxu0 0
      %6235 = vmatprep.subr.bf16.mxu0 0
      %6236 = vmatpush1.bf16.msra.mxu0 0
      %6237 = vmatprep.subr.bf16.mxu0 0
      %6238 = vmatpush1.bf16.msra.mxu0 0
      %6239 = vmatprep.subr.bf16.mxu0 0
      %6240 = vmatpush1.bf16.msra.mxu0 0
      %6241 = vmatprep.subr.bf16.mxu0 0
      %6242 = vmatpush1.bf16.msra.mxu0 0
      %6243 = vmatprep.subr.bf16.mxu0 0
      %6244 = vmatpush1.bf16.msra.mxu0 0
      %6245 = vmatprep.subr.bf16.mxu0 0
      %6246 = vmatpush1.bf16.msra.mxu0 0
      %6247 = vmatprep.subr.bf16.mxu0 0
      %6248 = vmatpush1.bf16.msra.mxu0 0
      %6249 = vmatprep.subr.bf16.mxu0 0
      %6250 = vmatpush1.bf16.msra.mxu0 0
      %6251 = vmatprep.subr.bf16.mxu0 0
      %6252 = vmatpush1.bf16.msra.mxu0 0
      %6253 = vmatprep.subr.bf16.mxu0 0
      %6254 = vmatpush1.bf16.msra.mxu0 0
      %6255 = vmatprep.mubr.bf16.mxu0 0
      %6256 = vmatmul.mubr.bf16.gmra.mrb[0].mxu0 %v6218
      %v6257 = vpop.f32.mrb[0].mxu0
      %v6258 = vadd.f32 0.0, %v6257
      %v6259 = vpop.f32.mrb[0].mxu0
      %v6260 = vpop.f32.mrb[0].mxu0
      %v6261 = vadd.f32 0.0, %v6260
      %v6262 = vpop.f32.mrb[0].mxu0
      %6263 = vmatprep.mubr.bf16.mxu0 0
      %6264 = vmatmul.mubr.bf16.gmra.mrb[0].mxu0 %v6221
      %v6265 = vpop.f32.mrb[0].mxu0
      %v6266 = vadd.f32 0.0, %v6265
      %v6267 = vpop.f32.mrb[0].mxu0
      %v6268 = vpop.f32.mrb[0].mxu0
      %v6269 = vadd.f32 0.0, %v6268
      %v6270 = vpop.f32.mrb[0].mxu0
      %6271 = vdwg.mxu0
      %v6272 = vadd.f32 %v6175, %v6258
      %v6273 = vadd.f32 %v6176, %v6261
      %v6274 = vadd.f32 %v6177, %v6266
      %v6275 = vadd.f32 %v6178, %v6269
      %v6276 = vmax.f32 %v6272, 0.0
      %v6277 = vmax.f32 %v6273, 0.0
      %v6278 = vmax.f32 %v6274, 0.0
      %v6279 = vmax.f32 %v6275, 0.0
      %v6280 = vpack.c.bf16 %v6277, %v6276
      %v6281 = vpack.c.bf16 %v6279, %v6278
      %v6282 = vld [vmem:[%s12] sm:$0xf]
      %v6283 = vld [vmem:[%s12 + $0x4] sm:$0xf]
      %v6284 = vld [vmem:[%s13] sm:$0xff]
      %v6285 = vld [vmem:[%s13 + $0x8] sm:$0xff]
      %6287 = vset.pattern.permute.xlu0 0
      %6288 = vperm.xlu0 %6287, %v6284
      %v6289 = vpop.permute.xlu0 %6288
      %6292 = vset.pattern.permute.xlu0 0
      %6293 = vperm.xlu0 %6292, %v6285
      %v6294 = vpop.permute.xlu0 %6293
      %v6298 = vunpack.c.l.b16 %v6282
      %v6299 = vunpack.c.l.b16 %v6283
      %v6300 = vpack.c.b16 %v6299, %v6298
      %v6302 = vsel %vm5903, %v6300, 0
      %6304 = vmatprep.subr.bf16.mxu0 0
      %6305 = vmatpush1.bf16.msra.mxu0 %v6280
      %6306 = vmatprep.subr.bf16.mxu0 0
      %6307 = vmatpush1.bf16.msra.mxu0 %v6281
      %6308 = vmatprep.subr.bf16.mxu0 0
      %6309 = vmatpush1.bf16.msra.mxu0 0
      %6310 = vmatprep.subr.bf16.mxu0 0
      %6311 = vmatpush1.bf16.msra.mxu0 0
      %6312 = vmatprep.subr.bf16.mxu0 0
      %6313 = vmatpush1.bf16.msra.mxu0 0
      %6314 = vmatprep.subr.bf16.mxu0 0
      %6315 = vmatpush1.bf16.msra.mxu0 0
      %6316 = vmatprep.subr.bf16.mxu0 0
      %6317 = vmatpush1.bf16.msra.mxu0 0
      %6318 = vmatprep.subr.bf16.mxu0 0
      %6319 = vmatpush1.bf16.msra.mxu0 0
      %6320 = vmatprep.subr.bf16.mxu0 0
      %6321 = vmatpush1.bf16.msra.mxu0 0
      %6322 = vmatprep.subr.bf16.mxu0 0
      %6323 = vmatpush1.bf16.msra.mxu0 0
      %6324 = vmatprep.subr.bf16.mxu0 0
      %6325 = vmatpush1.bf16.msra.mxu0 0
      %6326 = vmatprep.subr.bf16.mxu0 0
      %6327 = vmatpush1.bf16.msra.mxu0 0
      %6328 = vmatprep.subr.bf16.mxu0 0
      %6329 = vmatpush1.bf16.msra.mxu0 0
      %6330 = vmatprep.subr.bf16.mxu0 0
      %6331 = vmatpush1.bf16.msra.mxu0 0
      %6332 = vmatprep.subr.bf16.mxu0 0
      %6333 = vmatpush1.bf16.msra.mxu0 0
      %6334 = vmatprep.subr.bf16.mxu0 0
      %6335 = vmatpush1.bf16.msra.mxu0 0
      %6336 = vmatprep.mubr.bf16.mxu0 0
      %6337 = vmatmul.mubr.bf16.gmra.mrb[0].mxu0 %v6302
      %v6338 = vpop.f32.mrb[0].mxu0
      %v6339 = vadd.f32 %v6289, %v6338
      %v6340 = vpop.f32.mrb[0].mxu0
      %v6341 = vpop.f32.mrb[0].mxu0
      %v6342 = vadd.f32 %v6294, %v6341
      %v6343 = vpop.f32.mrb[0].mxu0
      %6344 = vdwg.mxu0
      %v6345 = vmax.f32 %v6339, 0.0
      %v6346 = vmax.f32 %v6342, 0.0
      %v6347 = vpack.c.bf16 %v6346, %v6345
      %v6348 = vld [vmem:[%s14] sm:$0x1]
      %v6349 = vld [vmem:[#allocation2] sm:$0x1]
      %6351 = vset.pattern.permute.xlu0 0
      %6352 = vperm.xlu0 %6351, %v6349
      %v6353 = vpop.permute.xlu0 %6352
      %v6355 = vlaneseq
      %v6356 = vshrl.u32 %v6355, 7
      %v6357 = vsub.s32 0, %v6356
      %v6358 = vrot.slane %v6353, %v6357
      %v6360 = vsel %vm5192, %v6348, 0
      %6362 = vmatprep.subr.bf16.mxu0 0
      %6363 = vmatpush1.bf16.msra.mxu0 %v6347
      %6364 = vmatprep.subr.bf16.mxu0 0
      %6365 = vmatpush1.bf16.msra.mxu0 0
      %6366 = vmatprep.subr.bf16.mxu0 0
      %6367 = vmatpush1.bf16.msra.mxu0 0
      %6368 = vmatprep.subr.bf16.mxu0 0
      %6369 = vmatpush1.bf16.msra.mxu0 0
      %6370 = vmatprep.subr.bf16.mxu0 0
      %6371 = vmatpush1.bf16.msra.mxu0 0
      %6372 = vmatprep.subr.bf16.mxu0 0
      %6373 = vmatpush1.bf16.msra.mxu0 0
      %6374 = vmatprep.subr.bf16.mxu0 0
      %6375 = vmatpush1.bf16.msra.mxu0 0
      %6376 = vmatprep.subr.bf16.mxu0 0
      %6377 = vmatpush1.bf16.msra.mxu0 0
      %6378 = vmatprep.subr.bf16.mxu0 0
      %6379 = vmatpush1.bf16.msra.mxu0 0
      %6380 = vmatprep.subr.bf16.mxu0 0
      %6381 = vmatpush1.bf16.msra.mxu0 0
      %6382 = vmatprep.subr.bf16.mxu0 0
      %6383 = vmatpush1.bf16.msra.mxu0 0
      %6384 = vmatprep.subr.bf16.mxu0 0
      %6385 = vmatpush1.bf16.msra.mxu0 0
      %6386 = vmatprep.subr.bf16.mxu0 0
      %6387 = vmatpush1.bf16.msra.mxu0 0
      %6388 = vmatprep.subr.bf16.mxu0 0
      %6389 = vmatpush1.bf16.msra.mxu0 0
      %6390 = vmatprep.subr.bf16.mxu0 0
      %6391 = vmatpush1.bf16.msra.mxu0 0
      %6392 = vmatprep.subr.bf16.mxu0 0
      %6393 = vmatpush1.bf16.msra.mxu0 0
      %6394 = vmatprep.mubr.bf16.mxu0 0
      %6395 = vmatmul.mubr.bf16.gmra.mrb[0].mxu0 %v6360
      %v6396 = vpop.f32.mrb[0].mxu0
      %v6397 = vadd.f32 %v6358, %v6396
      %v6398 = vpop.f32.mrb[0].mxu0
      %v6399 = vpop.f32.mrb[0].mxu0
      %v6400 = vpop.f32.mrb[0].mxu0
      %6401 = vdwg.mxu0
      %v6402 = vsub.f32 0.0, %v6397
      %v6403 = vmul.f32 %v6402, 1.442695
      %v6404 = vpow.pop %v6403
      %v6405 = vadd.f32 %v6404, 1.0
      %v6406 = vrcp.pop %v6405
      %v6407 = vmul.f32 1.0, %v6406
      %vm6408 = vcmask 24576
      %6409 = vst.msk [vmem:[%s524] sm:$0x1] %vm6408, %v6407
      %p6410 = scmp.lt.s32.totalorder %s29, 1
      %s6411 = scalar_select %p6410, %s29, 1
      %s6412 = scalar_lea.vmem %s16, %s6411
      // Predicated region
      $region85: #{net_forward.1} parent=83 // pred_check
        %p6413 = pneg %p388
      $region86: #{net_forward.1} parent=83 // pred_check_branch
        %6415 = sbr.rel (%p6413) target = $region88
      $region87: #{net_forward.1} parent=83 // pred_region
        _
      $region88: #{net_forward.1} parent=83 // pred_fallthru
        _
    $region84: #{net_forward.1} parent=5 // pred_fallthru
      _
    %p6416 = scmp.le.s32.totalorder 2, %s24
    // Predicated region
    $region89: #{net_forward.1} parent=5 // pred_check
      %p6417 = pneg %p6416
    $region90: #{net_forward.1} parent=5 // pred_check_branch
      %6419 = sbr.rel (%p6417) target = $region92
    $region91: #{net_forward.1} parent=5 // pred_region
      %s6420 = ssub.s32 %s24, 2
      // Predicated region
      $region93: #{net_forward.1} parent=91 // pred_check
        %p6421 = pneg %p394
      $region94: #{net_forward.1} parent=91 // pred_check_branch
        %6423 = sbr.rel (%p6421) target = $region96
      $region95: #{net_forward.1} parent=91 // pred_region
        %p6424 = scmp.lt.s32.totalorder %s30, 1
        %s6425 = scalar_select %p6424, %s30, 1
        %s6426 = scalar_lea.vmem %s16, %s6425
      $region96: #{net_forward.1} parent=91 // pred_fallthru
        _
    $region92: #{net_forward.1} parent=5 // pred_fallthru
      _
  $region6: #{net_forward.1} parent=0 // loop_footer
    %s28 = sadd.s32 1, %s24
  $region7: #{net_forward.1} parent=0 // loop_footer_branch
    %23 = sbr.rel target = $region3
  $region8: #{net_forward.1} parent=0 // loop_exit
    _

</llo_original>
